<compile_context>
chip_gen: v7x
topology: tpu7x:2x2x1
jax: 0.10.0
libtpu: 0.0.40
codegen_flags: <defaults>
</compile_context>

<pallas_src>
import math

import jax
import jax.numpy as jnp
from jax.experimental import pallas as pl
from jax.experimental.pallas import tpu as pltpu


def _cdiv(a, b):
    return -(-a // b)


def _round_up(x, m):
    return _cdiv(x, m) * m


def _tensorcores_per_chip():
    """2 TensorCores per chip on v7x (megacore sharding); 1 on v5e/v6e."""
    try:
        kind = jax.devices()[0].device_kind.lower()
    except Exception:
        return 1
    return 2 if "v7" in kind else 1


def _twinq_kernel(state_ref, action_ref,
                  w1s_ref, w1a_ref, b1_ref,
                  w2a_ref, b2a_ref, w2b_ref, b2b_ref,
                  w3a_ref, b3a_ref, w3b_ref, b3b_ref,
                  out_ref):
    H = w2a_ref.shape[0]

    # Layer 1, both towers fused along N (2H).  Instead of lane-concatenating
    # the lane-sparse state/action blocks, the fused layer-1 weight is split
    # at row S and the two partial matmuls are summed in f32.
    h1 = jnp.dot(state_ref[...], w1s_ref[...],
                 preferred_element_type=jnp.float32)
    h1 = h1 + jnp.dot(action_ref[...], w1a_ref[...],
                      preferred_element_type=jnp.float32)
    h1 = jnp.maximum(h1 + b1_ref[...], 0.0)           # f32 bias + ReLU
    h1a = h1[:, :H].astype(jnp.bfloat16)               # tower 1 hidden
    h1b = h1[:, H:].astype(jnp.bfloat16)               # tower 2 hidden

    # Layer 2 per tower: bf16 operands, f32 accumulation.
    h2a = jnp.dot(h1a, w2a_ref[...], preferred_element_type=jnp.float32)
    h2a = jnp.maximum(h2a + b2a_ref[...], 0.0)
    h2b = jnp.dot(h1b, w2b_ref[...], preferred_element_type=jnp.float32)
    h2b = jnp.maximum(h2b + b2b_ref[...], 0.0)

    # Head (out_features == 1): VPU multiply + lane reduce instead of a
    # degenerate N=1 MXU matmul.  Head weights stored as (1, H) rows, f32.
    q1 = jnp.sum(h2a * w3a_ref[...], axis=1, keepdims=True) + b3a_ref[...]
    q2 = jnp.sum(h2b * w3b_ref[...], axis=1, keepdims=True) + b3b_ref[...]

    out_ref[...] = jnp.minimum(q1, q2)                  # torch.min(q1, q2)


def _init_linear(key, fan_in, fan_out):
    """PyTorch nn.Linear default init: U(-1/sqrt(fan_in), 1/sqrt(fan_in))."""
    kw, kb = jax.random.split(key)
    bound = 1.0 / math.sqrt(fan_in)
    # Stored transposed relative to PyTorch: (in, out).
    w = jax.random.uniform(kw, (fan_in, fan_out), jnp.float32, -bound, bound)
    b = jax.random.uniform(kb, (1, fan_out), jnp.float32, -bound, bound)
    return w, b


def make_twinq_params(key, state_dim, action_dim, hidden_dim=256, n_hidden=2):
    """Packed params: split/fused bf16 layer-1, bf16 layer-2, f32 head rows."""
    assert n_hidden == 2, "kernel is written for n_hidden=2 (the default)"
    dims = [state_dim + action_dim, hidden_dim, hidden_dim, 1]
    keys = jax.random.split(key, 6)
    raw = []
    for net in range(2):  # q1, q2
        raw.append([_init_linear(keys[net * 3 + layer],
                                 dims[layer], dims[layer + 1])
                    for layer in range(3)])
    (w1q1, b1q1), (w2q1, b2q1), (w3q1, b3q1) = raw[0]
    (w1q2, b1q2), (w2q2, b2q2), (w3q2, b3q2) = raw[1]

    w1 = jnp.concatenate([w1q1, w1q2], axis=1)           # (S+A, 2H) f32
    w1s = w1[:state_dim].astype(jnp.bfloat16)             # (S, 2H)
    w1a = w1[state_dim:].astype(jnp.bfloat16)              # (A, 2H)
    b1 = jnp.concatenate([b1q1, b1q2], axis=1)             # (1, 2H) f32

    params = (
        w1s, w1a, b1,
        w2q1.astype(jnp.bfloat16), b2q1,                    # (H, H) bf16, (1, H) f32
        w2q2.astype(jnp.bfloat16), b2q2,
        w3q1.reshape(1, hidden_dim), b3q1.reshape(1, 1),    # head row, f32
        w3q2.reshape(1, hidden_dim), b3q2.reshape(1, 1),
    )
    return params


def twinq_forward(state, action, params, *, tile_b=1024):
    """min(q1(state, action), q2(state, action)) -> shape (B,)."""
    B, S = state.shape
    A = action.shape[1]
    (w1s, w1a, b1, w2a, b2a, w2b, b2b, w3a, b3a, w3b, b3b) = params

    # bf16 matmul operands (f32 accumulation): halves input DMA bytes and
    # removes the per-tile in-kernel cast.
    state = state.astype(jnp.bfloat16)
    action = action.astype(jnp.bfloat16)

    # Batch tiling: pad B to a multiple of 128 first, then pick a tile that
    # divides the padded batch exactly (no grid step is mostly padding).
    tb_cap = max(128, (int(tile_b) // 128) * 128)   # tile_b rounded to x128
    b128 = _round_up(B, 128)
    steps = _cdiv(b128, tb_cap)
    two_core = _tensorcores_per_chip() >= 2
    if two_core and steps == 1 and b128 >= 256:
        steps = 2                                   # give v7x's 2nd TC real work
    tb = _round_up(_cdiv(b128, steps), 128)
    b_pad = steps * tb
    if b_pad != B:
        state = jnp.pad(state, ((0, b_pad - B), (0, 0)))
        action = jnp.pad(action, ((0, b_pad - B), (0, 0)))

    if two_core and steps % 2 == 0:
        semantics = (pltpu.CORE_PARALLEL,)          # shard batch steps across TCs
    else:
        semantics = ("parallel",)                   # no-op on single-TC chips

    def tile_spec(n_cols):
        return pl.BlockSpec((tb, n_cols), lambda i: (i, 0))

    def resident(arr):
        # Full-array block with a constant index map: stays resident in VMEM.
        return pl.BlockSpec(arr.shape, lambda i: (0, 0))

    # Per-step footprint is ~5-6 KB/row of f32/bf16 intermediates plus
    # ~0.6 MB of (buffered) weights; 12 KB/row + 4 MB leaves safe headroom
    # while staying far below the scoped limit on every generation.
    vmem_limit = int(min(32 * 1024 * 1024, tb * 12 * 1024 + 4 * 1024 * 1024))

    out = pl.pallas_call(
        _twinq_kernel,
        out_shape=jax.ShapeDtypeStruct((b_pad, 1), jnp.float32),
        grid=(steps,),
        in_specs=[tile_spec(S), tile_spec(A),
                  resident(w1s), resident(w1a), resident(b1),
                  resident(w2a), resident(b2a),
                  resident(w2b), resident(b2b),
                  resident(w3a), resident(b3a),
                  resident(w3b), resident(b3b)],
        out_specs=pl.BlockSpec((tb, 1), lambda i: (i, 0)),
        compiler_params=pltpu.CompilerParams(
            dimension_semantics=semantics,
            vmem_limit_bytes=vmem_limit),
    )(state, action, w1s, w1a, b1, w2a, b2a, w2b, b2b, w3a, b3a, w3b, b3b)

    return out[:B, 0]  # squeeze_output=True


def twinq_reference(state, action, params):
    """Pure-JAX reference using the same packed params / bf16 casts."""
    (w1s, w1a, b1, w2a, b2a, w2b, b2b, w3a, b3a, w3b, b3b) = params
    s = state.astype(jnp.bfloat16)
    a = action.astype(jnp.bfloat16)
    H = w2a.shape[0]

    h1 = (jnp.dot(s, w1s, preferred_element_type=jnp.float32)
          + jnp.dot(a, w1a, preferred_element_type=jnp.float32))
    h1 = jnp.maximum(h1 + b1, 0.0)
    h1a = h1[:, :H].astype(jnp.bfloat16)
    h1b = h1[:, H:].astype(jnp.bfloat16)

    h2a = jnp.maximum(
        jnp.dot(h1a, w2a, preferred_element_type=jnp.float32) + b2a, 0.0)
    h2b = jnp.maximum(
        jnp.dot(h1b, w2b, preferred_element_type=jnp.float32) + b2b, 0.0)

    q1 = jnp.sum(h2a * w3a, axis=1) + b3a[0, 0]
    q2 = jnp.sum(h2b * w3b, axis=1) + b3b[0, 0]
    return jnp.minimum(q1, q2)


if __name__ == "__main__":
    key = jax.random.PRNGKey(0)
    k_params, k_state, k_action = jax.random.split(key, 3)

    # Module-consistent small shapes: default hidden_dim=256, typical control
    # dims, batch chosen so padding (300 -> 384) is exercised.
    batch = 300
    state_dim = 17
    action_dim = 6
    hidden_dim = 256

    params = make_twinq_params(k_params, state_dim, action_dim, hidden_dim)
    state = jax.random.normal(k_state, (batch, state_dim), jnp.float32)
    action = jax.random.normal(k_action, (batch, action_dim), jnp.float32)

    ref = twinq_reference(state, action, params)

    # 1) Default tiling (single step on v5e/v6e, 2 even steps on v7x).
    out = jax.block_until_ready(twinq_forward(state, action, params))
    assert out.shape == (batch,)
    assert jnp.allclose(out, ref, atol=2e-3, rtol=2e-3), (
        float(jnp.max(jnp.abs(out - ref))))

    # 2) Force a multi-step grid (tb=128, 3 steps) to exercise the pipeline.
    out_small = jax.block_until_ready(
        twinq_forward(state, action, params, tile_b=128))
    assert out_small.shape == (batch,)
    assert jnp.allclose(out_small, ref, atol=2e-3, rtol=2e-3), (
        float(jnp.max(jnp.abs(out_small - ref))))

    print("KERNEL_OK")
</pallas_src>

<mosaic_0001>
module attributes {stable_mosaic.version = 11 : i64} {
  func.func @_twinq_kernel(%arg0: i32, %arg1: memref<384x17xbf16, #tpu.memory_space<vmem>>, %arg2: memref<384x6xbf16, #tpu.memory_space<vmem>>, %arg3: memref<17x512xbf16, #tpu.memory_space<vmem>>, %arg4: memref<6x512xbf16, #tpu.memory_space<vmem>>, %arg5: memref<1x512xf32, #tpu.memory_space<vmem>>, %arg6: memref<256x256xbf16, #tpu.memory_space<vmem>>, %arg7: memref<1x256xf32, #tpu.memory_space<vmem>>, %arg8: memref<256x256xbf16, #tpu.memory_space<vmem>>, %arg9: memref<1x256xf32, #tpu.memory_space<vmem>>, %arg10: memref<1x256xf32, #tpu.memory_space<vmem>>, %arg11: memref<1x1xf32, #tpu.memory_space<vmem>>, %arg12: memref<1x256xf32, #tpu.memory_space<vmem>>, %arg13: memref<1x1xf32, #tpu.memory_space<vmem>>, %arg14: memref<384x1xf32, #tpu.memory_space<vmem>>) attributes {dimension_semantics = [#tpu.dimension_semantics<parallel>], iteration_bounds = array<i64: 1>, scalar_prefetch = 0 : i64, scratch_operands = 0 : i64, tpu.core_type = #tpu.core_type<tc>, window_params = [{transform_indices = @transform_0, window_bounds = array<i64: 384, 17>}, {transform_indices = @transform_1, window_bounds = array<i64: 384, 6>}, {pipeline_mode = #tpu.pipeline_mode<synchronous>, transform_indices = @transform_2, window_bounds = array<i64: 17, 512>}, {pipeline_mode = #tpu.pipeline_mode<synchronous>, transform_indices = @transform_3, window_bounds = array<i64: 6, 512>}, {pipeline_mode = #tpu.pipeline_mode<synchronous>, transform_indices = @transform_4, window_bounds = array<i64: 1, 512>}, {pipeline_mode = #tpu.pipeline_mode<synchronous>, transform_indices = @transform_5, window_bounds = array<i64: 256, 256>}, {pipeline_mode = #tpu.pipeline_mode<synchronous>, transform_indices = @transform_6, window_bounds = array<i64: 1, 256>}, {pipeline_mode = #tpu.pipeline_mode<synchronous>, transform_indices = @transform_7, window_bounds = array<i64: 256, 256>}, {pipeline_mode = #tpu.pipeline_mode<synchronous>, transform_indices = @transform_8, window_bounds = array<i64: 1, 256>}, {pipeline_mode = #tpu.pipeline_mode<synchronous>, transform_indices = @transform_9, window_bounds = array<i64: 1, 256>}, {pipeline_mode = #tpu.pipeline_mode<synchronous>, transform_indices = @transform_10, window_bounds = array<i64: 1, 1>}, {pipeline_mode = #tpu.pipeline_mode<synchronous>, transform_indices = @transform_11, window_bounds = array<i64: 1, 256>}, {pipeline_mode = #tpu.pipeline_mode<synchronous>, transform_indices = @transform_12, window_bounds = array<i64: 1, 1>}, {transform_indices = @transform_13, window_bounds = array<i64: 384, 1>}]} {
    %c0 = arith.constant 0 : index
    %c0_0 = arith.constant 0 : index
    %0 = vector.load %arg1[%c0, %c0_0] : memref<384x17xbf16, #tpu.memory_space<vmem>>, vector<384x17xbf16>
    %c0_1 = arith.constant 0 : index
    %c0_2 = arith.constant 0 : index
    %1 = vector.load %arg3[%c0_1, %c0_2] : memref<17x512xbf16, #tpu.memory_space<vmem>>, vector<17x512xbf16>
    %cst = arith.constant dense<0.000000e+00> : vector<384x512xf32>
    %2 = tpu.matmul %0, %1, %cst {dimension_numbers = #tpu.dot_dimension_numbers<[1], [0], [0], [1], [0, 0, 1, 1], [], []>} : vector<384x17xbf16>, vector<17x512xbf16>, vector<384x512xf32> -> vector<384x512xf32>
    %c0_3 = arith.constant 0 : index
    %c0_4 = arith.constant 0 : index
    %3 = vector.load %arg2[%c0_3, %c0_4] : memref<384x6xbf16, #tpu.memory_space<vmem>>, vector<384x6xbf16>
    %c0_5 = arith.constant 0 : index
    %c0_6 = arith.constant 0 : index
    %4 = vector.load %arg4[%c0_5, %c0_6] : memref<6x512xbf16, #tpu.memory_space<vmem>>, vector<6x512xbf16>
    %cst_7 = arith.constant dense<0.000000e+00> : vector<384x512xf32>
    %5 = tpu.matmul %3, %4, %cst_7 {dimension_numbers = #tpu.dot_dimension_numbers<[1], [0], [0], [1], [0, 0, 1, 1], [], []>} : vector<384x6xbf16>, vector<6x512xbf16>, vector<384x512xf32> -> vector<384x512xf32>
    %6 = arith.addf %2, %5 : vector<384x512xf32>
    %c0_8 = arith.constant 0 : index
    %c0_9 = arith.constant 0 : index
    %7 = vector.load %arg5[%c0_8, %c0_9] : memref<1x512xf32, #tpu.memory_space<vmem>>, vector<1x512xf32>
    %8 = vector.broadcast %7 : vector<1x512xf32> to vector<384x512xf32>
    %9 = arith.addf %6, %8 : vector<384x512xf32>
    %cst_10 = arith.constant 0.000000e+00 : f32
    %10 = vector.broadcast %cst_10 : f32 to vector<384x512xf32>
    %11 = arith.maximumf %9, %10 : vector<384x512xf32>
    %12 = vector.extract_strided_slice %11 {offsets = [0, 0], sizes = [384, 256], strides = [1, 1]} : vector<384x512xf32> to vector<384x256xf32>
    %13 = arith.truncf %12 : vector<384x256xf32> to vector<384x256xbf16>
    %14 = vector.extract_strided_slice %11 {offsets = [0, 256], sizes = [384, 256], strides = [1, 1]} : vector<384x512xf32> to vector<384x256xf32>
    %15 = arith.truncf %14 : vector<384x256xf32> to vector<384x256xbf16>
    %c0_11 = arith.constant 0 : index
    %c0_12 = arith.constant 0 : index
    %16 = vector.load %arg6[%c0_11, %c0_12] : memref<256x256xbf16, #tpu.memory_space<vmem>>, vector<256x256xbf16>
    %cst_13 = arith.constant dense<0.000000e+00> : vector<384x256xf32>
    %17 = tpu.matmul %13, %16, %cst_13 {dimension_numbers = #tpu.dot_dimension_numbers<[1], [0], [0], [1], [0, 0, 1, 1], [], []>} : vector<384x256xbf16>, vector<256x256xbf16>, vector<384x256xf32> -> vector<384x256xf32>
    %c0_14 = arith.constant 0 : index
    %c0_15 = arith.constant 0 : index
    %18 = vector.load %arg7[%c0_14, %c0_15] : memref<1x256xf32, #tpu.memory_space<vmem>>, vector<1x256xf32>
    %19 = vector.broadcast %18 : vector<1x256xf32> to vector<384x256xf32>
    %20 = arith.addf %17, %19 : vector<384x256xf32>
    %cst_16 = arith.constant 0.000000e+00 : f32
    %21 = vector.broadcast %cst_16 : f32 to vector<384x256xf32>
    %22 = arith.maximumf %20, %21 : vector<384x256xf32>
    %c0_17 = arith.constant 0 : index
    %c0_18 = arith.constant 0 : index
    %23 = vector.load %arg8[%c0_17, %c0_18] : memref<256x256xbf16, #tpu.memory_space<vmem>>, vector<256x256xbf16>
    %cst_19 = arith.constant dense<0.000000e+00> : vector<384x256xf32>
    %24 = tpu.matmul %15, %23, %cst_19 {dimension_numbers = #tpu.dot_dimension_numbers<[1], [0], [0], [1], [0, 0, 1, 1], [], []>} : vector<384x256xbf16>, vector<256x256xbf16>, vector<384x256xf32> -> vector<384x256xf32>
    %c0_20 = arith.constant 0 : index
    %c0_21 = arith.constant 0 : index
    %25 = vector.load %arg9[%c0_20, %c0_21] : memref<1x256xf32, #tpu.memory_space<vmem>>, vector<1x256xf32>
    %26 = vector.broadcast %25 : vector<1x256xf32> to vector<384x256xf32>
    %27 = arith.addf %24, %26 : vector<384x256xf32>
    %cst_22 = arith.constant 0.000000e+00 : f32
    %28 = vector.broadcast %cst_22 : f32 to vector<384x256xf32>
    %29 = arith.maximumf %27, %28 : vector<384x256xf32>
    %c0_23 = arith.constant 0 : index
    %c0_24 = arith.constant 0 : index
    %30 = vector.load %arg10[%c0_23, %c0_24] : memref<1x256xf32, #tpu.memory_space<vmem>>, vector<1x256xf32>
    %31 = vector.broadcast %30 : vector<1x256xf32> to vector<384x256xf32>
    %32 = arith.mulf %22, %31 : vector<384x256xf32>
    %cst_25 = arith.constant dense<0.000000e+00> : vector<384xf32>
    %33 = vector.multi_reduction <add>, %32, %cst_25 [1] : vector<384x256xf32> to vector<384xf32>
    %34 = vector.shape_cast %33 : vector<384xf32> to vector<384x1xf32>
    %c0_26 = arith.constant 0 : index
    %c0_27 = arith.constant 0 : index
    %35 = vector.load %arg11[%c0_26, %c0_27] : memref<1x1xf32, #tpu.memory_space<vmem>>, vector<1x1xf32>
    %36 = vector.broadcast %35 : vector<1x1xf32> to vector<384x1xf32>
    %37 = arith.addf %34, %36 : vector<384x1xf32>
    %c0_28 = arith.constant 0 : index
    %c0_29 = arith.constant 0 : index
    %38 = vector.load %arg12[%c0_28, %c0_29] : memref<1x256xf32, #tpu.memory_space<vmem>>, vector<1x256xf32>
    %39 = vector.broadcast %38 : vector<1x256xf32> to vector<384x256xf32>
    %40 = arith.mulf %29, %39 : vector<384x256xf32>
    %cst_30 = arith.constant dense<0.000000e+00> : vector<384xf32>
    %41 = vector.multi_reduction <add>, %40, %cst_30 [1] : vector<384x256xf32> to vector<384xf32>
    %42 = vector.shape_cast %41 : vector<384xf32> to vector<384x1xf32>
    %c0_31 = arith.constant 0 : index
    %c0_32 = arith.constant 0 : index
    %43 = vector.load %arg13[%c0_31, %c0_32] : memref<1x1xf32, #tpu.memory_space<vmem>>, vector<1x1xf32>
    %44 = vector.broadcast %43 : vector<1x1xf32> to vector<384x1xf32>
    %45 = arith.addf %42, %44 : vector<384x1xf32>
    %46 = arith.minimumf %37, %45 : vector<384x1xf32>
    %c0_33 = arith.constant 0 : index
    %c0_34 = arith.constant 0 : index
    %47 = vector.load %arg14[%c0_33, %c0_34] : memref<384x1xf32, #tpu.memory_space<vmem>>, vector<384x1xf32>
    tpu.vector_store %arg14[%c0_33, %c0_34], %46 {strides = array<i32>} : memref<384x1xf32, #tpu.memory_space<vmem>>, vector<384x1xf32>,
    return
  }
  func.func @transform_0(%arg0: i32) -> (i32, i32) {
    %c0_i32 = arith.constant 0 : i32
    %c0_i32_0 = arith.constant 0 : i32
    return %arg0, %c0_i32 : i32, i32
  }
  func.func @transform_1(%arg0: i32) -> (i32, i32) {
    %c0_i32 = arith.constant 0 : i32
    %c0_i32_0 = arith.constant 0 : i32
    return %arg0, %c0_i32 : i32, i32
  }
  func.func @transform_2(%arg0: i32) -> (i32, i32) {
    %c0_i32 = arith.constant 0 : i32
    %c0_i32_0 = arith.constant 0 : i32
    %c0_i32_1 = arith.constant 0 : i32
    return %c0_i32, %c0_i32_0 : i32, i32
  }
  func.func @transform_3(%arg0: i32) -> (i32, i32) {
    %c0_i32 = arith.constant 0 : i32
    %c0_i32_0 = arith.constant 0 : i32
    %c0_i32_1 = arith.constant 0 : i32
    return %c0_i32, %c0_i32_0 : i32, i32
  }
  func.func @transform_4(%arg0: i32) -> (i32, i32) {
    %c0_i32 = arith.constant 0 : i32
    %c0_i32_0 = arith.constant 0 : i32
    %c0_i32_1 = arith.constant 0 : i32
    return %c0_i32, %c0_i32_0 : i32, i32
  }
  func.func @transform_5(%arg0: i32) -> (i32, i32) {
    %c0_i32 = arith.constant 0 : i32
    %c0_i32_0 = arith.constant 0 : i32
    %c0_i32_1 = arith.constant 0 : i32
    return %c0_i32, %c0_i32_0 : i32, i32
  }
  func.func @transform_6(%arg0: i32) -> (i32, i32) {
    %c0_i32 = arith.constant 0 : i32
    %c0_i32_0 = arith.constant 0 : i32
    %c0_i32_1 = arith.constant 0 : i32
    return %c0_i32, %c0_i32_0 : i32, i32
  }
  func.func @transform_7(%arg0: i32) -> (i32, i32) {
    %c0_i32 = arith.constant 0 : i32
    %c0_i32_0 = arith.constant 0 : i32
    %c0_i32_1 = arith.constant 0 : i32
    return %c0_i32, %c0_i32_0 : i32, i32
  }
  func.func @transform_8(%arg0: i32) -> (i32, i32) {
    %c0_i32 = arith.constant 0 : i32
    %c0_i32_0 = arith.constant 0 : i32
    %c0_i32_1 = arith.constant 0 : i32
    return %c0_i32, %c0_i32_0 : i32, i32
  }
  func.func @transform_9(%arg0: i32) -> (i32, i32) {
    %c0_i32 = arith.constant 0 : i32
    %c0_i32_0 = arith.constant 0 : i32
    %c0_i32_1 = arith.constant 0 : i32
    return %c0_i32, %c0_i32_0 : i32, i32
  }
  func.func @transform_10(%arg0: i32) -> (i32, i32) {
    %c0_i32 = arith.constant 0 : i32
    %c0_i32_0 = arith.constant 0 : i32
    %c0_i32_1 = arith.constant 0 : i32
    return %c0_i32, %c0_i32_0 : i32, i32
  }
  func.func @transform_11(%arg0: i32) -> (i32, i32) {
    %c0_i32 = arith.constant 0 : i32
    %c0_i32_0 = arith.constant 0 : i32
    %c0_i32_1 = arith.constant 0 : i32
    return %c0_i32, %c0_i32_0 : i32, i32
  }
  func.func @transform_12(%arg0: i32) -> (i32, i32) {
    %c0_i32 = arith.constant 0 : i32
    %c0_i32_0 = arith.constant 0 : i32
    %c0_i32_1 = arith.constant 0 : i32
    return %c0_i32, %c0_i32_0 : i32, i32
  }
  func.func @transform_13(%arg0: i32) -> (i32, i32) {
    %c0_i32 = arith.constant 0 : i32
    %c0_i32_0 = arith.constant 0 : i32
    return %arg0, %c0_i32 : i32, i32
  }
}

</mosaic_0001>

<llo_original>
// kernel: tpu_custom_call.1
$region0: #{tpu_custom_call.1}
  #allocation0 [shape = 'u32[]', space=smem, size = 0x4, offset = 0x4, fixed_abs, tag = 'smem constant byte address 0x4 - core index']
  #allocation1 [shape = 'u32[144,128]{1,0:T(1,128)}', space=vmem, size = 0x12000, scoped, tag = 'internal scratch']
  #allocation2 [shape = 'f32[1,1]{1,0:T(1,128)S(1)}', space=vmem, size = 0x200, scoped, tag = 'scoped memory for tpu_custom_call.1']
  #allocation3 [shape = 'f32[1,1]{1,0:T(1,128)S(1)}', space=vmem, size = 0x200, scoped, tag = 'scoped memory for tpu_custom_call.1']
  %s0 = inlined_call_operand.vmem [shape: bf16[384,17], index: 0, kind: input, shape index: {}]
  %s1 = inlined_call_operand.vmem [shape: bf16[384,6], index: 1, kind: input, shape index: {}]
  %s2 = inlined_call_operand.vmem [shape: bf16[17,512], index: 2, kind: input, shape index: {}]
  %s3 = inlined_call_operand.vmem [shape: bf16[6,512], index: 3, kind: input, shape index: {}]
  %s4 = inlined_call_operand.vmem [shape: f32[1,512], index: 4, kind: input, shape index: {}]
  %s5 = inlined_call_operand.vmem [shape: bf16[256,256], index: 5, kind: input, shape index: {}]
  %s6 = inlined_call_operand.vmem [shape: f32[1,256], index: 6, kind: input, shape index: {}]
  %s7 = inlined_call_operand.hbm [shape: bf16[256,256], index: 7, kind: input, shape index: {}]
  %s8 = inlined_call_operand.vmem [shape: f32[1,256], index: 8, kind: input, shape index: {}]
  %s9 = inlined_call_operand.vmem [shape: f32[1,256], index: 9, kind: input, shape index: {}]
  %s10 = inlined_call_operand.<no memory space> [shape: f32[1,1], index: 10, kind: input, shape index: {}]
  %s11 = inlined_call_operand.vmem [shape: f32[1,256], index: 11, kind: input, shape index: {}]
  %s12 = inlined_call_operand.<no memory space> [shape: f32[1,1], index: 12, kind: input, shape index: {}]
  %s13 = inlined_call_operand.vmem [shape: f32[384,1], index: 13, kind: output, shape index: {}]
  %s14 = sld [smem:[#allocation0]]
  $region66: #{tpu_custom_call.1} parent=0
    _
  %s16 = ssub.s32 1, %s14
  %s17 = scalar_select 0, %s16, %s14
  %v18 = vstv %s10
  %19 = vst [vmem:[#allocation2] sm:$0x1] %v18
  %v20 = vstv %s12
  %21 = vst [vmem:[#allocation3] sm:$0x1] %v20
  $region1: #{tpu_custom_call.1} parent=0
    #allocation4 [shape = 'u8[131072]{0}', space=vmem, size = 0x20000, scoped, tag = 'input window, operand 7, single buffered']
    #allocation5 [shape = 's32[1]{0}', space=sflag, size = 0x4, scoped, tag = 'scoped memory for tpu_custom_call.1']
    %22 = vsyncpa [#allocation5], 0
    // Predicated region
    $region2: #{tpu_custom_call.1} parent=1 // pred_check
      _
    $region3: #{tpu_custom_call.1} parent=1 // pred_check_branch
      %24 = sbr.rel (0) target = $region5
    $region4: #{tpu_custom_call.1} parent=1 // pred_region
      _
    $region5: #{tpu_custom_call.1} parent=1 // pred_fallthru
      _
    // Predicated region
    $region6: #{tpu_custom_call.1} parent=1 // pred_check
      _
    $region7: #{tpu_custom_call.1} parent=1 // pred_check_branch
      %26 = sbr.rel (0) target = $region9
    $region8: #{tpu_custom_call.1} parent=1 // pred_region
      _
    $region9: #{tpu_custom_call.1} parent=1 // pred_fallthru
      _
    // Predicated region
    $region10: #{tpu_custom_call.1} parent=1 // pred_check
      _
    $region11: #{tpu_custom_call.1} parent=1 // pred_check_branch
      %28 = sbr.rel (0) target = $region13
    $region12: #{tpu_custom_call.1} parent=1 // pred_region
      _
    $region13: #{tpu_custom_call.1} parent=1 // pred_fallthru
      _
    // Predicated region
    $region14: #{tpu_custom_call.1} parent=1 // pred_check
      _
    $region15: #{tpu_custom_call.1} parent=1 // pred_check_branch
      %30 = sbr.rel (0) target = $region17
    $region16: #{tpu_custom_call.1} parent=1 // pred_region
      _
    $region17: #{tpu_custom_call.1} parent=1 // pred_fallthru
      _
    // Predicated region
    $region18: #{tpu_custom_call.1} parent=1 // pred_check
      _
    $region19: #{tpu_custom_call.1} parent=1 // pred_check_branch
      %32 = sbr.rel (0) target = $region21
    $region20: #{tpu_custom_call.1} parent=1 // pred_region
      _
    $region21: #{tpu_custom_call.1} parent=1 // pred_fallthru
      _
    // Predicated region
    $region22: #{tpu_custom_call.1} parent=1 // pred_check
      _
    $region23: #{tpu_custom_call.1} parent=1 // pred_check_branch
      %34 = sbr.rel (0) target = $region25
    $region24: #{tpu_custom_call.1} parent=1 // pred_region
      _
    $region25: #{tpu_custom_call.1} parent=1 // pred_fallthru
      _
    // Predicated region
    $region26: #{tpu_custom_call.1} parent=1 // pred_check
      _
    $region27: #{tpu_custom_call.1} parent=1 // pred_check_branch
      %36 = sbr.rel (0) target = $region29
    $region28: #{tpu_custom_call.1} parent=1 // pred_region
      _
    $region29: #{tpu_custom_call.1} parent=1 // pred_fallthru
      _
    // Predicated region
    $region30: #{tpu_custom_call.1} parent=1 // pred_check
      _
    $region31: #{tpu_custom_call.1} parent=1 // pred_check_branch
      %38 = sbr.rel (0) target = $region33
    $region32: #{tpu_custom_call.1} parent=1 // pred_region
      %s40 = ssub.s32 4096, 4096
      %41 = vsyncadd [#allocation5], %s40
      %s42 = sshll.u32 [#allocation4], 4
      %s43 = int_to_ptr.vmem [resolvable:$true] %s42
      %48 = dma.hbm_to_vmem [thread:$0]  %s7, 4096, %s43, [#allocation5], 128, 128, 8
    $region33: #{tpu_custom_call.1} parent=1 // pred_fallthru
      _
    // Predicated region
    $region34: #{tpu_custom_call.1} parent=1 // pred_check
      _
    $region35: #{tpu_custom_call.1} parent=1 // pred_check_branch
      %50 = sbr.rel (0) target = $region37
    $region36: #{tpu_custom_call.1} parent=1 // pred_region
      _
    $region37: #{tpu_custom_call.1} parent=1 // pred_fallthru
      _
    // Predicated region
    $region38: #{tpu_custom_call.1} parent=1 // pred_check
      _
    $region39: #{tpu_custom_call.1} parent=1 // pred_check_branch
      %52 = sbr.rel (0) target = $region41
    $region40: #{tpu_custom_call.1} parent=1 // pred_region
      _
    $region41: #{tpu_custom_call.1} parent=1 // pred_fallthru
      _
    // Predicated region
    $region42: #{tpu_custom_call.1} parent=1 // pred_check
      _
    $region43: #{tpu_custom_call.1} parent=1 // pred_check_branch
      %54 = sbr.rel (0) target = $region45
    $region44: #{tpu_custom_call.1} parent=1 // pred_region
      _
    $region45: #{tpu_custom_call.1} parent=1 // pred_fallthru
      _
    // Predicated region
    $region46: #{tpu_custom_call.1} parent=1 // pred_check
      _
    $region47: #{tpu_custom_call.1} parent=1 // pred_check_branch
      %56 = sbr.rel (0) target = $region49
    $region48: #{tpu_custom_call.1} parent=1 // pred_region
      _
    $region49: #{tpu_custom_call.1} parent=1 // pred_fallthru
      _
    // Predicated region
    $region50: #{tpu_custom_call.1} parent=1 // pred_check
      _
    $region51: #{tpu_custom_call.1} parent=1 // pred_check_branch
      %58 = sbr.rel (0) target = $region53
    $region52: #{tpu_custom_call.1} parent=1 // pred_region
      _
    $region53: #{tpu_custom_call.1} parent=1 // pred_fallthru
      _
    // Predicated region
    $region54: #{tpu_custom_call.1} parent=1 // pred_check
      _
    $region55: #{tpu_custom_call.1} parent=1 // pred_check_branch
      %60 = sbr.rel (0) target = $region57
    $region56: #{tpu_custom_call.1} parent=1 // pred_region
      %61 = dma.done [#allocation5], 4096
    $region57: #{tpu_custom_call.1} parent=1 // pred_fallthru
      _
    %v63 = vld [vmem:[%s0] sm:$0xf]
    %v64 = vld [vmem:[%s0 + $0x4] sm:$0xf]
    %v65 = vld [vmem:[%s0 + $0x8] sm:$0xf]
    %v66 = vld [vmem:[%s0 + $0xc] sm:$0xf]
    %v67 = vld [vmem:[%s0 + $0x10] sm:$0xf]
    %v68 = vld [vmem:[%s0 + $0x14] sm:$0xf]
    %v69 = vld [vmem:[%s0 + $0x18] sm:$0xf]
    %v70 = vld [vmem:[%s0 + $0x1c] sm:$0xf]
    %v71 = vld [vmem:[%s0 + $0x20] sm:$0xf]
    %v72 = vld [vmem:[%s0 + $0x24] sm:$0xf]
    %v73 = vld [vmem:[%s0 + $0x28] sm:$0xf]
    %v74 = vld [vmem:[%s0 + $0x2c] sm:$0xf]
    %v75 = vld [vmem:[%s0 + $0x30] sm:$0xf]
    %v76 = vld [vmem:[%s0 + $0x34] sm:$0xf]
    %v77 = vld [vmem:[%s0 + $0x38] sm:$0xf]
    %v78 = vld [vmem:[%s0 + $0x3c] sm:$0xf]
    %v79 = vld [vmem:[%s0 + $0x40] sm:$0xf]
    %v80 = vld [vmem:[%s0 + $0x44] sm:$0xf]
    %v81 = vld [vmem:[%s0 + $0x48] sm:$0xf]
    %v82 = vld [vmem:[%s0 + $0x4c] sm:$0xf]
    %v83 = vld [vmem:[%s0 + $0x50] sm:$0xf]
    %v84 = vld [vmem:[%s0 + $0x54] sm:$0xf]
    %v85 = vld [vmem:[%s0 + $0x58] sm:$0xf]
    %v86 = vld [vmem:[%s0 + $0x5c] sm:$0xf]
    %v87 = vld [vmem:[%s0 + $0x60] sm:$0xf]
    %v88 = vld [vmem:[%s0 + $0x64] sm:$0xf]
    %v89 = vld [vmem:[%s0 + $0x68] sm:$0xf]
    %v90 = vld [vmem:[%s0 + $0x6c] sm:$0xf]
    %v91 = vld [vmem:[%s0 + $0x70] sm:$0xf]
    %v92 = vld [vmem:[%s0 + $0x74] sm:$0xf]
    %v93 = vld [vmem:[%s0 + $0x78] sm:$0xf]
    %v94 = vld [vmem:[%s0 + $0x7c] sm:$0xf]
    %v95 = vld [vmem:[%s0 + $0x80] sm:$0xf]
    %v96 = vld [vmem:[%s0 + $0x84] sm:$0xf]
    %v97 = vld [vmem:[%s0 + $0x88] sm:$0xf]
    %v98 = vld [vmem:[%s0 + $0x8c] sm:$0xf]
    %v99 = vld [vmem:[%s0 + $0x90] sm:$0xf]
    %v100 = vld [vmem:[%s0 + $0x94] sm:$0xf]
    %v101 = vld [vmem:[%s0 + $0x98] sm:$0xf]
    %v102 = vld [vmem:[%s0 + $0x9c] sm:$0xf]
    %v103 = vld [vmem:[%s0 + $0xa0] sm:$0xf]
    %v104 = vld [vmem:[%s0 + $0xa4] sm:$0xf]
    %v105 = vld [vmem:[%s0 + $0xa8] sm:$0xf]
    %v106 = vld [vmem:[%s0 + $0xac] sm:$0xf]
    %v107 = vld [vmem:[%s0 + $0xb0] sm:$0xf]
    %v108 = vld [vmem:[%s0 + $0xb4] sm:$0xf]
    %v109 = vld [vmem:[%s0 + $0xb8] sm:$0xf]
    %v110 = vld [vmem:[%s0 + $0xbc] sm:$0xf]
    %v111 = vld [vmem:[%s2] sm:$0xff]
    %v112 = vld [vmem:[%s2 + $0x8] sm:$0xff]
    %v113 = vld [vmem:[%s2 + $0x10] sm:$0xff]
    %v114 = vld [vmem:[%s2 + $0x18] sm:$0xff]
    %v115 = vld [vmem:[%s2 + $0x20] sm:$0x11]
    %v116 = vld [vmem:[%s2 + $0x28] sm:$0x11]
    %v117 = vld [vmem:[%s1] sm:$0xf]
    %v118 = vld [vmem:[%s1 + $0x4] sm:$0xf]
    %v119 = vld [vmem:[%s1 + $0x8] sm:$0xf]
    %v120 = vld [vmem:[%s1 + $0xc] sm:$0xf]
    %v121 = vld [vmem:[%s1 + $0x10] sm:$0xf]
    %v122 = vld [vmem:[%s1 + $0x14] sm:$0xf]
    %v123 = vld [vmem:[%s1 + $0x18] sm:$0xf]
    %v124 = vld [vmem:[%s1 + $0x1c] sm:$0xf]
    %v125 = vld [vmem:[%s1 + $0x20] sm:$0xf]
    %v126 = vld [vmem:[%s1 + $0x24] sm:$0xf]
    %v127 = vld [vmem:[%s1 + $0x28] sm:$0xf]
    %v128 = vld [vmem:[%s1 + $0x2c] sm:$0xf]
    %v129 = vld [vmem:[%s1 + $0x30] sm:$0xf]
    %v130 = vld [vmem:[%s1 + $0x34] sm:$0xf]
    %v131 = vld [vmem:[%s1 + $0x38] sm:$0xf]
    %v132 = vld [vmem:[%s1 + $0x3c] sm:$0xf]
    %v133 = vld [vmem:[%s1 + $0x40] sm:$0xf]
    %v134 = vld [vmem:[%s1 + $0x44] sm:$0xf]
    %v135 = vld [vmem:[%s1 + $0x48] sm:$0xf]
    %v136 = vld [vmem:[%s1 + $0x4c] sm:$0xf]
    %v137 = vld [vmem:[%s1 + $0x50] sm:$0xf]
    %v138 = vld [vmem:[%s1 + $0x54] sm:$0xf]
    %v139 = vld [vmem:[%s1 + $0x58] sm:$0xf]
    %v140 = vld [vmem:[%s1 + $0x5c] sm:$0xf]
    %v141 = vld [vmem:[%s1 + $0x60] sm:$0xf]
    %v142 = vld [vmem:[%s1 + $0x64] sm:$0xf]
    %v143 = vld [vmem:[%s1 + $0x68] sm:$0xf]
    %v144 = vld [vmem:[%s1 + $0x6c] sm:$0xf]
    %v145 = vld [vmem:[%s1 + $0x70] sm:$0xf]
    %v146 = vld [vmem:[%s1 + $0x74] sm:$0xf]
    %v147 = vld [vmem:[%s1 + $0x78] sm:$0xf]
    %v148 = vld [vmem:[%s1 + $0x7c] sm:$0xf]
    %v149 = vld [vmem:[%s1 + $0x80] sm:$0xf]
    %v150 = vld [vmem:[%s1 + $0x84] sm:$0xf]
    %v151 = vld [vmem:[%s1 + $0x88] sm:$0xf]
    %v152 = vld [vmem:[%s1 + $0x8c] sm:$0xf]
    %v153 = vld [vmem:[%s1 + $0x90] sm:$0xf]
    %v154 = vld [vmem:[%s1 + $0x94] sm:$0xf]
    %v155 = vld [vmem:[%s1 + $0x98] sm:$0xf]
    %v156 = vld [vmem:[%s1 + $0x9c] sm:$0xf]
    %v157 = vld [vmem:[%s1 + $0xa0] sm:$0xf]
    %v158 = vld [vmem:[%s1 + $0xa4] sm:$0xf]
    %v159 = vld [vmem:[%s1 + $0xa8] sm:$0xf]
    %v160 = vld [vmem:[%s1 + $0xac] sm:$0xf]
    %v161 = vld [vmem:[%s1 + $0xb0] sm:$0xf]
    %v162 = vld [vmem:[%s1 + $0xb4] sm:$0xf]
    %v163 = vld [vmem:[%s1 + $0xb8] sm:$0xf]
    %v164 = vld [vmem:[%s1 + $0xbc] sm:$0xf]
    %v165 = vld [vmem:[%s3] sm:$0x77]
    %v166 = vld [vmem:[%s3 + $0x8] sm:$0x77]
    %v215 = vunpack.c.l.b16 %v117
    %v216 = vunpack.c.l.b16 %v118
    %v217 = vunpack.c.l.b16 %v119
    %v218 = vunpack.c.l.b16 %v120
    %v219 = vunpack.c.l.b16 %v121
    %v220 = vunpack.c.l.b16 %v122
    %v221 = vunpack.c.l.b16 %v123
    %v222 = vunpack.c.l.b16 %v124
    %v223 = vunpack.c.l.b16 %v125
    %v224 = vunpack.c.l.b16 %v126
    %v225 = vunpack.c.l.b16 %v127
    %v226 = vunpack.c.l.b16 %v128
    %v227 = vunpack.c.l.b16 %v129
    %v228 = vunpack.c.l.b16 %v130
    %v229 = vunpack.c.l.b16 %v131
    %v230 = vunpack.c.l.b16 %v132
    %v231 = vunpack.c.l.b16 %v133
    %v232 = vunpack.c.l.b16 %v134
    %v233 = vunpack.c.l.b16 %v135
    %v234 = vunpack.c.l.b16 %v136
    %v235 = vunpack.c.l.b16 %v137
    %v236 = vunpack.c.l.b16 %v138
    %v237 = vunpack.c.l.b16 %v139
    %v238 = vunpack.c.l.b16 %v140
    %v239 = vunpack.c.l.b16 %v141
    %v240 = vunpack.c.l.b16 %v142
    %v241 = vunpack.c.l.b16 %v143
    %v242 = vunpack.c.l.b16 %v144
    %v243 = vunpack.c.l.b16 %v145
    %v244 = vunpack.c.l.b16 %v146
    %v245 = vunpack.c.l.b16 %v147
    %v246 = vunpack.c.l.b16 %v148
    %v247 = vunpack.c.l.b16 %v149
    %v248 = vunpack.c.l.b16 %v150
    %v249 = vunpack.c.l.b16 %v151
    %v250 = vunpack.c.l.b16 %v152
    %v251 = vunpack.c.l.b16 %v153
    %v252 = vunpack.c.l.b16 %v154
    %v253 = vunpack.c.l.b16 %v155
    %v254 = vunpack.c.l.b16 %v156
    %v255 = vunpack.c.l.b16 %v157
    %v256 = vunpack.c.l.b16 %v158
    %v257 = vunpack.c.l.b16 %v159
    %v258 = vunpack.c.l.b16 %v160
    %v259 = vunpack.c.l.b16 %v161
    %v260 = vunpack.c.l.b16 %v162
    %v261 = vunpack.c.l.b16 %v163
    %v262 = vunpack.c.l.b16 %v164
    %v263 = vpack.c.b16 %v216, %v215
    %v264 = vpack.c.b16 %v218, %v217
    %v265 = vpack.c.b16 %v220, %v219
    %v266 = vpack.c.b16 %v222, %v221
    %v267 = vpack.c.b16 %v224, %v223
    %v268 = vpack.c.b16 %v226, %v225
    %v269 = vpack.c.b16 %v228, %v227
    %v270 = vpack.c.b16 %v230, %v229
    %v271 = vpack.c.b16 %v232, %v231
    %v272 = vpack.c.b16 %v234, %v233
    %v273 = vpack.c.b16 %v236, %v235
    %v274 = vpack.c.b16 %v238, %v237
    %v275 = vpack.c.b16 %v240, %v239
    %v276 = vpack.c.b16 %v242, %v241
    %v277 = vpack.c.b16 %v244, %v243
    %v278 = vpack.c.b16 %v246, %v245
    %v279 = vpack.c.b16 %v248, %v247
    %v280 = vpack.c.b16 %v250, %v249
    %v281 = vpack.c.b16 %v252, %v251
    %v282 = vpack.c.b16 %v254, %v253
    %v283 = vpack.c.b16 %v256, %v255
    %v284 = vpack.c.b16 %v258, %v257
    %v285 = vpack.c.b16 %v260, %v259
    %v286 = vpack.c.b16 %v262, %v261
    %v289 = vunpack.c.l.b16 %v165
    %v290 = vunpack.c.h.b16 %v165
    %v291 = vunpack.c.l.b16 %v166
    %v292 = vunpack.c.h.b16 %v166
    %v293 = vpack.c.b16 %v289, %v289
    %v294 = vpack.c.b16 %v290, %v290
    %v295 = vpack.c.b16 %v291, %v291
    %v296 = vpack.c.b16 %v292, %v292
    %vm297 = vcmask 48128
    %v299 = vsel %vm297, %v263, 0
    %v302 = vsel %vm297, %v264, 0
    %v305 = vsel %vm297, %v265, 0
    %v308 = vsel %vm297, %v266, 0
    %v311 = vsel %vm297, %v267, 0
    %v314 = vsel %vm297, %v268, 0
    %v317 = vsel %vm297, %v269, 0
    %v320 = vsel %vm297, %v270, 0
    %v323 = vsel %vm297, %v271, 0
    %v326 = vsel %vm297, %v272, 0
    %v329 = vsel %vm297, %v273, 0
    %v332 = vsel %vm297, %v274, 0
    %v335 = vsel %vm297, %v275, 0
    %v338 = vsel %vm297, %v276, 0
    %v341 = vsel %vm297, %v277, 0
    %v344 = vsel %vm297, %v278, 0
    %v347 = vsel %vm297, %v279, 0
    %v350 = vsel %vm297, %v280, 0
    %v353 = vsel %vm297, %v281, 0
    %v356 = vsel %vm297, %v282, 0
    %v359 = vsel %vm297, %v283, 0
    %v362 = vsel %vm297, %v284, 0
    %v365 = vsel %vm297, %v285, 0
    %v368 = vsel %vm297, %v286, 0
    %vm370 = vcmask 1042432
    %v372 = vsel %vm370, %v293, 0
    %v375 = vsel %vm370, %v294, 0
    %v378 = vsel %vm370, %v295, 0
    %v381 = vsel %vm370, %v296, 0
    %383 = vmatprep.subr.bf16.mxu0 %v375
    %384 = vmatpush1.bf16.msra.mxu0 %v372
    %385 = vmatprep.subr.bf16.mxu0 0
    %386 = vmatpush1.bf16.msra.mxu0 0
    %387 = vmatprep.subr.bf16.mxu0 0
    %388 = vmatpush1.bf16.msra.mxu0 0
    %389 = vmatprep.subr.bf16.mxu0 0
    %390 = vmatpush1.bf16.msra.mxu0 0
    %391 = vmatprep.subr.bf16.mxu0 0
    %392 = vmatpush1.bf16.msra.mxu0 0
    %393 = vmatprep.subr.bf16.mxu0 0
    %394 = vmatpush1.bf16.msra.mxu0 0
    %395 = vmatprep.subr.bf16.mxu0 0
    %396 = vmatpush1.bf16.msra.mxu0 0
    %397 = vmatprep.subr.bf16.mxu0 0
    %398 = vmatpush1.bf16.msra.mxu0 0
    %399 = vmatprep.subr.bf16.mxu0 0
    %400 = vmatpush1.bf16.msra.mxu0 0
    %401 = vmatprep.subr.bf16.mxu0 0
    %402 = vmatpush1.bf16.msra.mxu0 0
    %403 = vmatprep.subr.bf16.mxu0 0
    %404 = vmatpush1.bf16.msra.mxu0 0
    %405 = vmatprep.subr.bf16.mxu0 0
    %406 = vmatpush1.bf16.msra.mxu0 0
    %407 = vmatprep.subr.bf16.mxu0 0
    %408 = vmatpush1.bf16.msra.mxu0 0
    %409 = vmatprep.subr.bf16.mxu0 0
    %410 = vmatpush1.bf16.msra.mxu0 0
    %411 = vmatprep.subr.bf16.mxu0 0
    %412 = vmatpush1.bf16.msra.mxu0 0
    %413 = vmatprep.subr.bf16.mxu0 0
    %414 = vmatpush1.bf16.msra.mxu0 0
    %415 = vmatprep.mubr.bf16.mxu0 0
    %416 = vmatmul.mubr.bf16.gmra.mrb[0].mxu0 %v299
    %v417 = vpop.f32.mrb[0].mxu0
    %v418 = vadd.f32 0.0, %v417
    %v419 = vpop.f32.mrb[0].mxu0
    %v420 = vadd.f32 0.0, %v419
    %v421 = vpop.f32.mrb[0].mxu0
    %v422 = vadd.f32 0.0, %v421
    %v423 = vpop.f32.mrb[0].mxu0
    %v424 = vadd.f32 0.0, %v423
    %425 = vmatprep.mubr.bf16.mxu0 0
    %426 = vmatmul.mubr.bf16.gmra.mrb[0].mxu0 %v302
    %v427 = vpop.f32.mrb[0].mxu0
    %v428 = vadd.f32 0.0, %v427
    %v429 = vpop.f32.mrb[0].mxu0
    %v430 = vadd.f32 0.0, %v429
    %v431 = vpop.f32.mrb[0].mxu0
    %v432 = vadd.f32 0.0, %v431
    %v433 = vpop.f32.mrb[0].mxu0
    %v434 = vadd.f32 0.0, %v433
    %435 = vmatprep.mubr.bf16.mxu0 0
    %436 = vmatmul.mubr.bf16.gmra.mrb[0].mxu0 %v305
    %v437 = vpop.f32.mrb[0].mxu0
    %v438 = vadd.f32 0.0, %v437
    %v439 = vpop.f32.mrb[0].mxu0
    %v440 = vadd.f32 0.0, %v439
    %v441 = vpop.f32.mrb[0].mxu0
    %v442 = vadd.f32 0.0, %v441
    %v443 = vpop.f32.mrb[0].mxu0
    %v444 = vadd.f32 0.0, %v443
    %445 = vmatprep.mubr.bf16.mxu0 0
    %446 = vmatmul.mubr.bf16.gmra.mrb[0].mxu0 %v308
    %v447 = vpop.f32.mrb[0].mxu0
    %v448 = vadd.f32 0.0, %v447
    %v449 = vpop.f32.mrb[0].mxu0
    %v450 = vadd.f32 0.0, %v449
    %v451 = vpop.f32.mrb[0].mxu0
    %v452 = vadd.f32 0.0, %v451
    %v453 = vpop.f32.mrb[0].mxu0
    %v454 = vadd.f32 0.0, %v453
    %455 = vmatprep.mubr.bf16.mxu0 0
    %456 = vmatmul.mubr.bf16.gmra.mrb[0].mxu0 %v311
    %v457 = vpop.f32.mrb[0].mxu0
    %v458 = vadd.f32 0.0, %v457
    %v459 = vpop.f32.mrb[0].mxu0
    %v460 = vadd.f32 0.0, %v459
    %v461 = vpop.f32.mrb[0].mxu0
    %v462 = vadd.f32 0.0, %v461
    %v463 = vpop.f32.mrb[0].mxu0
    %v464 = vadd.f32 0.0, %v463
    %465 = vmatprep.mubr.bf16.mxu0 0
    %466 = vmatmul.mubr.bf16.gmra.mrb[0].mxu0 %v314
    %v467 = vpop.f32.mrb[0].mxu0
    %v468 = vadd.f32 0.0, %v467
    %v469 = vpop.f32.mrb[0].mxu0
    %v470 = vadd.f32 0.0, %v469
    %v471 = vpop.f32.mrb[0].mxu0
    %v472 = vadd.f32 0.0, %v471
    %v473 = vpop.f32.mrb[0].mxu0
    %v474 = vadd.f32 0.0, %v473
    %475 = vmatprep.mubr.bf16.mxu0 0
    %476 = vmatmul.mubr.bf16.gmra.mrb[0].mxu0 %v317
    %v477 = vpop.f32.mrb[0].mxu0
    %v478 = vadd.f32 0.0, %v477
    %v479 = vpop.f32.mrb[0].mxu0
    %v480 = vadd.f32 0.0, %v479
    %v481 = vpop.f32.mrb[0].mxu0
    %v482 = vadd.f32 0.0, %v481
    %v483 = vpop.f32.mrb[0].mxu0
    %v484 = vadd.f32 0.0, %v483
    %485 = vmatprep.mubr.bf16.mxu0 0
    %486 = vmatmul.mubr.bf16.gmra.mrb[0].mxu0 %v320
    %v487 = vpop.f32.mrb[0].mxu0
    %v488 = vadd.f32 0.0, %v487
    %v489 = vpop.f32.mrb[0].mxu0
    %v490 = vadd.f32 0.0, %v489
    %v491 = vpop.f32.mrb[0].mxu0
    %v492 = vadd.f32 0.0, %v491
    %v493 = vpop.f32.mrb[0].mxu0
    %v494 = vadd.f32 0.0, %v493
    %495 = vmatprep.mubr.bf16.mxu0 0
    %496 = vmatmul.mubr.bf16.gmra.mrb[0].mxu0 %v323
    %v497 = vpop.f32.mrb[0].mxu0
    %v498 = vadd.f32 0.0, %v497
    %v499 = vpop.f32.mrb[0].mxu0
    %v500 = vadd.f32 0.0, %v499
    %v501 = vpop.f32.mrb[0].mxu0
    %v502 = vadd.f32 0.0, %v501
    %v503 = vpop.f32.mrb[0].mxu0
    %v504 = vadd.f32 0.0, %v503
    %505 = vmatprep.mubr.bf16.mxu0 0
    %506 = vmatmul.mubr.bf16.gmra.mrb[0].mxu0 %v326
    %v507 = vpop.f32.mrb[0].mxu0
    %v508 = vadd.f32 0.0, %v507
    %v509 = vpop.f32.mrb[0].mxu0
    %v510 = vadd.f32 0.0, %v509
    %v511 = vpop.f32.mrb[0].mxu0
    %v512 = vadd.f32 0.0, %v511
    %v513 = vpop.f32.mrb[0].mxu0
    %v514 = vadd.f32 0.0, %v513
    %515 = vmatprep.mubr.bf16.mxu0 0
    %516 = vmatmul.mubr.bf16.gmra.mrb[0].mxu0 %v329
    %v517 = vpop.f32.mrb[0].mxu0
    %v518 = vadd.f32 0.0, %v517
    %v519 = vpop.f32.mrb[0].mxu0
    %v520 = vadd.f32 0.0, %v519
    %v521 = vpop.f32.mrb[0].mxu0
    %v522 = vadd.f32 0.0, %v521
    %v523 = vpop.f32.mrb[0].mxu0
    %v524 = vadd.f32 0.0, %v523
    %525 = vmatprep.mubr.bf16.mxu0 0
    %526 = vmatmul.mubr.bf16.gmra.mrb[0].mxu0 %v332
    %v527 = vpop.f32.mrb[0].mxu0
    %v528 = vadd.f32 0.0, %v527
    %v529 = vpop.f32.mrb[0].mxu0
    %v530 = vadd.f32 0.0, %v529
    %v531 = vpop.f32.mrb[0].mxu0
    %v532 = vadd.f32 0.0, %v531
    %v533 = vpop.f32.mrb[0].mxu0
    %v534 = vadd.f32 0.0, %v533
    %535 = vmatprep.mubr.bf16.mxu0 0
    %536 = vmatmul.mubr.bf16.gmra.mrb[0].mxu0 %v335
    %v537 = vpop.f32.mrb[0].mxu0
    %v538 = vadd.f32 0.0, %v537
    %v539 = vpop.f32.mrb[0].mxu0
    %v540 = vadd.f32 0.0, %v539
    %v541 = vpop.f32.mrb[0].mxu0
    %v542 = vadd.f32 0.0, %v541
    %v543 = vpop.f32.mrb[0].mxu0
    %v544 = vadd.f32 0.0, %v543
    %545 = vmatprep.mubr.bf16.mxu0 0
    %546 = vmatmul.mubr.bf16.gmra.mrb[0].mxu0 %v338
    %v547 = vpop.f32.mrb[0].mxu0
    %v548 = vadd.f32 0.0, %v547
    %v549 = vpop.f32.mrb[0].mxu0
    %v550 = vadd.f32 0.0, %v549
    %v551 = vpop.f32.mrb[0].mxu0
    %v552 = vadd.f32 0.0, %v551
    %v553 = vpop.f32.mrb[0].mxu0
    %v554 = vadd.f32 0.0, %v553
    %555 = vmatprep.mubr.bf16.mxu0 0
    %556 = vmatmul.mubr.bf16.gmra.mrb[0].mxu0 %v341
    %v557 = vpop.f32.mrb[0].mxu0
    %v558 = vadd.f32 0.0, %v557
    %v559 = vpop.f32.mrb[0].mxu0
    %v560 = vadd.f32 0.0, %v559
    %v561 = vpop.f32.mrb[0].mxu0
    %v562 = vadd.f32 0.0, %v561
    %v563 = vpop.f32.mrb[0].mxu0
    %v564 = vadd.f32 0.0, %v563
    %565 = vmatprep.mubr.bf16.mxu0 0
    %566 = vmatmul.mubr.bf16.gmra.mrb[0].mxu0 %v344
    %v567 = vpop.f32.mrb[0].mxu0
    %v568 = vadd.f32 0.0, %v567
    %v569 = vpop.f32.mrb[0].mxu0
    %v570 = vadd.f32 0.0, %v569
    %v571 = vpop.f32.mrb[0].mxu0
    %v572 = vadd.f32 0.0, %v571
    %v573 = vpop.f32.mrb[0].mxu0
    %v574 = vadd.f32 0.0, %v573
    %575 = vmatprep.mubr.bf16.mxu0 0
    %576 = vmatmul.mubr.bf16.gmra.mrb[0].mxu0 %v347
    %v577 = vpop.f32.mrb[0].mxu0
    %v578 = vadd.f32 0.0, %v577
    %v579 = vpop.f32.mrb[0].mxu0
    %v580 = vadd.f32 0.0, %v579
    %v581 = vpop.f32.mrb[0].mxu0
    %v582 = vadd.f32 0.0, %v581
    %v583 = vpop.f32.mrb[0].mxu0
    %v584 = vadd.f32 0.0, %v583
    %585 = vmatprep.mubr.bf16.mxu0 0
    %586 = vmatmul.mubr.bf16.gmra.mrb[0].mxu0 %v350
    %v587 = vpop.f32.mrb[0].mxu0
    %v588 = vadd.f32 0.0, %v587
    %v589 = vpop.f32.mrb[0].mxu0
    %v590 = vadd.f32 0.0, %v589
    %v591 = vpop.f32.mrb[0].mxu0
    %v592 = vadd.f32 0.0, %v591
    %v593 = vpop.f32.mrb[0].mxu0
    %v594 = vadd.f32 0.0, %v593
    %595 = vmatprep.mubr.bf16.mxu0 0
    %596 = vmatmul.mubr.bf16.gmra.mrb[0].mxu0 %v353
    %v597 = vpop.f32.mrb[0].mxu0
    %v598 = vadd.f32 0.0, %v597
    %v599 = vpop.f32.mrb[0].mxu0
    %v600 = vadd.f32 0.0, %v599
    %v601 = vpop.f32.mrb[0].mxu0
    %v602 = vadd.f32 0.0, %v601
    %v603 = vpop.f32.mrb[0].mxu0
    %v604 = vadd.f32 0.0, %v603
    %605 = vmatprep.mubr.bf16.mxu0 0
    %606 = vmatmul.mubr.bf16.gmra.mrb[0].mxu0 %v356
    %v607 = vpop.f32.mrb[0].mxu0
    %v608 = vadd.f32 0.0, %v607
    %v609 = vpop.f32.mrb[0].mxu0
    %v610 = vadd.f32 0.0, %v609
    %v611 = vpop.f32.mrb[0].mxu0
    %v612 = vadd.f32 0.0, %v611
    %v613 = vpop.f32.mrb[0].mxu0
    %v614 = vadd.f32 0.0, %v613
    %615 = vmatprep.mubr.bf16.mxu0 0
    %616 = vmatmul.mubr.bf16.gmra.mrb[0].mxu0 %v359
    %v617 = vpop.f32.mrb[0].mxu0
    %v618 = vadd.f32 0.0, %v617
    %v619 = vpop.f32.mrb[0].mxu0
    %v620 = vadd.f32 0.0, %v619
    %v621 = vpop.f32.mrb[0].mxu0
    %v622 = vadd.f32 0.0, %v621
    %v623 = vpop.f32.mrb[0].mxu0
    %v624 = vadd.f32 0.0, %v623
    %625 = vmatprep.mubr.bf16.mxu0 0
    %626 = vmatmul.mubr.bf16.gmra.mrb[0].mxu0 %v362
    %v627 = vpop.f32.mrb[0].mxu0
    %v628 = vadd.f32 0.0, %v627
    %v629 = vpop.f32.mrb[0].mxu0
    %v630 = vadd.f32 0.0, %v629
    %v631 = vpop.f32.mrb[0].mxu0
    %v632 = vadd.f32 0.0, %v631
    %v633 = vpop.f32.mrb[0].mxu0
    %v634 = vadd.f32 0.0, %v633
    %635 = vmatprep.mubr.bf16.mxu0 0
    %636 = vmatmul.mubr.bf16.gmra.mrb[0].mxu0 %v365
    %v637 = vpop.f32.mrb[0].mxu0
    %v638 = vadd.f32 0.0, %v637
    %v639 = vpop.f32.mrb[0].mxu0
    %v640 = vadd.f32 0.0, %v639
    %v641 = vpop.f32.mrb[0].mxu0
    %v642 = vadd.f32 0.0, %v641
    %v643 = vpop.f32.mrb[0].mxu0
    %v644 = vadd.f32 0.0, %v643
    %645 = vmatprep.mubr.bf16.mxu0 0
    %646 = vmatmul.mubr.bf16.gmra.mrb[0].mxu0 %v368
    %v647 = vpop.f32.mrb[0].mxu0
    %v648 = vadd.f32 0.0, %v647
    %v649 = vpop.f32.mrb[0].mxu0
    %v650 = vadd.f32 0.0, %v649
    %v651 = vpop.f32.mrb[0].mxu0
    %v652 = vadd.f32 0.0, %v651
    %v653 = vpop.f32.mrb[0].mxu0
    %v654 = vadd.f32 0.0, %v653
    %655 = vdwg.mxu0
    %656 = vmatprep.subr.bf16.mxu0 %v381
    %657 = vmatpush1.bf16.msra.mxu0 %v378
    %658 = vmatprep.subr.bf16.mxu0 0
    %659 = vmatpush1.bf16.msra.mxu0 0
    %660 = vmatprep.subr.bf16.mxu0 0
    %661 = vmatpush1.bf16.msra.mxu0 0
    %662 = vmatprep.subr.bf16.mxu0 0
    %663 = vmatpush1.bf16.msra.mxu0 0
    %664 = vmatprep.subr.bf16.mxu0 0
    %665 = vmatpush1.bf16.msra.mxu0 0
    %666 = vmatprep.subr.bf16.mxu0 0
    %667 = vmatpush1.bf16.msra.mxu0 0
    %668 = vmatprep.subr.bf16.mxu0 0
    %669 = vmatpush1.bf16.msra.mxu0 0
    %670 = vmatprep.subr.bf16.mxu0 0
    %671 = vmatpush1.bf16.msra.mxu0 0
    %672 = vmatprep.subr.bf16.mxu0 0
    %673 = vmatpush1.bf16.msra.mxu0 0
    %674 = vmatprep.subr.bf16.mxu0 0
    %675 = vmatpush1.bf16.msra.mxu0 0
    %676 = vmatprep.subr.bf16.mxu0 0
    %677 = vmatpush1.bf16.msra.mxu0 0
    %678 = vmatprep.subr.bf16.mxu0 0
    %679 = vmatpush1.bf16.msra.mxu0 0
    %680 = vmatprep.subr.bf16.mxu0 0
    %681 = vmatpush1.bf16.msra.mxu0 0
    %682 = vmatprep.subr.bf16.mxu0 0
    %683 = vmatpush1.bf16.msra.mxu0 0
    %684 = vmatprep.subr.bf16.mxu0 0
    %685 = vmatpush1.bf16.msra.mxu0 0
    %686 = vmatprep.subr.bf16.mxu0 0
    %687 = vmatpush1.bf16.msra.mxu0 0
    %688 = vmatprep.mubr.bf16.mxu0 0
    %689 = vmatmul.mubr.bf16.gmra.mrb[0].mxu0 %v299
    %v690 = vpop.f32.mrb[0].mxu0
    %v691 = vadd.f32 0.0, %v690
    %v692 = vpop.f32.mrb[0].mxu0
    %v693 = vadd.f32 0.0, %v692
    %v694 = vpop.f32.mrb[0].mxu0
    %v695 = vadd.f32 0.0, %v694
    %v696 = vpop.f32.mrb[0].mxu0
    %v697 = vadd.f32 0.0, %v696
    %698 = vmatprep.mubr.bf16.mxu0 0
    %699 = vmatmul.mubr.bf16.gmra.mrb[0].mxu0 %v302
    %v700 = vpop.f32.mrb[0].mxu0
    %v701 = vadd.f32 0.0, %v700
    %v702 = vpop.f32.mrb[0].mxu0
    %v703 = vadd.f32 0.0, %v702
    %v704 = vpop.f32.mrb[0].mxu0
    %v705 = vadd.f32 0.0, %v704
    %v706 = vpop.f32.mrb[0].mxu0
    %v707 = vadd.f32 0.0, %v706
    %708 = vmatprep.mubr.bf16.mxu0 0
    %709 = vmatmul.mubr.bf16.gmra.mrb[0].mxu0 %v305
    %v710 = vpop.f32.mrb[0].mxu0
    %v711 = vadd.f32 0.0, %v710
    %v712 = vpop.f32.mrb[0].mxu0
    %v713 = vadd.f32 0.0, %v712
    %v714 = vpop.f32.mrb[0].mxu0
    %v715 = vadd.f32 0.0, %v714
    %v716 = vpop.f32.mrb[0].mxu0
    %v717 = vadd.f32 0.0, %v716
    %718 = vmatprep.mubr.bf16.mxu0 0
    %719 = vmatmul.mubr.bf16.gmra.mrb[0].mxu0 %v308
    %v720 = vpop.f32.mrb[0].mxu0
    %v721 = vadd.f32 0.0, %v720
    %v722 = vpop.f32.mrb[0].mxu0
    %v723 = vadd.f32 0.0, %v722
    %v724 = vpop.f32.mrb[0].mxu0
    %v725 = vadd.f32 0.0, %v724
    %v726 = vpop.f32.mrb[0].mxu0
    %v727 = vadd.f32 0.0, %v726
    %728 = vmatprep.mubr.bf16.mxu0 0
    %729 = vmatmul.mubr.bf16.gmra.mrb[0].mxu0 %v311
    %v730 = vpop.f32.mrb[0].mxu0
    %v731 = vadd.f32 0.0, %v730
    %v732 = vpop.f32.mrb[0].mxu0
    %v733 = vadd.f32 0.0, %v732
    %v734 = vpop.f32.mrb[0].mxu0
    %v735 = vadd.f32 0.0, %v734
    %v736 = vpop.f32.mrb[0].mxu0
    %v737 = vadd.f32 0.0, %v736
    %738 = vmatprep.mubr.bf16.mxu0 0
    %739 = vmatmul.mubr.bf16.gmra.mrb[0].mxu0 %v314
    %v740 = vpop.f32.mrb[0].mxu0
    %v741 = vadd.f32 0.0, %v740
    %v742 = vpop.f32.mrb[0].mxu0
    %v743 = vadd.f32 0.0, %v742
    %v744 = vpop.f32.mrb[0].mxu0
    %v745 = vadd.f32 0.0, %v744
    %v746 = vpop.f32.mrb[0].mxu0
    %v747 = vadd.f32 0.0, %v746
    %748 = vmatprep.mubr.bf16.mxu0 0
    %749 = vmatmul.mubr.bf16.gmra.mrb[0].mxu0 %v317
    %v750 = vpop.f32.mrb[0].mxu0
    %v751 = vadd.f32 0.0, %v750
    %v752 = vpop.f32.mrb[0].mxu0
    %v753 = vadd.f32 0.0, %v752
    %v754 = vpop.f32.mrb[0].mxu0
    %v755 = vadd.f32 0.0, %v754
    %v756 = vpop.f32.mrb[0].mxu0
    %v757 = vadd.f32 0.0, %v756
    %758 = vmatprep.mubr.bf16.mxu0 0
    %759 = vmatmul.mubr.bf16.gmra.mrb[0].mxu0 %v320
    %v760 = vpop.f32.mrb[0].mxu0
    %v761 = vadd.f32 0.0, %v760
    %v762 = vpop.f32.mrb[0].mxu0
    %v763 = vadd.f32 0.0, %v762
    %v764 = vpop.f32.mrb[0].mxu0
    %v765 = vadd.f32 0.0, %v764
    %v766 = vpop.f32.mrb[0].mxu0
    %v767 = vadd.f32 0.0, %v766
    %768 = vmatprep.mubr.bf16.mxu0 0
    %769 = vmatmul.mubr.bf16.gmra.mrb[0].mxu0 %v323
    %v770 = vpop.f32.mrb[0].mxu0
    %v771 = vadd.f32 0.0, %v770
    %v772 = vpop.f32.mrb[0].mxu0
    %v773 = vadd.f32 0.0, %v772
    %v774 = vpop.f32.mrb[0].mxu0
    %v775 = vadd.f32 0.0, %v774
    %v776 = vpop.f32.mrb[0].mxu0
    %v777 = vadd.f32 0.0, %v776
    %778 = vmatprep.mubr.bf16.mxu0 0
    %779 = vmatmul.mubr.bf16.gmra.mrb[0].mxu0 %v326
    %v780 = vpop.f32.mrb[0].mxu0
    %v781 = vadd.f32 0.0, %v780
    %v782 = vpop.f32.mrb[0].mxu0
    %v783 = vadd.f32 0.0, %v782
    %v784 = vpop.f32.mrb[0].mxu0
    %v785 = vadd.f32 0.0, %v784
    %v786 = vpop.f32.mrb[0].mxu0
    %v787 = vadd.f32 0.0, %v786
    %788 = vmatprep.mubr.bf16.mxu0 0
    %789 = vmatmul.mubr.bf16.gmra.mrb[0].mxu0 %v329
    %v790 = vpop.f32.mrb[0].mxu0
    %v791 = vadd.f32 0.0, %v790
    %v792 = vpop.f32.mrb[0].mxu0
    %v793 = vadd.f32 0.0, %v792
    %v794 = vpop.f32.mrb[0].mxu0
    %v795 = vadd.f32 0.0, %v794
    %v796 = vpop.f32.mrb[0].mxu0
    %v797 = vadd.f32 0.0, %v796
    %798 = vmatprep.mubr.bf16.mxu0 0
    %799 = vmatmul.mubr.bf16.gmra.mrb[0].mxu0 %v332
    %v800 = vpop.f32.mrb[0].mxu0
    %v801 = vadd.f32 0.0, %v800
    %v802 = vpop.f32.mrb[0].mxu0
    %v803 = vadd.f32 0.0, %v802
    %v804 = vpop.f32.mrb[0].mxu0
    %v805 = vadd.f32 0.0, %v804
    %v806 = vpop.f32.mrb[0].mxu0
    %v807 = vadd.f32 0.0, %v806
    %808 = vmatprep.mubr.bf16.mxu0 0
    %809 = vmatmul.mubr.bf16.gmra.mrb[0].mxu0 %v335
    %v810 = vpop.f32.mrb[0].mxu0
    %v811 = vadd.f32 0.0, %v810
    %v812 = vpop.f32.mrb[0].mxu0
    %v813 = vadd.f32 0.0, %v812
    %v814 = vpop.f32.mrb[0].mxu0
    %v815 = vadd.f32 0.0, %v814
    %v816 = vpop.f32.mrb[0].mxu0
    %v817 = vadd.f32 0.0, %v816
    %818 = vmatprep.mubr.bf16.mxu0 0
    %819 = vmatmul.mubr.bf16.gmra.mrb[0].mxu0 %v338
    %v820 = vpop.f32.mrb[0].mxu0
    %v821 = vadd.f32 0.0, %v820
    %v822 = vpop.f32.mrb[0].mxu0
    %v823 = vadd.f32 0.0, %v822
    %v824 = vpop.f32.mrb[0].mxu0
    %v825 = vadd.f32 0.0, %v824
    %v826 = vpop.f32.mrb[0].mxu0
    %v827 = vadd.f32 0.0, %v826
    %828 = vmatprep.mubr.bf16.mxu0 0
    %829 = vmatmul.mubr.bf16.gmra.mrb[0].mxu0 %v341
    %v830 = vpop.f32.mrb[0].mxu0
    %v831 = vadd.f32 0.0, %v830
    %v832 = vpop.f32.mrb[0].mxu0
    %v833 = vadd.f32 0.0, %v832
    %v834 = vpop.f32.mrb[0].mxu0
    %v835 = vadd.f32 0.0, %v834
    %v836 = vpop.f32.mrb[0].mxu0
    %v837 = vadd.f32 0.0, %v836
    %838 = vmatprep.mubr.bf16.mxu0 0
    %839 = vmatmul.mubr.bf16.gmra.mrb[0].mxu0 %v344
    %v840 = vpop.f32.mrb[0].mxu0
    %v841 = vadd.f32 0.0, %v840
    %v842 = vpop.f32.mrb[0].mxu0
    %v843 = vadd.f32 0.0, %v842
    %v844 = vpop.f32.mrb[0].mxu0
    %v845 = vadd.f32 0.0, %v844
    %v846 = vpop.f32.mrb[0].mxu0
    %v847 = vadd.f32 0.0, %v846
    %848 = vmatprep.mubr.bf16.mxu0 0
    %849 = vmatmul.mubr.bf16.gmra.mrb[0].mxu0 %v347
    %v850 = vpop.f32.mrb[0].mxu0
    %v851 = vadd.f32 0.0, %v850
    %v852 = vpop.f32.mrb[0].mxu0
    %v853 = vadd.f32 0.0, %v852
    %v854 = vpop.f32.mrb[0].mxu0
    %v855 = vadd.f32 0.0, %v854
    %v856 = vpop.f32.mrb[0].mxu0
    %v857 = vadd.f32 0.0, %v856
    %858 = vmatprep.mubr.bf16.mxu0 0
    %859 = vmatmul.mubr.bf16.gmra.mrb[0].mxu0 %v350
    %v860 = vpop.f32.mrb[0].mxu0
    %v861 = vadd.f32 0.0, %v860
    %v862 = vpop.f32.mrb[0].mxu0
    %v863 = vadd.f32 0.0, %v862
    %v864 = vpop.f32.mrb[0].mxu0
    %v865 = vadd.f32 0.0, %v864
    %v866 = vpop.f32.mrb[0].mxu0
    %v867 = vadd.f32 0.0, %v866
    %868 = vmatprep.mubr.bf16.mxu0 0
    %869 = vmatmul.mubr.bf16.gmra.mrb[0].mxu0 %v353
    %v870 = vpop.f32.mrb[0].mxu0
    %v871 = vadd.f32 0.0, %v870
    %v872 = vpop.f32.mrb[0].mxu0
    %v873 = vadd.f32 0.0, %v872
    %v874 = vpop.f32.mrb[0].mxu0
    %v875 = vadd.f32 0.0, %v874
    %v876 = vpop.f32.mrb[0].mxu0
    %v877 = vadd.f32 0.0, %v876
    %878 = vmatprep.mubr.bf16.mxu0 0
    %879 = vmatmul.mubr.bf16.gmra.mrb[0].mxu0 %v356
    %v880 = vpop.f32.mrb[0].mxu0
    %v881 = vadd.f32 0.0, %v880
    %v882 = vpop.f32.mrb[0].mxu0
    %v883 = vadd.f32 0.0, %v882
    %v884 = vpop.f32.mrb[0].mxu0
    %v885 = vadd.f32 0.0, %v884
    %v886 = vpop.f32.mrb[0].mxu0
    %v887 = vadd.f32 0.0, %v886
    %888 = vmatprep.mubr.bf16.mxu0 0
    %889 = vmatmul.mubr.bf16.gmra.mrb[0].mxu0 %v359
    %v890 = vpop.f32.mrb[0].mxu0
    %v891 = vadd.f32 0.0, %v890
    %v892 = vpop.f32.mrb[0].mxu0
    %v893 = vadd.f32 0.0, %v892
    %v894 = vpop.f32.mrb[0].mxu0
    %v895 = vadd.f32 0.0, %v894
    %v896 = vpop.f32.mrb[0].mxu0
    %v897 = vadd.f32 0.0, %v896
    %898 = vmatprep.mubr.bf16.mxu0 0
    %899 = vmatmul.mubr.bf16.gmra.mrb[0].mxu0 %v362
    %v900 = vpop.f32.mrb[0].mxu0
    %v901 = vadd.f32 0.0, %v900
    %v902 = vpop.f32.mrb[0].mxu0
    %v903 = vadd.f32 0.0, %v902
    %v904 = vpop.f32.mrb[0].mxu0
    %v905 = vadd.f32 0.0, %v904
    %v906 = vpop.f32.mrb[0].mxu0
    %v907 = vadd.f32 0.0, %v906
    %908 = vmatprep.mubr.bf16.mxu0 0
    %909 = vmatmul.mubr.bf16.gmra.mrb[0].mxu0 %v365
    %v910 = vpop.f32.mrb[0].mxu0
    %v911 = vadd.f32 0.0, %v910
    %v912 = vpop.f32.mrb[0].mxu0
    %v913 = vadd.f32 0.0, %v912
    %v914 = vpop.f32.mrb[0].mxu0
    %v915 = vadd.f32 0.0, %v914
    %v916 = vpop.f32.mrb[0].mxu0
    %v917 = vadd.f32 0.0, %v916
    %918 = vmatprep.mubr.bf16.mxu0 0
    %919 = vmatmul.mubr.bf16.gmra.mrb[0].mxu0 %v368
    %v920 = vpop.f32.mrb[0].mxu0
    %v921 = vadd.f32 0.0, %v920
    %v922 = vpop.f32.mrb[0].mxu0
    %v923 = vadd.f32 0.0, %v922
    %v924 = vpop.f32.mrb[0].mxu0
    %v925 = vadd.f32 0.0, %v924
    %v926 = vpop.f32.mrb[0].mxu0
    %v927 = vadd.f32 0.0, %v926
    %928 = vdwg.mxu0
    %v977 = vunpack.c.l.b16 %v63
    %v978 = vunpack.c.l.b16 %v64
    %v979 = vunpack.c.l.b16 %v65
    %v980 = vunpack.c.l.b16 %v66
    %v981 = vunpack.c.l.b16 %v67
    %v982 = vunpack.c.l.b16 %v68
    %v983 = vunpack.c.l.b16 %v69
    %v984 = vunpack.c.l.b16 %v70
    %v985 = vunpack.c.l.b16 %v71
    %v986 = vunpack.c.l.b16 %v72
    %v987 = vunpack.c.l.b16 %v73
    %v988 = vunpack.c.l.b16 %v74
    %v989 = vunpack.c.l.b16 %v75
    %v990 = vunpack.c.l.b16 %v76
    %v991 = vunpack.c.l.b16 %v77
    %v992 = vunpack.c.l.b16 %v78
    %v993 = vunpack.c.l.b16 %v79
    %v994 = vunpack.c.l.b16 %v80
    %v995 = vunpack.c.l.b16 %v81
    %v996 = vunpack.c.l.b16 %v82
    %v997 = vunpack.c.l.b16 %v83
    %v998 = vunpack.c.l.b16 %v84
    %v999 = vunpack.c.l.b16 %v85
    %v1000 = vunpack.c.l.b16 %v86
    %v1001 = vunpack.c.l.b16 %v87
    %v1002 = vunpack.c.l.b16 %v88
    %v1003 = vunpack.c.l.b16 %v89
    %v1004 = vunpack.c.l.b16 %v90
    %v1005 = vunpack.c.l.b16 %v91
    %v1006 = vunpack.c.l.b16 %v92
    %v1007 = vunpack.c.l.b16 %v93
    %v1008 = vunpack.c.l.b16 %v94
    %v1009 = vunpack.c.l.b16 %v95
    %v1010 = vunpack.c.l.b16 %v96
    %v1011 = vunpack.c.l.b16 %v97
    %v1012 = vunpack.c.l.b16 %v98
    %v1013 = vunpack.c.l.b16 %v99
    %v1014 = vunpack.c.l.b16 %v100
    %v1015 = vunpack.c.l.b16 %v101
    %v1016 = vunpack.c.l.b16 %v102
    %v1017 = vunpack.c.l.b16 %v103
    %v1018 = vunpack.c.l.b16 %v104
    %v1019 = vunpack.c.l.b16 %v105
    %v1020 = vunpack.c.l.b16 %v106
    %v1021 = vunpack.c.l.b16 %v107
    %v1022 = vunpack.c.l.b16 %v108
    %v1023 = vunpack.c.l.b16 %v109
    %v1024 = vunpack.c.l.b16 %v110
    %v1025 = vpack.c.b16 %v978, %v977
    %v1026 = vpack.c.b16 %v980, %v979
    %v1027 = vpack.c.b16 %v982, %v981
    %v1028 = vpack.c.b16 %v984, %v983
    %v1029 = vpack.c.b16 %v986, %v985
    %v1030 = vpack.c.b16 %v988, %v987
    %v1031 = vpack.c.b16 %v990, %v989
    %v1032 = vpack.c.b16 %v992, %v991
    %v1033 = vpack.c.b16 %v994, %v993
    %v1034 = vpack.c.b16 %v996, %v995
    %v1035 = vpack.c.b16 %v998, %v997
    %v1036 = vpack.c.b16 %v1000, %v999
    %v1037 = vpack.c.b16 %v1002, %v1001
    %v1038 = vpack.c.b16 %v1004, %v1003
    %v1039 = vpack.c.b16 %v1006, %v1005
    %v1040 = vpack.c.b16 %v1008, %v1007
    %v1041 = vpack.c.b16 %v1010, %v1009
    %v1042 = vpack.c.b16 %v1012, %v1011
    %v1043 = vpack.c.b16 %v1014, %v1013
    %v1044 = vpack.c.b16 %v1016, %v1015
    %v1045 = vpack.c.b16 %v1018, %v1017
    %v1046 = vpack.c.b16 %v1020, %v1019
    %v1047 = vpack.c.b16 %v1022, %v1021
    %v1048 = vpack.c.b16 %v1024, %v1023
    %v1055 = vunpack.c.l.b16 %v111
    %v1056 = vunpack.c.h.b16 %v111
    %v1057 = vunpack.c.l.b16 %v112
    %v1058 = vunpack.c.h.b16 %v112
    %v1059 = vunpack.c.l.b16 %v113
    %v1060 = vunpack.c.h.b16 %v113
    %v1061 = vunpack.c.l.b16 %v114
    %v1062 = vunpack.c.h.b16 %v114
    %v1063 = vunpack.c.l.b16 %v115
    %v1064 = vunpack.c.h.b16 %v115
    %v1065 = vunpack.c.l.b16 %v116
    %v1066 = vunpack.c.h.b16 %v116
    %v1067 = vpack.c.b16 %v1059, %v1055
    %v1068 = vpack.c.b16 %v1060, %v1056
    %v1069 = vpack.c.b16 %v1061, %v1057
    %v1070 = vpack.c.b16 %v1062, %v1058
    %v1071 = vpack.c.b16 %v1063, %v1063
    %v1072 = vpack.c.b16 %v1064, %v1064
    %v1073 = vpack.c.b16 %v1065, %v1065
    %v1074 = vpack.c.b16 %v1066, %v1066
    %vm1079 = vcmask 138240
    %v1081 = vsel %vm1079, %v1025, 0
    %v1084 = vsel %vm1079, %v1026, 0
    %v1087 = vsel %vm1079, %v1027, 0
    %v1090 = vsel %vm1079, %v1028, 0
    %v1093 = vsel %vm1079, %v1029, 0
    %v1096 = vsel %vm1079, %v1030, 0
    %v1099 = vsel %vm1079, %v1031, 0
    %v1102 = vsel %vm1079, %v1032, 0
    %v1105 = vsel %vm1079, %v1033, 0
    %v1108 = vsel %vm1079, %v1034, 0
    %v1111 = vsel %vm1079, %v1035, 0
    %v1114 = vsel %vm1079, %v1036, 0
    %v1117 = vsel %vm1079, %v1037, 0
    %v1120 = vsel %vm1079, %v1038, 0
    %v1123 = vsel %vm1079, %v1039, 0
    %v1126 = vsel %vm1079, %v1040, 0
    %v1129 = vsel %vm1079, %v1041, 0
    %v1132 = vsel %vm1079, %v1042, 0
    %v1135 = vsel %vm1079, %v1043, 0
    %v1138 = vsel %vm1079, %v1044, 0
    %v1141 = vsel %vm1079, %v1045, 0
    %v1144 = vsel %vm1079, %v1046, 0
    %v1147 = vsel %vm1079, %v1047, 0
    %v1150 = vsel %vm1079, %v1048, 0
    %vm1152 = vcmask 1040384
    %v1153 = vsel 0, 4294967295, 65535
    %v1154 = vsel %vm1152, %v1153, 0
    %v1156 = vand.u32 %v1071, %v1154
    %v1159 = vand.u32 %v1072, %v1154
    %v1162 = vand.u32 %v1073, %v1154
    %v1165 = vand.u32 %v1074, %v1154
    %1167 = vmatprep.subr.bf16.mxu0 %v1068
    %1168 = vmatpush1.bf16.msra.mxu0 %v1067
    %1169 = vmatprep.subr.bf16.mxu0 %v1159
    %1170 = vmatpush1.bf16.msra.mxu0 %v1156
    %1171 = vmatprep.subr.bf16.mxu0 0
    %1172 = vmatpush1.bf16.msra.mxu0 0
    %1173 = vmatprep.subr.bf16.mxu0 0
    %1174 = vmatpush1.bf16.msra.mxu0 0
    %1175 = vmatprep.subr.bf16.mxu0 0
    %1176 = vmatpush1.bf16.msra.mxu0 0
    %1177 = vmatprep.subr.bf16.mxu0 0
    %1178 = vmatpush1.bf16.msra.mxu0 0
    %1179 = vmatprep.subr.bf16.mxu0 0
    %1180 = vmatpush1.bf16.msra.mxu0 0
    %1181 = vmatprep.subr.bf16.mxu0 0
    %1182 = vmatpush1.bf16.msra.mxu0 0
    %1183 = vmatprep.subr.bf16.mxu0 0
    %1184 = vmatpush1.bf16.msra.mxu0 0
    %1185 = vmatprep.subr.bf16.mxu0 0
    %1186 = vmatpush1.bf16.msra.mxu0 0
    %1187 = vmatprep.subr.bf16.mxu0 0
    %1188 = vmatpush1.bf16.msra.mxu0 0
    %1189 = vmatprep.subr.bf16.mxu0 0
    %1190 = vmatpush1.bf16.msra.mxu0 0
    %1191 = vmatprep.subr.bf16.mxu0 0
    %1192 = vmatpush1.bf16.msra.mxu0 0
    %1193 = vmatprep.subr.bf16.mxu0 0
    %1194 = vmatpush1.bf16.msra.mxu0 0
    %1195 = vmatprep.subr.bf16.mxu0 0
    %1196 = vmatpush1.bf16.msra.mxu0 0
    %1197 = vmatprep.subr.bf16.mxu0 0
    %1198 = vmatpush1.bf16.msra.mxu0 0
    %1199 = vmatprep.mubr.bf16.mxu0 0
    %1200 = vmatmul.mubr.bf16.gmra.mrb[0].mxu0 %v1081
    %v1201 = vpop.f32.mrb[0].mxu0
    %v1202 = vadd.f32 %v418, %v1201
    %v1203 = vpop.f32.mrb[0].mxu0
    %v1204 = vadd.f32 %v420, %v1203
    %v1205 = vpop.f32.mrb[0].mxu0
    %v1206 = vadd.f32 %v422, %v1205
    %v1207 = vpop.f32.mrb[0].mxu0
    %v1208 = vadd.f32 %v424, %v1207
    %1209 = vmatprep.mubr.bf16.mxu0 0
    %1210 = vmatmul.mubr.bf16.gmra.mrb[0].mxu0 %v1084
    %v1211 = vpop.f32.mrb[0].mxu0
    %v1212 = vadd.f32 %v428, %v1211
    %v1213 = vpop.f32.mrb[0].mxu0
    %v1214 = vadd.f32 %v430, %v1213
    %v1215 = vpop.f32.mrb[0].mxu0
    %v1216 = vadd.f32 %v432, %v1215
    %v1217 = vpop.f32.mrb[0].mxu0
    %v1218 = vadd.f32 %v434, %v1217
    %1219 = vmatprep.mubr.bf16.mxu0 0
    %1220 = vmatmul.mubr.bf16.gmra.mrb[0].mxu0 %v1087
    %v1221 = vpop.f32.mrb[0].mxu0
    %v1222 = vadd.f32 %v438, %v1221
    %v1223 = vpop.f32.mrb[0].mxu0
    %v1224 = vadd.f32 %v440, %v1223
    %v1225 = vpop.f32.mrb[0].mxu0
    %v1226 = vadd.f32 %v442, %v1225
    %v1227 = vpop.f32.mrb[0].mxu0
    %v1228 = vadd.f32 %v444, %v1227
    %1229 = vmatprep.mubr.bf16.mxu0 0
    %1230 = vmatmul.mubr.bf16.gmra.mrb[0].mxu0 %v1090
    %v1231 = vpop.f32.mrb[0].mxu0
    %v1232 = vadd.f32 %v448, %v1231
    %v1233 = vpop.f32.mrb[0].mxu0
    %v1234 = vadd.f32 %v450, %v1233
    %v1235 = vpop.f32.mrb[0].mxu0
    %v1236 = vadd.f32 %v452, %v1235
    %v1237 = vpop.f32.mrb[0].mxu0
    %v1238 = vadd.f32 %v454, %v1237
    %1239 = vmatprep.mubr.bf16.mxu0 0
    %1240 = vmatmul.mubr.bf16.gmra.mrb[0].mxu0 %v1093
    %v1241 = vpop.f32.mrb[0].mxu0
    %v1242 = vadd.f32 %v458, %v1241
    %v1243 = vpop.f32.mrb[0].mxu0
    %v1244 = vadd.f32 %v460, %v1243
    %v1245 = vpop.f32.mrb[0].mxu0
    %v1246 = vadd.f32 %v462, %v1245
    %v1247 = vpop.f32.mrb[0].mxu0
    %v1248 = vadd.f32 %v464, %v1247
    %1249 = vmatprep.mubr.bf16.mxu0 0
    %1250 = vmatmul.mubr.bf16.gmra.mrb[0].mxu0 %v1096
    %v1251 = vpop.f32.mrb[0].mxu0
    %v1252 = vadd.f32 %v468, %v1251
    %v1253 = vpop.f32.mrb[0].mxu0
    %v1254 = vadd.f32 %v470, %v1253
    %v1255 = vpop.f32.mrb[0].mxu0
    %v1256 = vadd.f32 %v472, %v1255
    %v1257 = vpop.f32.mrb[0].mxu0
    %v1258 = vadd.f32 %v474, %v1257
    %1259 = vmatprep.mubr.bf16.mxu0 0
    %1260 = vmatmul.mubr.bf16.gmra.mrb[0].mxu0 %v1099
    %v1261 = vpop.f32.mrb[0].mxu0
    %v1262 = vadd.f32 %v478, %v1261
    %v1263 = vpop.f32.mrb[0].mxu0
    %v1264 = vadd.f32 %v480, %v1263
    %v1265 = vpop.f32.mrb[0].mxu0
    %v1266 = vadd.f32 %v482, %v1265
    %v1267 = vpop.f32.mrb[0].mxu0
    %v1268 = vadd.f32 %v484, %v1267
    %1269 = vmatprep.mubr.bf16.mxu0 0
    %1270 = vmatmul.mubr.bf16.gmra.mrb[0].mxu0 %v1102
    %v1271 = vpop.f32.mrb[0].mxu0
    %v1272 = vadd.f32 %v488, %v1271
    %v1273 = vpop.f32.mrb[0].mxu0
    %v1274 = vadd.f32 %v490, %v1273
    %v1275 = vpop.f32.mrb[0].mxu0
    %v1276 = vadd.f32 %v492, %v1275
    %v1277 = vpop.f32.mrb[0].mxu0
    %v1278 = vadd.f32 %v494, %v1277
    %1279 = vmatprep.mubr.bf16.mxu0 0
    %1280 = vmatmul.mubr.bf16.gmra.mrb[0].mxu0 %v1105
    %v1281 = vpop.f32.mrb[0].mxu0
    %v1282 = vadd.f32 %v498, %v1281
    %v1283 = vpop.f32.mrb[0].mxu0
    %v1284 = vadd.f32 %v500, %v1283
    %v1285 = vpop.f32.mrb[0].mxu0
    %v1286 = vadd.f32 %v502, %v1285
    %v1287 = vpop.f32.mrb[0].mxu0
    %v1288 = vadd.f32 %v504, %v1287
    %1289 = vmatprep.mubr.bf16.mxu0 0
    %1290 = vmatmul.mubr.bf16.gmra.mrb[0].mxu0 %v1108
    %v1291 = vpop.f32.mrb[0].mxu0
    %v1292 = vadd.f32 %v508, %v1291
    %v1293 = vpop.f32.mrb[0].mxu0
    %v1294 = vadd.f32 %v510, %v1293
    %v1295 = vpop.f32.mrb[0].mxu0
    %v1296 = vadd.f32 %v512, %v1295
    %v1297 = vpop.f32.mrb[0].mxu0
    %v1298 = vadd.f32 %v514, %v1297
    %1299 = vmatprep.mubr.bf16.mxu0 0
    %1300 = vmatmul.mubr.bf16.gmra.mrb[0].mxu0 %v1111
    %v1301 = vpop.f32.mrb[0].mxu0
    %v1302 = vadd.f32 %v518, %v1301
    %v1303 = vpop.f32.mrb[0].mxu0
    %v1304 = vadd.f32 %v520, %v1303
    %v1305 = vpop.f32.mrb[0].mxu0
    %v1306 = vadd.f32 %v522, %v1305
    %v1307 = vpop.f32.mrb[0].mxu0
    %v1308 = vadd.f32 %v524, %v1307
    %1309 = vmatprep.mubr.bf16.mxu0 0
    %1310 = vmatmul.mubr.bf16.gmra.mrb[0].mxu0 %v1114
    %v1311 = vpop.f32.mrb[0].mxu0
    %v1312 = vadd.f32 %v528, %v1311
    %v1313 = vpop.f32.mrb[0].mxu0
    %v1314 = vadd.f32 %v530, %v1313
    %v1315 = vpop.f32.mrb[0].mxu0
    %v1316 = vadd.f32 %v532, %v1315
    %v1317 = vpop.f32.mrb[0].mxu0
    %v1318 = vadd.f32 %v534, %v1317
    %1319 = vmatprep.mubr.bf16.mxu0 0
    %1320 = vmatmul.mubr.bf16.gmra.mrb[0].mxu0 %v1117
    %v1321 = vpop.f32.mrb[0].mxu0
    %v1322 = vadd.f32 %v538, %v1321
    %v1323 = vpop.f32.mrb[0].mxu0
    %v1324 = vadd.f32 %v540, %v1323
    %v1325 = vpop.f32.mrb[0].mxu0
    %v1326 = vadd.f32 %v542, %v1325
    %v1327 = vpop.f32.mrb[0].mxu0
    %v1328 = vadd.f32 %v544, %v1327
    %1329 = vmatprep.mubr.bf16.mxu0 0
    %1330 = vmatmul.mubr.bf16.gmra.mrb[0].mxu0 %v1120
    %v1331 = vpop.f32.mrb[0].mxu0
    %v1332 = vadd.f32 %v548, %v1331
    %v1333 = vpop.f32.mrb[0].mxu0
    %v1334 = vadd.f32 %v550, %v1333
    %v1335 = vpop.f32.mrb[0].mxu0
    %v1336 = vadd.f32 %v552, %v1335
    %v1337 = vpop.f32.mrb[0].mxu0
    %v1338 = vadd.f32 %v554, %v1337
    %1339 = vmatprep.mubr.bf16.mxu0 0
    %1340 = vmatmul.mubr.bf16.gmra.mrb[0].mxu0 %v1123
    %v1341 = vpop.f32.mrb[0].mxu0
    %v1342 = vadd.f32 %v558, %v1341
    %v1343 = vpop.f32.mrb[0].mxu0
    %v1344 = vadd.f32 %v560, %v1343
    %v1345 = vpop.f32.mrb[0].mxu0
    %v1346 = vadd.f32 %v562, %v1345
    %v1347 = vpop.f32.mrb[0].mxu0
    %v1348 = vadd.f32 %v564, %v1347
    %1349 = vmatprep.mubr.bf16.mxu0 0
    %1350 = vmatmul.mubr.bf16.gmra.mrb[0].mxu0 %v1126
    %v1351 = vpop.f32.mrb[0].mxu0
    %v1352 = vadd.f32 %v568, %v1351
    %v1353 = vpop.f32.mrb[0].mxu0
    %v1354 = vadd.f32 %v570, %v1353
    %v1355 = vpop.f32.mrb[0].mxu0
    %v1356 = vadd.f32 %v572, %v1355
    %v1357 = vpop.f32.mrb[0].mxu0
    %v1358 = vadd.f32 %v574, %v1357
    %1359 = vmatprep.mubr.bf16.mxu0 0
    %1360 = vmatmul.mubr.bf16.gmra.mrb[0].mxu0 %v1129
    %v1361 = vpop.f32.mrb[0].mxu0
    %v1362 = vadd.f32 %v578, %v1361
    %v1363 = vpop.f32.mrb[0].mxu0
    %v1364 = vadd.f32 %v580, %v1363
    %v1365 = vpop.f32.mrb[0].mxu0
    %v1366 = vadd.f32 %v582, %v1365
    %v1367 = vpop.f32.mrb[0].mxu0
    %v1368 = vadd.f32 %v584, %v1367
    %1369 = vmatprep.mubr.bf16.mxu0 0
    %1370 = vmatmul.mubr.bf16.gmra.mrb[0].mxu0 %v1132
    %v1371 = vpop.f32.mrb[0].mxu0
    %v1372 = vadd.f32 %v588, %v1371
    %v1373 = vpop.f32.mrb[0].mxu0
    %v1374 = vadd.f32 %v590, %v1373
    %v1375 = vpop.f32.mrb[0].mxu0
    %v1376 = vadd.f32 %v592, %v1375
    %v1377 = vpop.f32.mrb[0].mxu0
    %v1378 = vadd.f32 %v594, %v1377
    %1379 = vmatprep.mubr.bf16.mxu0 0
    %1380 = vmatmul.mubr.bf16.gmra.mrb[0].mxu0 %v1135
    %v1381 = vpop.f32.mrb[0].mxu0
    %v1382 = vadd.f32 %v598, %v1381
    %v1383 = vpop.f32.mrb[0].mxu0
    %v1384 = vadd.f32 %v600, %v1383
    %v1385 = vpop.f32.mrb[0].mxu0
    %v1386 = vadd.f32 %v602, %v1385
    %v1387 = vpop.f32.mrb[0].mxu0
    %v1388 = vadd.f32 %v604, %v1387
    %1389 = vmatprep.mubr.bf16.mxu0 0
    %1390 = vmatmul.mubr.bf16.gmra.mrb[0].mxu0 %v1138
    %v1391 = vpop.f32.mrb[0].mxu0
    %v1392 = vadd.f32 %v608, %v1391
    %v1393 = vpop.f32.mrb[0].mxu0
    %v1394 = vadd.f32 %v610, %v1393
    %v1395 = vpop.f32.mrb[0].mxu0
    %v1396 = vadd.f32 %v612, %v1395
    %v1397 = vpop.f32.mrb[0].mxu0
    %v1398 = vadd.f32 %v614, %v1397
    %1399 = vmatprep.mubr.bf16.mxu0 0
    %1400 = vmatmul.mubr.bf16.gmra.mrb[0].mxu0 %v1141
    %v1401 = vpop.f32.mrb[0].mxu0
    %v1402 = vadd.f32 %v618, %v1401
    %v1403 = vpop.f32.mrb[0].mxu0
    %v1404 = vadd.f32 %v620, %v1403
    %v1405 = vpop.f32.mrb[0].mxu0
    %v1406 = vadd.f32 %v622, %v1405
    %v1407 = vpop.f32.mrb[0].mxu0
    %v1408 = vadd.f32 %v624, %v1407
    %1409 = vmatprep.mubr.bf16.mxu0 0
    %1410 = vmatmul.mubr.bf16.gmra.mrb[0].mxu0 %v1144
    %v1411 = vpop.f32.mrb[0].mxu0
    %v1412 = vadd.f32 %v628, %v1411
    %v1413 = vpop.f32.mrb[0].mxu0
    %v1414 = vadd.f32 %v630, %v1413
    %v1415 = vpop.f32.mrb[0].mxu0
    %v1416 = vadd.f32 %v632, %v1415
    %v1417 = vpop.f32.mrb[0].mxu0
    %v1418 = vadd.f32 %v634, %v1417
    %1419 = vmatprep.mubr.bf16.mxu0 0
    %1420 = vmatmul.mubr.bf16.gmra.mrb[0].mxu0 %v1147
    %v1421 = vpop.f32.mrb[0].mxu0
    %v1422 = vadd.f32 %v638, %v1421
    %v1423 = vpop.f32.mrb[0].mxu0
    %v1424 = vadd.f32 %v640, %v1423
    %v1425 = vpop.f32.mrb[0].mxu0
    %v1426 = vadd.f32 %v642, %v1425
    %v1427 = vpop.f32.mrb[0].mxu0
    %v1428 = vadd.f32 %v644, %v1427
    %1429 = vmatprep.mubr.bf16.mxu0 0
    %1430 = vmatmul.mubr.bf16.gmra.mrb[0].mxu0 %v1150
    %v1431 = vpop.f32.mrb[0].mxu0
    %v1432 = vadd.f32 %v648, %v1431
    %v1433 = vpop.f32.mrb[0].mxu0
    %v1434 = vadd.f32 %v650, %v1433
    %v1435 = vpop.f32.mrb[0].mxu0
    %v1436 = vadd.f32 %v652, %v1435
    %v1437 = vpop.f32.mrb[0].mxu0
    %v1438 = vadd.f32 %v654, %v1437
    %1439 = vdwg.mxu0
    %1440 = vmatprep.subr.bf16.mxu0 %v1070
    %1441 = vmatpush1.bf16.msra.mxu0 %v1069
    %1442 = vmatprep.subr.bf16.mxu0 %v1165
    %1443 = vmatpush1.bf16.msra.mxu0 %v1162
    %1444 = vmatprep.subr.bf16.mxu0 0
    %1445 = vmatpush1.bf16.msra.mxu0 0
    %1446 = vmatprep.subr.bf16.mxu0 0
    %1447 = vmatpush1.bf16.msra.mxu0 0
    %1448 = vmatprep.subr.bf16.mxu0 0
    %1449 = vmatpush1.bf16.msra.mxu0 0
    %1450 = vmatprep.subr.bf16.mxu0 0
    %1451 = vmatpush1.bf16.msra.mxu0 0
    %1452 = vmatprep.subr.bf16.mxu0 0
    %1453 = vmatpush1.bf16.msra.mxu0 0
    %1454 = vmatprep.subr.bf16.mxu0 0
    %1455 = vmatpush1.bf16.msra.mxu0 0
    %1456 = vmatprep.subr.bf16.mxu0 0
    %1457 = vmatpush1.bf16.msra.mxu0 0
    %1458 = vmatprep.subr.bf16.mxu0 0
    %1459 = vmatpush1.bf16.msra.mxu0 0
    %1460 = vmatprep.subr.bf16.mxu0 0
    %1461 = vmatpush1.bf16.msra.mxu0 0
    %1462 = vmatprep.subr.bf16.mxu0 0
    %1463 = vmatpush1.bf16.msra.mxu0 0
    %1464 = vmatprep.subr.bf16.mxu0 0
    %1465 = vmatpush1.bf16.msra.mxu0 0
    %1466 = vmatprep.subr.bf16.mxu0 0
    %1467 = vmatpush1.bf16.msra.mxu0 0
    %1468 = vmatprep.subr.bf16.mxu0 0
    %1469 = vmatpush1.bf16.msra.mxu0 0
    %1470 = vmatprep.subr.bf16.mxu0 0
    %1471 = vmatpush1.bf16.msra.mxu0 0
    %1472 = vmatprep.mubr.bf16.mxu0 0
    %1473 = vmatmul.mubr.bf16.gmra.mrb[0].mxu0 %v1081
    %v1474 = vpop.f32.mrb[0].mxu0
    %v1475 = vadd.f32 %v691, %v1474
    %v1476 = vpop.f32.mrb[0].mxu0
    %v1477 = vadd.f32 %v693, %v1476
    %v1478 = vpop.f32.mrb[0].mxu0
    %v1479 = vadd.f32 %v695, %v1478
    %v1480 = vpop.f32.mrb[0].mxu0
    %v1481 = vadd.f32 %v697, %v1480
    %1482 = vmatprep.mubr.bf16.mxu0 0
    %1483 = vmatmul.mubr.bf16.gmra.mrb[0].mxu0 %v1084
    %v1484 = vpop.f32.mrb[0].mxu0
    %v1485 = vadd.f32 %v701, %v1484
    %v1486 = vpop.f32.mrb[0].mxu0
    %v1487 = vadd.f32 %v703, %v1486
    %v1488 = vpop.f32.mrb[0].mxu0
    %v1489 = vadd.f32 %v705, %v1488
    %v1490 = vpop.f32.mrb[0].mxu0
    %v1491 = vadd.f32 %v707, %v1490
    %1492 = vmatprep.mubr.bf16.mxu0 0
    %1493 = vmatmul.mubr.bf16.gmra.mrb[0].mxu0 %v1087
    %v1494 = vpop.f32.mrb[0].mxu0
    %v1495 = vadd.f32 %v711, %v1494
    %v1496 = vpop.f32.mrb[0].mxu0
    %v1497 = vadd.f32 %v713, %v1496
    %v1498 = vpop.f32.mrb[0].mxu0
    %v1499 = vadd.f32 %v715, %v1498
    %v1500 = vpop.f32.mrb[0].mxu0
    %v1501 = vadd.f32 %v717, %v1500
    %1502 = vmatprep.mubr.bf16.mxu0 0
    %1503 = vmatmul.mubr.bf16.gmra.mrb[0].mxu0 %v1090
    %v1504 = vpop.f32.mrb[0].mxu0
    %v1505 = vadd.f32 %v721, %v1504
    %v1506 = vpop.f32.mrb[0].mxu0
    %v1507 = vadd.f32 %v723, %v1506
    %v1508 = vpop.f32.mrb[0].mxu0
    %v1509 = vadd.f32 %v725, %v1508
    %v1510 = vpop.f32.mrb[0].mxu0
    %v1511 = vadd.f32 %v727, %v1510
    %1512 = vmatprep.mubr.bf16.mxu0 0
    %1513 = vmatmul.mubr.bf16.gmra.mrb[0].mxu0 %v1093
    %v1514 = vpop.f32.mrb[0].mxu0
    %v1515 = vadd.f32 %v731, %v1514
    %v1516 = vpop.f32.mrb[0].mxu0
    %v1517 = vadd.f32 %v733, %v1516
    %v1518 = vpop.f32.mrb[0].mxu0
    %v1519 = vadd.f32 %v735, %v1518
    %v1520 = vpop.f32.mrb[0].mxu0
    %v1521 = vadd.f32 %v737, %v1520
    %1522 = vmatprep.mubr.bf16.mxu0 0
    %1523 = vmatmul.mubr.bf16.gmra.mrb[0].mxu0 %v1096
    %v1524 = vpop.f32.mrb[0].mxu0
    %v1525 = vadd.f32 %v741, %v1524
    %v1526 = vpop.f32.mrb[0].mxu0
    %v1527 = vadd.f32 %v743, %v1526
    %v1528 = vpop.f32.mrb[0].mxu0
    %v1529 = vadd.f32 %v745, %v1528
    %v1530 = vpop.f32.mrb[0].mxu0
    %v1531 = vadd.f32 %v747, %v1530
    %1532 = vmatprep.mubr.bf16.mxu0 0
    %1533 = vmatmul.mubr.bf16.gmra.mrb[0].mxu0 %v1099
    %v1534 = vpop.f32.mrb[0].mxu0
    %v1535 = vadd.f32 %v751, %v1534
    %v1536 = vpop.f32.mrb[0].mxu0
    %v1537 = vadd.f32 %v753, %v1536
    %v1538 = vpop.f32.mrb[0].mxu0
    %v1539 = vadd.f32 %v755, %v1538
    %v1540 = vpop.f32.mrb[0].mxu0
    %v1541 = vadd.f32 %v757, %v1540
    %1542 = vmatprep.mubr.bf16.mxu0 0
    %1543 = vmatmul.mubr.bf16.gmra.mrb[0].mxu0 %v1102
    %v1544 = vpop.f32.mrb[0].mxu0
    %v1545 = vadd.f32 %v761, %v1544
    %v1546 = vpop.f32.mrb[0].mxu0
    %v1547 = vadd.f32 %v763, %v1546
    %v1548 = vpop.f32.mrb[0].mxu0
    %v1549 = vadd.f32 %v765, %v1548
    %v1550 = vpop.f32.mrb[0].mxu0
    %v1551 = vadd.f32 %v767, %v1550
    %1552 = vmatprep.mubr.bf16.mxu0 0
    %1553 = vmatmul.mubr.bf16.gmra.mrb[0].mxu0 %v1105
    %v1554 = vpop.f32.mrb[0].mxu0
    %v1555 = vadd.f32 %v771, %v1554
    %v1556 = vpop.f32.mrb[0].mxu0
    %v1557 = vadd.f32 %v773, %v1556
    %v1558 = vpop.f32.mrb[0].mxu0
    %v1559 = vadd.f32 %v775, %v1558
    %v1560 = vpop.f32.mrb[0].mxu0
    %v1561 = vadd.f32 %v777, %v1560
    %1562 = vmatprep.mubr.bf16.mxu0 0
    %1563 = vmatmul.mubr.bf16.gmra.mrb[0].mxu0 %v1108
    %v1564 = vpop.f32.mrb[0].mxu0
    %v1565 = vadd.f32 %v781, %v1564
    %v1566 = vpop.f32.mrb[0].mxu0
    %v1567 = vadd.f32 %v783, %v1566
    %v1568 = vpop.f32.mrb[0].mxu0
    %v1569 = vadd.f32 %v785, %v1568
    %v1570 = vpop.f32.mrb[0].mxu0
    %v1571 = vadd.f32 %v787, %v1570
    %1572 = vmatprep.mubr.bf16.mxu0 0
    %1573 = vmatmul.mubr.bf16.gmra.mrb[0].mxu0 %v1111
    %v1574 = vpop.f32.mrb[0].mxu0
    %v1575 = vadd.f32 %v791, %v1574
    %v1576 = vpop.f32.mrb[0].mxu0
    %v1577 = vadd.f32 %v793, %v1576
    %v1578 = vpop.f32.mrb[0].mxu0
    %v1579 = vadd.f32 %v795, %v1578
    %v1580 = vpop.f32.mrb[0].mxu0
    %v1581 = vadd.f32 %v797, %v1580
    %1582 = vmatprep.mubr.bf16.mxu0 0
    %1583 = vmatmul.mubr.bf16.gmra.mrb[0].mxu0 %v1114
    %v1584 = vpop.f32.mrb[0].mxu0
    %v1585 = vadd.f32 %v801, %v1584
    %v1586 = vpop.f32.mrb[0].mxu0
    %v1587 = vadd.f32 %v803, %v1586
    %v1588 = vpop.f32.mrb[0].mxu0
    %v1589 = vadd.f32 %v805, %v1588
    %v1590 = vpop.f32.mrb[0].mxu0
    %v1591 = vadd.f32 %v807, %v1590
    %1592 = vmatprep.mubr.bf16.mxu0 0
    %1593 = vmatmul.mubr.bf16.gmra.mrb[0].mxu0 %v1117
    %v1594 = vpop.f32.mrb[0].mxu0
    %v1595 = vadd.f32 %v811, %v1594
    %v1596 = vpop.f32.mrb[0].mxu0
    %v1597 = vadd.f32 %v813, %v1596
    %v1598 = vpop.f32.mrb[0].mxu0
    %v1599 = vadd.f32 %v815, %v1598
    %v1600 = vpop.f32.mrb[0].mxu0
    %v1601 = vadd.f32 %v817, %v1600
    %1602 = vmatprep.mubr.bf16.mxu0 0
    %1603 = vmatmul.mubr.bf16.gmra.mrb[0].mxu0 %v1120
    %v1604 = vpop.f32.mrb[0].mxu0
    %v1605 = vadd.f32 %v821, %v1604
    %v1606 = vpop.f32.mrb[0].mxu0
    %v1607 = vadd.f32 %v823, %v1606
    %v1608 = vpop.f32.mrb[0].mxu0
    %v1609 = vadd.f32 %v825, %v1608
    %v1610 = vpop.f32.mrb[0].mxu0
    %v1611 = vadd.f32 %v827, %v1610
    %1612 = vmatprep.mubr.bf16.mxu0 0
    %1613 = vmatmul.mubr.bf16.gmra.mrb[0].mxu0 %v1123
    %v1614 = vpop.f32.mrb[0].mxu0
    %v1615 = vadd.f32 %v831, %v1614
    %v1616 = vpop.f32.mrb[0].mxu0
    %v1617 = vadd.f32 %v833, %v1616
    %v1618 = vpop.f32.mrb[0].mxu0
    %v1619 = vadd.f32 %v835, %v1618
    %v1620 = vpop.f32.mrb[0].mxu0
    %v1621 = vadd.f32 %v837, %v1620
    %1622 = vmatprep.mubr.bf16.mxu0 0
    %1623 = vmatmul.mubr.bf16.gmra.mrb[0].mxu0 %v1126
    %v1624 = vpop.f32.mrb[0].mxu0
    %v1625 = vadd.f32 %v841, %v1624
    %v1626 = vpop.f32.mrb[0].mxu0
    %v1627 = vadd.f32 %v843, %v1626
    %v1628 = vpop.f32.mrb[0].mxu0
    %v1629 = vadd.f32 %v845, %v1628
    %v1630 = vpop.f32.mrb[0].mxu0
    %v1631 = vadd.f32 %v847, %v1630
    %1632 = vmatprep.mubr.bf16.mxu0 0
    %1633 = vmatmul.mubr.bf16.gmra.mrb[0].mxu0 %v1129
    %v1634 = vpop.f32.mrb[0].mxu0
    %v1635 = vadd.f32 %v851, %v1634
    %v1636 = vpop.f32.mrb[0].mxu0
    %v1637 = vadd.f32 %v853, %v1636
    %v1638 = vpop.f32.mrb[0].mxu0
    %v1639 = vadd.f32 %v855, %v1638
    %v1640 = vpop.f32.mrb[0].mxu0
    %v1641 = vadd.f32 %v857, %v1640
    %1642 = vmatprep.mubr.bf16.mxu0 0
    %1643 = vmatmul.mubr.bf16.gmra.mrb[0].mxu0 %v1132
    %v1644 = vpop.f32.mrb[0].mxu0
    %v1645 = vadd.f32 %v861, %v1644
    %v1646 = vpop.f32.mrb[0].mxu0
    %v1647 = vadd.f32 %v863, %v1646
    %v1648 = vpop.f32.mrb[0].mxu0
    %v1649 = vadd.f32 %v865, %v1648
    %v1650 = vpop.f32.mrb[0].mxu0
    %v1651 = vadd.f32 %v867, %v1650
    %1652 = vmatprep.mubr.bf16.mxu0 0
    %1653 = vmatmul.mubr.bf16.gmra.mrb[0].mxu0 %v1135
    %v1654 = vpop.f32.mrb[0].mxu0
    %v1655 = vadd.f32 %v871, %v1654
    %v1656 = vpop.f32.mrb[0].mxu0
    %v1657 = vadd.f32 %v873, %v1656
    %v1658 = vpop.f32.mrb[0].mxu0
    %v1659 = vadd.f32 %v875, %v1658
    %v1660 = vpop.f32.mrb[0].mxu0
    %v1661 = vadd.f32 %v877, %v1660
    %1662 = vmatprep.mubr.bf16.mxu0 0
    %1663 = vmatmul.mubr.bf16.gmra.mrb[0].mxu0 %v1138
    %v1664 = vpop.f32.mrb[0].mxu0
    %v1665 = vadd.f32 %v881, %v1664
    %v1666 = vpop.f32.mrb[0].mxu0
    %v1667 = vadd.f32 %v883, %v1666
    %v1668 = vpop.f32.mrb[0].mxu0
    %v1669 = vadd.f32 %v885, %v1668
    %v1670 = vpop.f32.mrb[0].mxu0
    %v1671 = vadd.f32 %v887, %v1670
    %1672 = vmatprep.mubr.bf16.mxu0 0
    %1673 = vmatmul.mubr.bf16.gmra.mrb[0].mxu0 %v1141
    %v1674 = vpop.f32.mrb[0].mxu0
    %v1675 = vadd.f32 %v891, %v1674
    %v1676 = vpop.f32.mrb[0].mxu0
    %v1677 = vadd.f32 %v893, %v1676
    %v1678 = vpop.f32.mrb[0].mxu0
    %v1679 = vadd.f32 %v895, %v1678
    %v1680 = vpop.f32.mrb[0].mxu0
    %v1681 = vadd.f32 %v897, %v1680
    %1682 = vmatprep.mubr.bf16.mxu0 0
    %1683 = vmatmul.mubr.bf16.gmra.mrb[0].mxu0 %v1144
    %v1684 = vpop.f32.mrb[0].mxu0
    %v1685 = vadd.f32 %v901, %v1684
    %v1686 = vpop.f32.mrb[0].mxu0
    %v1687 = vadd.f32 %v903, %v1686
    %v1688 = vpop.f32.mrb[0].mxu0
    %v1689 = vadd.f32 %v905, %v1688
    %v1690 = vpop.f32.mrb[0].mxu0
    %v1691 = vadd.f32 %v907, %v1690
    %1692 = vmatprep.mubr.bf16.mxu0 0
    %1693 = vmatmul.mubr.bf16.gmra.mrb[0].mxu0 %v1147
    %v1694 = vpop.f32.mrb[0].mxu0
    %v1695 = vadd.f32 %v911, %v1694
    %v1696 = vpop.f32.mrb[0].mxu0
    %v1697 = vadd.f32 %v913, %v1696
    %v1698 = vpop.f32.mrb[0].mxu0
    %v1699 = vadd.f32 %v915, %v1698
    %v1700 = vpop.f32.mrb[0].mxu0
    %v1701 = vadd.f32 %v917, %v1700
    %1702 = vmatprep.mubr.bf16.mxu0 0
    %1703 = vmatmul.mubr.bf16.gmra.mrb[0].mxu0 %v1150
    %v1704 = vpop.f32.mrb[0].mxu0
    %v1705 = vadd.f32 %v921, %v1704
    %v1706 = vpop.f32.mrb[0].mxu0
    %v1707 = vadd.f32 %v923, %v1706
    %v1708 = vpop.f32.mrb[0].mxu0
    %v1709 = vadd.f32 %v925, %v1708
    %v1710 = vpop.f32.mrb[0].mxu0
    %v1711 = vadd.f32 %v927, %v1710
    %1712 = vdwg.mxu0
    %v1713 = vld [vmem:[%s4] sm:$0xf]
    %v1715 = vlaneseq
    %v1716 = vshrl.u32 %v1715, 7
    %v1717 = vsub.s32 0, %v1716
    %v1718 = vrot.slane %v1713, %v1717
    %v1719 = vlaneseq
    %v1720 = vshrl.u32 %v1719, 7
    %v1721 = vsub.s32 1, %v1720
    %v1722 = vrot.slane %v1713, %v1721
    %v1723 = vlaneseq
    %v1724 = vshrl.u32 %v1723, 7
    %v1725 = vsub.s32 2, %v1724
    %v1726 = vrot.slane %v1713, %v1725
    %v1727 = vlaneseq
    %v1728 = vshrl.u32 %v1727, 7
    %v1729 = vsub.s32 3, %v1728
    %v1730 = vrot.slane %v1713, %v1729
    %v1735 = vadd.f32 %v1202, %v1718
    %v1736 = vadd.f32 %v1204, %v1722
    %v1737 = vadd.f32 %v1475, %v1726
    %v1738 = vadd.f32 %v1477, %v1730
    %v1739 = vadd.f32 %v1206, %v1718
    %v1740 = vadd.f32 %v1208, %v1722
    %v1741 = vadd.f32 %v1479, %v1726
    %v1742 = vadd.f32 %v1481, %v1730
    %v1743 = vadd.f32 %v1212, %v1718
    %v1744 = vadd.f32 %v1214, %v1722
    %v1745 = vadd.f32 %v1485, %v1726
    %v1746 = vadd.f32 %v1487, %v1730
    %v1747 = vadd.f32 %v1216, %v1718
    %v1748 = vadd.f32 %v1218, %v1722
    %v1749 = vadd.f32 %v1489, %v1726
    %v1750 = vadd.f32 %v1491, %v1730
    %v1751 = vadd.f32 %v1222, %v1718
    %v1752 = vadd.f32 %v1224, %v1722
    %v1753 = vadd.f32 %v1495, %v1726
    %v1754 = vadd.f32 %v1497, %v1730
    %v1755 = vadd.f32 %v1226, %v1718
    %v1756 = vadd.f32 %v1228, %v1722
    %v1757 = vadd.f32 %v1499, %v1726
    %v1758 = vadd.f32 %v1501, %v1730
    %v1759 = vadd.f32 %v1232, %v1718
    %v1760 = vadd.f32 %v1234, %v1722
    %v1761 = vadd.f32 %v1505, %v1726
    %v1762 = vadd.f32 %v1507, %v1730
    %v1763 = vadd.f32 %v1236, %v1718
    %v1764 = vadd.f32 %v1238, %v1722
    %v1765 = vadd.f32 %v1509, %v1726
    %v1766 = vadd.f32 %v1511, %v1730
    %v1767 = vadd.f32 %v1242, %v1718
    %v1768 = vadd.f32 %v1244, %v1722
    %v1769 = vadd.f32 %v1515, %v1726
    %v1770 = vadd.f32 %v1517, %v1730
    %v1771 = vadd.f32 %v1246, %v1718
    %v1772 = vadd.f32 %v1248, %v1722
    %v1773 = vadd.f32 %v1519, %v1726
    %v1774 = vadd.f32 %v1521, %v1730
    %v1775 = vadd.f32 %v1252, %v1718
    %v1776 = vadd.f32 %v1254, %v1722
    %v1777 = vadd.f32 %v1525, %v1726
    %v1778 = vadd.f32 %v1527, %v1730
    %v1779 = vadd.f32 %v1256, %v1718
    %v1780 = vadd.f32 %v1258, %v1722
    %v1781 = vadd.f32 %v1529, %v1726
    %v1782 = vadd.f32 %v1531, %v1730
    %v1783 = vadd.f32 %v1262, %v1718
    %v1784 = vadd.f32 %v1264, %v1722
    %v1785 = vadd.f32 %v1535, %v1726
    %v1786 = vadd.f32 %v1537, %v1730
    %v1787 = vadd.f32 %v1266, %v1718
    %v1788 = vadd.f32 %v1268, %v1722
    %v1789 = vadd.f32 %v1539, %v1726
    %v1790 = vadd.f32 %v1541, %v1730
    %v1791 = vadd.f32 %v1272, %v1718
    %v1792 = vadd.f32 %v1274, %v1722
    %v1793 = vadd.f32 %v1545, %v1726
    %v1794 = vadd.f32 %v1547, %v1730
    %v1795 = vadd.f32 %v1276, %v1718
    %v1796 = vadd.f32 %v1278, %v1722
    %v1797 = vadd.f32 %v1549, %v1726
    %v1798 = vadd.f32 %v1551, %v1730
    %v1799 = vadd.f32 %v1282, %v1718
    %v1800 = vadd.f32 %v1284, %v1722
    %v1801 = vadd.f32 %v1555, %v1726
    %v1802 = vadd.f32 %v1557, %v1730
    %v1803 = vadd.f32 %v1286, %v1718
    %v1804 = vadd.f32 %v1288, %v1722
    %v1805 = vadd.f32 %v1559, %v1726
    %v1806 = vadd.f32 %v1561, %v1730
    %v1807 = vadd.f32 %v1292, %v1718
    %v1808 = vadd.f32 %v1294, %v1722
    %v1809 = vadd.f32 %v1565, %v1726
    %v1810 = vadd.f32 %v1567, %v1730
    %v1811 = vadd.f32 %v1296, %v1718
    %v1812 = vadd.f32 %v1298, %v1722
    %v1813 = vadd.f32 %v1569, %v1726
    %v1814 = vadd.f32 %v1571, %v1730
    %v1815 = vadd.f32 %v1302, %v1718
    %v1816 = vadd.f32 %v1304, %v1722
    %v1817 = vadd.f32 %v1575, %v1726
    %v1818 = vadd.f32 %v1577, %v1730
    %v1819 = vadd.f32 %v1306, %v1718
    %v1820 = vadd.f32 %v1308, %v1722
    %v1821 = vadd.f32 %v1579, %v1726
    %v1822 = vadd.f32 %v1581, %v1730
    %v1823 = vadd.f32 %v1312, %v1718
    %v1824 = vadd.f32 %v1314, %v1722
    %v1825 = vadd.f32 %v1585, %v1726
    %v1826 = vadd.f32 %v1587, %v1730
    %v1827 = vadd.f32 %v1316, %v1718
    %v1828 = vadd.f32 %v1318, %v1722
    %v1829 = vadd.f32 %v1589, %v1726
    %v1830 = vadd.f32 %v1591, %v1730
    %v1831 = vadd.f32 %v1322, %v1718
    %v1832 = vadd.f32 %v1324, %v1722
    %v1833 = vadd.f32 %v1595, %v1726
    %v1834 = vadd.f32 %v1597, %v1730
    %v1835 = vadd.f32 %v1326, %v1718
    %v1836 = vadd.f32 %v1328, %v1722
    %v1837 = vadd.f32 %v1599, %v1726
    %v1838 = vadd.f32 %v1601, %v1730
    %v1839 = vadd.f32 %v1332, %v1718
    %v1840 = vadd.f32 %v1334, %v1722
    %v1841 = vadd.f32 %v1605, %v1726
    %v1842 = vadd.f32 %v1607, %v1730
    %v1843 = vadd.f32 %v1336, %v1718
    %v1844 = vadd.f32 %v1338, %v1722
    %v1845 = vadd.f32 %v1609, %v1726
    %v1846 = vadd.f32 %v1611, %v1730
    %v1847 = vadd.f32 %v1342, %v1718
    %v1848 = vadd.f32 %v1344, %v1722
    %v1849 = vadd.f32 %v1615, %v1726
    %v1850 = vadd.f32 %v1617, %v1730
    %v1851 = vadd.f32 %v1346, %v1718
    %v1852 = vadd.f32 %v1348, %v1722
    %v1853 = vadd.f32 %v1619, %v1726
    %v1854 = vadd.f32 %v1621, %v1730
    %v1855 = vadd.f32 %v1352, %v1718
    %v1856 = vadd.f32 %v1354, %v1722
    %v1857 = vadd.f32 %v1625, %v1726
    %v1858 = vadd.f32 %v1627, %v1730
    %v1859 = vadd.f32 %v1356, %v1718
    %v1860 = vadd.f32 %v1358, %v1722
    %v1861 = vadd.f32 %v1629, %v1726
    %v1862 = vadd.f32 %v1631, %v1730
    %v1863 = vadd.f32 %v1362, %v1718
    %v1864 = vadd.f32 %v1364, %v1722
    %v1865 = vadd.f32 %v1635, %v1726
    %v1866 = vadd.f32 %v1637, %v1730
    %v1867 = vadd.f32 %v1366, %v1718
    %v1868 = vadd.f32 %v1368, %v1722
    %v1869 = vadd.f32 %v1639, %v1726
    %v1870 = vadd.f32 %v1641, %v1730
    %v1871 = vadd.f32 %v1372, %v1718
    %v1872 = vadd.f32 %v1374, %v1722
    %v1873 = vadd.f32 %v1645, %v1726
    %v1874 = vadd.f32 %v1647, %v1730
    %v1875 = vadd.f32 %v1376, %v1718
    %v1876 = vadd.f32 %v1378, %v1722
    %v1877 = vadd.f32 %v1649, %v1726
    %v1878 = vadd.f32 %v1651, %v1730
    %v1879 = vadd.f32 %v1382, %v1718
    %v1880 = vadd.f32 %v1384, %v1722
    %v1881 = vadd.f32 %v1655, %v1726
    %v1882 = vadd.f32 %v1657, %v1730
    %v1883 = vadd.f32 %v1386, %v1718
    %v1884 = vadd.f32 %v1388, %v1722
    %v1885 = vadd.f32 %v1659, %v1726
    %v1886 = vadd.f32 %v1661, %v1730
    %v1887 = vadd.f32 %v1392, %v1718
    %v1888 = vadd.f32 %v1394, %v1722
    %v1889 = vadd.f32 %v1665, %v1726
    %v1890 = vadd.f32 %v1667, %v1730
    %v1891 = vadd.f32 %v1396, %v1718
    %v1892 = vadd.f32 %v1398, %v1722
    %v1893 = vadd.f32 %v1669, %v1726
    %v1894 = vadd.f32 %v1671, %v1730
    %v1895 = vadd.f32 %v1402, %v1718
    %v1896 = vadd.f32 %v1404, %v1722
    %v1897 = vadd.f32 %v1675, %v1726
    %v1898 = vadd.f32 %v1677, %v1730
    %v1899 = vadd.f32 %v1406, %v1718
    %v1900 = vadd.f32 %v1408, %v1722
    %v1901 = vadd.f32 %v1679, %v1726
    %v1902 = vadd.f32 %v1681, %v1730
    %v1903 = vadd.f32 %v1412, %v1718
    %v1904 = vadd.f32 %v1414, %v1722
    %v1905 = vadd.f32 %v1685, %v1726
    %v1906 = vadd.f32 %v1687, %v1730
    %v1907 = vadd.f32 %v1416, %v1718
    %v1908 = vadd.f32 %v1418, %v1722
    %v1909 = vadd.f32 %v1689, %v1726
    %v1910 = vadd.f32 %v1691, %v1730
    %v1911 = vadd.f32 %v1422, %v1718
    %v1912 = vadd.f32 %v1424, %v1722
    %v1913 = vadd.f32 %v1695, %v1726
    %v1914 = vadd.f32 %v1697, %v1730
    %v1915 = vadd.f32 %v1426, %v1718
    %v1916 = vadd.f32 %v1428, %v1722
    %v1917 = vadd.f32 %v1699, %v1726
    %v1918 = vadd.f32 %v1701, %v1730
    %v1919 = vadd.f32 %v1432, %v1718
    %v1920 = vadd.f32 %v1434, %v1722
    %v1921 = vadd.f32 %v1705, %v1726
    %v1922 = vadd.f32 %v1707, %v1730
    %v1923 = vadd.f32 %v1436, %v1718
    %v1924 = vadd.f32 %v1438, %v1722
    %v1925 = vadd.f32 %v1709, %v1726
    %v1926 = vadd.f32 %v1711, %v1730
    %v1927 = vmax.f32 %v1735, 0.0
    %v1928 = vmax.f32 %v1736, 0.0
    %v1929 = vmax.f32 %v1737, 0.0
    %v1930 = vmax.f32 %v1738, 0.0
    %v1931 = vmax.f32 %v1739, 0.0
    %v1932 = vmax.f32 %v1740, 0.0
    %v1933 = vmax.f32 %v1741, 0.0
    %v1934 = vmax.f32 %v1742, 0.0
    %v1935 = vmax.f32 %v1743, 0.0
    %v1936 = vmax.f32 %v1744, 0.0
    %v1937 = vmax.f32 %v1745, 0.0
    %v1938 = vmax.f32 %v1746, 0.0
    %v1939 = vmax.f32 %v1747, 0.0
    %v1940 = vmax.f32 %v1748, 0.0
    %v1941 = vmax.f32 %v1749, 0.0
    %v1942 = vmax.f32 %v1750, 0.0
    %v1943 = vmax.f32 %v1751, 0.0
    %v1944 = vmax.f32 %v1752, 0.0
    %v1945 = vmax.f32 %v1753, 0.0
    %v1946 = vmax.f32 %v1754, 0.0
    %v1947 = vmax.f32 %v1755, 0.0
    %v1948 = vmax.f32 %v1756, 0.0
    %v1949 = vmax.f32 %v1757, 0.0
    %v1950 = vmax.f32 %v1758, 0.0
    %v1951 = vmax.f32 %v1759, 0.0
    %v1952 = vmax.f32 %v1760, 0.0
    %v1953 = vmax.f32 %v1761, 0.0
    %v1954 = vmax.f32 %v1762, 0.0
    %v1955 = vmax.f32 %v1763, 0.0
    %v1956 = vmax.f32 %v1764, 0.0
    %v1957 = vmax.f32 %v1765, 0.0
    %v1958 = vmax.f32 %v1766, 0.0
    %v1959 = vmax.f32 %v1767, 0.0
    %v1960 = vmax.f32 %v1768, 0.0
    %v1961 = vmax.f32 %v1769, 0.0
    %v1962 = vmax.f32 %v1770, 0.0
    %v1963 = vmax.f32 %v1771, 0.0
    %v1964 = vmax.f32 %v1772, 0.0
    %v1965 = vmax.f32 %v1773, 0.0
    %v1966 = vmax.f32 %v1774, 0.0
    %v1967 = vmax.f32 %v1775, 0.0
    %v1968 = vmax.f32 %v1776, 0.0
    %v1969 = vmax.f32 %v1777, 0.0
    %v1970 = vmax.f32 %v1778, 0.0
    %v1971 = vmax.f32 %v1779, 0.0
    %v1972 = vmax.f32 %v1780, 0.0
    %v1973 = vmax.f32 %v1781, 0.0
    %v1974 = vmax.f32 %v1782, 0.0
    %v1975 = vmax.f32 %v1783, 0.0
    %v1976 = vmax.f32 %v1784, 0.0
    %v1977 = vmax.f32 %v1785, 0.0
    %v1978 = vmax.f32 %v1786, 0.0
    %v1979 = vmax.f32 %v1787, 0.0
    %v1980 = vmax.f32 %v1788, 0.0
    %v1981 = vmax.f32 %v1789, 0.0
    %v1982 = vmax.f32 %v1790, 0.0
    %v1983 = vmax.f32 %v1791, 0.0
    %v1984 = vmax.f32 %v1792, 0.0
    %v1985 = vmax.f32 %v1793, 0.0
    %v1986 = vmax.f32 %v1794, 0.0
    %v1987 = vmax.f32 %v1795, 0.0
    %v1988 = vmax.f32 %v1796, 0.0
    %v1989 = vmax.f32 %v1797, 0.0
    %v1990 = vmax.f32 %v1798, 0.0
    %v1991 = vmax.f32 %v1799, 0.0
    %v1992 = vmax.f32 %v1800, 0.0
    %v1993 = vmax.f32 %v1801, 0.0
    %v1994 = vmax.f32 %v1802, 0.0
    %v1995 = vmax.f32 %v1803, 0.0
    %v1996 = vmax.f32 %v1804, 0.0
    %v1997 = vmax.f32 %v1805, 0.0
    %v1998 = vmax.f32 %v1806, 0.0
    %v1999 = vmax.f32 %v1807, 0.0
    %v2000 = vmax.f32 %v1808, 0.0
    %v2001 = vmax.f32 %v1809, 0.0
    %v2002 = vmax.f32 %v1810, 0.0
    %v2003 = vmax.f32 %v1811, 0.0
    %v2004 = vmax.f32 %v1812, 0.0
    %v2005 = vmax.f32 %v1813, 0.0
    %v2006 = vmax.f32 %v1814, 0.0
    %v2007 = vmax.f32 %v1815, 0.0
    %v2008 = vmax.f32 %v1816, 0.0
    %v2009 = vmax.f32 %v1817, 0.0
    %v2010 = vmax.f32 %v1818, 0.0
    %v2011 = vmax.f32 %v1819, 0.0
    %v2012 = vmax.f32 %v1820, 0.0
    %v2013 = vmax.f32 %v1821, 0.0
    %v2014 = vmax.f32 %v1822, 0.0
    %v2015 = vmax.f32 %v1823, 0.0
    %v2016 = vmax.f32 %v1824, 0.0
    %v2017 = vmax.f32 %v1825, 0.0
    %v2018 = vmax.f32 %v1826, 0.0
    %v2019 = vmax.f32 %v1827, 0.0
    %v2020 = vmax.f32 %v1828, 0.0
    %v2021 = vmax.f32 %v1829, 0.0
    %v2022 = vmax.f32 %v1830, 0.0
    %v2023 = vmax.f32 %v1831, 0.0
    %v2024 = vmax.f32 %v1832, 0.0
    %v2025 = vmax.f32 %v1833, 0.0
    %v2026 = vmax.f32 %v1834, 0.0
    %v2027 = vmax.f32 %v1835, 0.0
    %v2028 = vmax.f32 %v1836, 0.0
    %v2029 = vmax.f32 %v1837, 0.0
    %v2030 = vmax.f32 %v1838, 0.0
    %v2031 = vmax.f32 %v1839, 0.0
    %v2032 = vmax.f32 %v1840, 0.0
    %v2033 = vmax.f32 %v1841, 0.0
    %v2034 = vmax.f32 %v1842, 0.0
    %v2035 = vmax.f32 %v1843, 0.0
    %v2036 = vmax.f32 %v1844, 0.0
    %v2037 = vmax.f32 %v1845, 0.0
    %v2038 = vmax.f32 %v1846, 0.0
    %v2039 = vmax.f32 %v1847, 0.0
    %v2040 = vmax.f32 %v1848, 0.0
    %v2041 = vmax.f32 %v1849, 0.0
    %v2042 = vmax.f32 %v1850, 0.0
    %v2043 = vmax.f32 %v1851, 0.0
    %v2044 = vmax.f32 %v1852, 0.0
    %v2045 = vmax.f32 %v1853, 0.0
    %v2046 = vmax.f32 %v1854, 0.0
    %v2047 = vmax.f32 %v1855, 0.0
    %v2048 = vmax.f32 %v1856, 0.0
    %v2049 = vmax.f32 %v1857, 0.0
    %v2050 = vmax.f32 %v1858, 0.0
    %v2051 = vmax.f32 %v1859, 0.0
    %v2052 = vmax.f32 %v1860, 0.0
    %v2053 = vmax.f32 %v1861, 0.0
    %v2054 = vmax.f32 %v1862, 0.0
    %v2055 = vmax.f32 %v1863, 0.0
    %v2056 = vmax.f32 %v1864, 0.0
    %v2057 = vmax.f32 %v1865, 0.0
    %v2058 = vmax.f32 %v1866, 0.0
    %v2059 = vmax.f32 %v1867, 0.0
    %v2060 = vmax.f32 %v1868, 0.0
    %v2061 = vmax.f32 %v1869, 0.0
    %v2062 = vmax.f32 %v1870, 0.0
    %v2063 = vmax.f32 %v1871, 0.0
    %v2064 = vmax.f32 %v1872, 0.0
    %v2065 = vmax.f32 %v1873, 0.0
    %v2066 = vmax.f32 %v1874, 0.0
    %v2067 = vmax.f32 %v1875, 0.0
    %v2068 = vmax.f32 %v1876, 0.0
    %v2069 = vmax.f32 %v1877, 0.0
    %v2070 = vmax.f32 %v1878, 0.0
    %v2071 = vmax.f32 %v1879, 0.0
    %v2072 = vmax.f32 %v1880, 0.0
    %v2073 = vmax.f32 %v1881, 0.0
    %v2074 = vmax.f32 %v1882, 0.0
    %v2075 = vmax.f32 %v1883, 0.0
    %v2076 = vmax.f32 %v1884, 0.0
    %v2077 = vmax.f32 %v1885, 0.0
    %v2078 = vmax.f32 %v1886, 0.0
    %v2079 = vmax.f32 %v1887, 0.0
    %v2080 = vmax.f32 %v1888, 0.0
    %v2081 = vmax.f32 %v1889, 0.0
    %v2082 = vmax.f32 %v1890, 0.0
    %v2083 = vmax.f32 %v1891, 0.0
    %v2084 = vmax.f32 %v1892, 0.0
    %v2085 = vmax.f32 %v1893, 0.0
    %v2086 = vmax.f32 %v1894, 0.0
    %v2087 = vmax.f32 %v1895, 0.0
    %v2088 = vmax.f32 %v1896, 0.0
    %v2089 = vmax.f32 %v1897, 0.0
    %v2090 = vmax.f32 %v1898, 0.0
    %v2091 = vmax.f32 %v1899, 0.0
    %v2092 = vmax.f32 %v1900, 0.0
    %v2093 = vmax.f32 %v1901, 0.0
    %v2094 = vmax.f32 %v1902, 0.0
    %v2095 = vmax.f32 %v1903, 0.0
    %v2096 = vmax.f32 %v1904, 0.0
    %v2097 = vmax.f32 %v1905, 0.0
    %v2098 = vmax.f32 %v1906, 0.0
    %v2099 = vmax.f32 %v1907, 0.0
    %v2100 = vmax.f32 %v1908, 0.0
    %v2101 = vmax.f32 %v1909, 0.0
    %v2102 = vmax.f32 %v1910, 0.0
    %v2103 = vmax.f32 %v1911, 0.0
    %v2104 = vmax.f32 %v1912, 0.0
    %v2105 = vmax.f32 %v1913, 0.0
    %v2106 = vmax.f32 %v1914, 0.0
    %v2107 = vmax.f32 %v1915, 0.0
    %v2108 = vmax.f32 %v1916, 0.0
    %v2109 = vmax.f32 %v1917, 0.0
    %v2110 = vmax.f32 %v1918, 0.0
    %v2111 = vmax.f32 %v1919, 0.0
    %v2112 = vmax.f32 %v1920, 0.0
    %v2113 = vmax.f32 %v1921, 0.0
    %v2114 = vmax.f32 %v1922, 0.0
    %v2115 = vmax.f32 %v1923, 0.0
    %v2116 = vmax.f32 %v1924, 0.0
    %v2117 = vmax.f32 %v1925, 0.0
    %v2118 = vmax.f32 %v1926, 0.0
    %v2119 = vpack.c.bf16 %v1931, %v1927
    %v2120 = vpack.c.bf16 %v1932, %v1928
    %v2121 = vpack.c.bf16 %v1939, %v1935
    %v2122 = vpack.c.bf16 %v1940, %v1936
    %v2123 = vpack.c.bf16 %v1947, %v1943
    %v2124 = vpack.c.bf16 %v1948, %v1944
    %v2125 = vpack.c.bf16 %v1955, %v1951
    %v2126 = vpack.c.bf16 %v1956, %v1952
    %v2127 = vpack.c.bf16 %v1963, %v1959
    %v2128 = vpack.c.bf16 %v1964, %v1960
    %v2129 = vpack.c.bf16 %v1971, %v1967
    %v2130 = vpack.c.bf16 %v1972, %v1968
    %v2131 = vpack.c.bf16 %v1979, %v1975
    %v2132 = vpack.c.bf16 %v1980, %v1976
    %v2133 = vpack.c.bf16 %v1987, %v1983
    %v2134 = vpack.c.bf16 %v1988, %v1984
    %v2135 = vpack.c.bf16 %v1995, %v1991
    %v2136 = vpack.c.bf16 %v1996, %v1992
    %v2137 = vpack.c.bf16 %v2003, %v1999
    %v2138 = vpack.c.bf16 %v2004, %v2000
    %v2139 = vpack.c.bf16 %v2011, %v2007
    %v2140 = vpack.c.bf16 %v2012, %v2008
    %v2141 = vpack.c.bf16 %v2019, %v2015
    %v2142 = vpack.c.bf16 %v2020, %v2016
    %v2143 = vpack.c.bf16 %v2027, %v2023
    %v2144 = vpack.c.bf16 %v2028, %v2024
    %v2145 = vpack.c.bf16 %v2035, %v2031
    %v2146 = vpack.c.bf16 %v2036, %v2032
    %v2147 = vpack.c.bf16 %v2043, %v2039
    %v2148 = vpack.c.bf16 %v2044, %v2040
    %v2149 = vpack.c.bf16 %v2051, %v2047
    %v2150 = vpack.c.bf16 %v2052, %v2048
    %v2151 = vpack.c.bf16 %v2059, %v2055
    %v2152 = vpack.c.bf16 %v2060, %v2056
    %v2153 = vpack.c.bf16 %v2067, %v2063
    %v2154 = vpack.c.bf16 %v2068, %v2064
    %v2155 = vpack.c.bf16 %v2075, %v2071
    %v2156 = vpack.c.bf16 %v2076, %v2072
    %v2157 = vpack.c.bf16 %v2083, %v2079
    %v2158 = vpack.c.bf16 %v2084, %v2080
    %v2159 = vpack.c.bf16 %v2091, %v2087
    %v2160 = vpack.c.bf16 %v2092, %v2088
    %v2161 = vpack.c.bf16 %v2099, %v2095
    %v2162 = vpack.c.bf16 %v2100, %v2096
    %v2163 = vpack.c.bf16 %v2107, %v2103
    %v2164 = vpack.c.bf16 %v2108, %v2104
    %v2165 = vpack.c.bf16 %v2115, %v2111
    %v2166 = vpack.c.bf16 %v2116, %v2112
    %v2167 = vpack.c.bf16 %v1933, %v1929
    %v2168 = vpack.c.bf16 %v1934, %v1930
    %v2169 = vpack.c.bf16 %v1941, %v1937
    %v2170 = vpack.c.bf16 %v1942, %v1938
    %v2171 = vpack.c.bf16 %v1949, %v1945
    %v2172 = vpack.c.bf16 %v1950, %v1946
    %v2173 = vpack.c.bf16 %v1957, %v1953
    %v2174 = vpack.c.bf16 %v1958, %v1954
    %v2175 = vpack.c.bf16 %v1965, %v1961
    %v2176 = vpack.c.bf16 %v1966, %v1962
    %v2177 = vpack.c.bf16 %v1973, %v1969
    %v2178 = vpack.c.bf16 %v1974, %v1970
    %v2179 = vpack.c.bf16 %v1981, %v1977
    %v2180 = vpack.c.bf16 %v1982, %v1978
    %v2181 = vpack.c.bf16 %v1989, %v1985
    %v2182 = vpack.c.bf16 %v1990, %v1986
    %v2183 = vpack.c.bf16 %v1997, %v1993
    %v2184 = vpack.c.bf16 %v1998, %v1994
    %v2185 = vpack.c.bf16 %v2005, %v2001
    %v2186 = vpack.c.bf16 %v2006, %v2002
    %v2187 = vpack.c.bf16 %v2013, %v2009
    %v2188 = vpack.c.bf16 %v2014, %v2010
    %v2189 = vpack.c.bf16 %v2021, %v2017
    %v2190 = vpack.c.bf16 %v2022, %v2018
    %v2191 = vpack.c.bf16 %v2029, %v2025
    %v2192 = vpack.c.bf16 %v2030, %v2026
    %v2193 = vpack.c.bf16 %v2037, %v2033
    %v2194 = vpack.c.bf16 %v2038, %v2034
    %v2195 = vpack.c.bf16 %v2045, %v2041
    %v2196 = vpack.c.bf16 %v2046, %v2042
    %v2197 = vpack.c.bf16 %v2053, %v2049
    %v2198 = vpack.c.bf16 %v2054, %v2050
    %v2199 = vpack.c.bf16 %v2061, %v2057
    %v2200 = vpack.c.bf16 %v2062, %v2058
    %v2201 = vpack.c.bf16 %v2069, %v2065
    %v2202 = vpack.c.bf16 %v2070, %v2066
    %v2203 = vpack.c.bf16 %v2077, %v2073
    %v2204 = vpack.c.bf16 %v2078, %v2074
    %v2205 = vpack.c.bf16 %v2085, %v2081
    %v2206 = vpack.c.bf16 %v2086, %v2082
    %v2207 = vpack.c.bf16 %v2093, %v2089
    %v2208 = vpack.c.bf16 %v2094, %v2090
    %v2209 = vpack.c.bf16 %v2101, %v2097
    %v2210 = vpack.c.bf16 %v2102, %v2098
    %v2211 = vpack.c.bf16 %v2109, %v2105
    %v2212 = vpack.c.bf16 %v2110, %v2106
    %v2213 = vpack.c.bf16 %v2117, %v2113
    %v2214 = vpack.c.bf16 %v2118, %v2114
    %v2215 = vld [vmem:[%s5] sm:$0xff]
    %v2216 = vld [vmem:[%s5 + $0x8] sm:$0xff]
    %v2217 = vld [vmem:[%s5 + $0x10] sm:$0xff]
    %v2218 = vld [vmem:[%s5 + $0x18] sm:$0xff]
    %v2219 = vld [vmem:[%s5 + $0x20] sm:$0xff]
    %v2220 = vld [vmem:[%s5 + $0x28] sm:$0xff]
    %v2221 = vld [vmem:[%s5 + $0x30] sm:$0xff]
    %v2222 = vld [vmem:[%s5 + $0x38] sm:$0xff]
    %v2223 = vld [vmem:[%s5 + $0x40] sm:$0xff]
    %v2224 = vld [vmem:[%s5 + $0x48] sm:$0xff]
    %v2225 = vld [vmem:[%s5 + $0x50] sm:$0xff]
    %v2226 = vld [vmem:[%s5 + $0x58] sm:$0xff]
    %v2227 = vld [vmem:[%s5 + $0x60] sm:$0xff]
    %v2228 = vld [vmem:[%s5 + $0x68] sm:$0xff]
    %v2229 = vld [vmem:[%s5 + $0x70] sm:$0xff]
    %v2230 = vld [vmem:[%s5 + $0x78] sm:$0xff]
    %v2231 = vld [vmem:[%s5 + $0x80] sm:$0xff]
    %v2232 = vld [vmem:[%s5 + $0x88] sm:$0xff]
    %v2233 = vld [vmem:[%s5 + $0x90] sm:$0xff]
    %v2234 = vld [vmem:[%s5 + $0x98] sm:$0xff]
    %v2235 = vld [vmem:[%s5 + $0xa0] sm:$0xff]
    %v2236 = vld [vmem:[%s5 + $0xa8] sm:$0xff]
    %v2237 = vld [vmem:[%s5 + $0xb0] sm:$0xff]
    %v2238 = vld [vmem:[%s5 + $0xb8] sm:$0xff]
    %v2239 = vld [vmem:[%s5 + $0xc0] sm:$0xff]
    %v2240 = vld [vmem:[%s5 + $0xc8] sm:$0xff]
    %v2241 = vld [vmem:[%s5 + $0xd0] sm:$0xff]
    %v2242 = vld [vmem:[%s5 + $0xd8] sm:$0xff]
    %v2243 = vld [vmem:[%s5 + $0xe0] sm:$0xff]
    %v2244 = vld [vmem:[%s5 + $0xe8] sm:$0xff]
    %v2245 = vld [vmem:[%s5 + $0xf0] sm:$0xff]
    %v2246 = vld [vmem:[%s5 + $0xf8] sm:$0xff]
    %v2247 = vld [vmem:[%s6] sm:$0x3]
    %v2249 = vlaneseq
    %v2250 = vshrl.u32 %v2249, 7
    %v2251 = vsub.s32 0, %v2250
    %v2252 = vrot.slane %v2247, %v2251
    %v2253 = vlaneseq
    %v2254 = vshrl.u32 %v2253, 7
    %v2255 = vsub.s32 1, %v2254
    %v2256 = vrot.slane %v2247, %v2255
    %v2291 = vunpack.c.l.b16 %v2215
    %v2292 = vunpack.c.h.b16 %v2215
    %v2293 = vunpack.c.l.b16 %v2216
    %v2294 = vunpack.c.h.b16 %v2216
    %v2295 = vunpack.c.l.b16 %v2217
    %v2296 = vunpack.c.h.b16 %v2217
    %v2297 = vunpack.c.l.b16 %v2218
    %v2298 = vunpack.c.h.b16 %v2218
    %v2299 = vunpack.c.l.b16 %v2219
    %v2300 = vunpack.c.h.b16 %v2219
    %v2301 = vunpack.c.l.b16 %v2220
    %v2302 = vunpack.c.h.b16 %v2220
    %v2303 = vunpack.c.l.b16 %v2221
    %v2304 = vunpack.c.h.b16 %v2221
    %v2305 = vunpack.c.l.b16 %v2222
    %v2306 = vunpack.c.h.b16 %v2222
    %v2307 = vunpack.c.l.b16 %v2223
    %v2308 = vunpack.c.h.b16 %v2223
    %v2309 = vunpack.c.l.b16 %v2224
    %v2310 = vunpack.c.h.b16 %v2224
    %v2311 = vunpack.c.l.b16 %v2225
    %v2312 = vunpack.c.h.b16 %v2225
    %v2313 = vunpack.c.l.b16 %v2226
    %v2314 = vunpack.c.h.b16 %v2226
    %v2315 = vunpack.c.l.b16 %v2227
    %v2316 = vunpack.c.h.b16 %v2227
    %v2317 = vunpack.c.l.b16 %v2228
    %v2318 = vunpack.c.h.b16 %v2228
    %v2319 = vunpack.c.l.b16 %v2229
    %v2320 = vunpack.c.h.b16 %v2229
    %v2321 = vunpack.c.l.b16 %v2230
    %v2322 = vunpack.c.h.b16 %v2230
    %v2323 = vunpack.c.l.b16 %v2231
    %v2324 = vunpack.c.h.b16 %v2231
    %v2325 = vunpack.c.l.b16 %v2232
    %v2326 = vunpack.c.h.b16 %v2232
    %v2327 = vunpack.c.l.b16 %v2233
    %v2328 = vunpack.c.h.b16 %v2233
    %v2329 = vunpack.c.l.b16 %v2234
    %v2330 = vunpack.c.h.b16 %v2234
    %v2331 = vunpack.c.l.b16 %v2235
    %v2332 = vunpack.c.h.b16 %v2235
    %v2333 = vunpack.c.l.b16 %v2236
    %v2334 = vunpack.c.h.b16 %v2236
    %v2335 = vunpack.c.l.b16 %v2237
    %v2336 = vunpack.c.h.b16 %v2237
    %v2337 = vunpack.c.l.b16 %v2238
    %v2338 = vunpack.c.h.b16 %v2238
    %v2339 = vunpack.c.l.b16 %v2239
    %v2340 = vunpack.c.h.b16 %v2239
    %v2341 = vunpack.c.l.b16 %v2240
    %v2342 = vunpack.c.h.b16 %v2240
    %v2343 = vunpack.c.l.b16 %v2241
    %v2344 = vunpack.c.h.b16 %v2241
    %v2345 = vunpack.c.l.b16 %v2242
    %v2346 = vunpack.c.h.b16 %v2242
    %v2347 = vunpack.c.l.b16 %v2243
    %v2348 = vunpack.c.h.b16 %v2243
    %v2349 = vunpack.c.l.b16 %v2244
    %v2350 = vunpack.c.h.b16 %v2244
    %v2351 = vunpack.c.l.b16 %v2245
    %v2352 = vunpack.c.h.b16 %v2245
    %v2353 = vunpack.c.l.b16 %v2246
    %v2354 = vunpack.c.h.b16 %v2246
    %v2355 = vpack.c.b16 %v2293, %v2291
    %v2356 = vpack.c.b16 %v2294, %v2292
    %v2357 = vpack.c.b16 %v2297, %v2295
    %v2358 = vpack.c.b16 %v2298, %v2296
    %v2359 = vpack.c.b16 %v2301, %v2299
    %v2360 = vpack.c.b16 %v2302, %v2300
    %v2361 = vpack.c.b16 %v2305, %v2303
    %v2362 = vpack.c.b16 %v2306, %v2304
    %v2363 = vpack.c.b16 %v2309, %v2307
    %v2364 = vpack.c.b16 %v2310, %v2308
    %v2365 = vpack.c.b16 %v2313, %v2311
    %v2366 = vpack.c.b16 %v2314, %v2312
    %v2367 = vpack.c.b16 %v2317, %v2315
    %v2368 = vpack.c.b16 %v2318, %v2316
    %v2369 = vpack.c.b16 %v2321, %v2319
    %v2370 = vpack.c.b16 %v2322, %v2320
    %v2371 = vpack.c.b16 %v2325, %v2323
    %v2372 = vpack.c.b16 %v2326, %v2324
    %v2373 = vpack.c.b16 %v2329, %v2327
    %v2374 = vpack.c.b16 %v2330, %v2328
    %v2375 = vpack.c.b16 %v2333, %v2331
    %v2376 = vpack.c.b16 %v2334, %v2332
    %v2377 = vpack.c.b16 %v2337, %v2335
    %v2378 = vpack.c.b16 %v2338, %v2336
    %v2379 = vpack.c.b16 %v2341, %v2339
    %v2380 = vpack.c.b16 %v2342, %v2340
    %v2381 = vpack.c.b16 %v2345, %v2343
    %v2382 = vpack.c.b16 %v2346, %v2344
    %v2383 = vpack.c.b16 %v2349, %v2347
    %v2384 = vpack.c.b16 %v2350, %v2348
    %v2385 = vpack.c.b16 %v2353, %v2351
    %v2386 = vpack.c.b16 %v2354, %v2352
    %2419 = vmatprep.subr.bf16.mxu0 %v2356
    %2420 = vmatpush1.bf16.msra.mxu0 %v2355
    %2421 = vmatprep.subr.bf16.mxu0 %v2358
    %2422 = vmatpush1.bf16.msra.mxu0 %v2357
    %2423 = vmatprep.subr.bf16.mxu0 %v2360
    %2424 = vmatpush1.bf16.msra.mxu0 %v2359
    %2425 = vmatprep.subr.bf16.mxu0 %v2362
    %2426 = vmatpush1.bf16.msra.mxu0 %v2361
    %2427 = vmatprep.subr.bf16.mxu0 %v2364
    %2428 = vmatpush1.bf16.msra.mxu0 %v2363
    %2429 = vmatprep.subr.bf16.mxu0 %v2366
    %2430 = vmatpush1.bf16.msra.mxu0 %v2365
    %2431 = vmatprep.subr.bf16.mxu0 %v2368
    %2432 = vmatpush1.bf16.msra.mxu0 %v2367
    %2433 = vmatprep.subr.bf16.mxu0 %v2370
    %2434 = vmatpush1.bf16.msra.mxu0 %v2369
    %2435 = vmatprep.subr.bf16.mxu0 %v2372
    %2436 = vmatpush1.bf16.msra.mxu0 %v2371
    %2437 = vmatprep.subr.bf16.mxu0 %v2374
    %2438 = vmatpush1.bf16.msra.mxu0 %v2373
    %2439 = vmatprep.subr.bf16.mxu0 %v2376
    %2440 = vmatpush1.bf16.msra.mxu0 %v2375
    %2441 = vmatprep.subr.bf16.mxu0 %v2378
    %2442 = vmatpush1.bf16.msra.mxu0 %v2377
    %2443 = vmatprep.subr.bf16.mxu0 %v2380
    %2444 = vmatpush1.bf16.msra.mxu0 %v2379
    %2445 = vmatprep.subr.bf16.mxu0 %v2382
    %2446 = vmatpush1.bf16.msra.mxu0 %v2381
    %2447 = vmatprep.subr.bf16.mxu0 %v2384
    %2448 = vmatpush1.bf16.msra.mxu0 %v2383
    %2449 = vmatprep.subr.bf16.mxu0 %v2386
    %2450 = vmatpush1.bf16.msra.mxu0 %v2385
    %2451 = vmatprep.mubr.bf16.mxu0 %v2120
    %2452 = vmatmul.mubr.bf16.gmra.mrb[0].mxu0 %v2119
    %v2453 = vpop.f32.mrb[0].mxu0
    %v2454 = vadd.f32 %v2252, %v2453
    %v2455 = vpop.f32.mrb[0].mxu0
    %v2456 = vadd.f32 %v2256, %v2455
    %v2457 = vpop.f32.mrb[0].mxu0
    %v2458 = vadd.f32 %v2252, %v2457
    %v2459 = vpop.f32.mrb[0].mxu0
    %v2460 = vadd.f32 %v2256, %v2459
    %2461 = vmatprep.mubr.bf16.mxu0 %v2122
    %2462 = vmatmul.mubr.bf16.gmra.mrb[0].mxu0 %v2121
    %v2463 = vpop.f32.mrb[0].mxu0
    %v2464 = vadd.f32 %v2252, %v2463
    %v2465 = vpop.f32.mrb[0].mxu0
    %v2466 = vadd.f32 %v2256, %v2465
    %v2467 = vpop.f32.mrb[0].mxu0
    %v2468 = vadd.f32 %v2252, %v2467
    %v2469 = vpop.f32.mrb[0].mxu0
    %v2470 = vadd.f32 %v2256, %v2469
    %2471 = vmatprep.mubr.bf16.mxu0 %v2124
    %2472 = vmatmul.mubr.bf16.gmra.mrb[0].mxu0 %v2123
    %v2473 = vpop.f32.mrb[0].mxu0
    %v2474 = vadd.f32 %v2252, %v2473
    %v2475 = vpop.f32.mrb[0].mxu0
    %v2476 = vadd.f32 %v2256, %v2475
    %v2477 = vpop.f32.mrb[0].mxu0
    %v2478 = vadd.f32 %v2252, %v2477
    %v2479 = vpop.f32.mrb[0].mxu0
    %v2480 = vadd.f32 %v2256, %v2479
    %2481 = vmatprep.mubr.bf16.mxu0 %v2126
    %2482 = vmatmul.mubr.bf16.gmra.mrb[0].mxu0 %v2125
    %v2483 = vpop.f32.mrb[0].mxu0
    %v2484 = vadd.f32 %v2252, %v2483
    %v2485 = vpop.f32.mrb[0].mxu0
    %v2486 = vadd.f32 %v2256, %v2485
    %v2487 = vpop.f32.mrb[0].mxu0
    %v2488 = vadd.f32 %v2252, %v2487
    %v2489 = vpop.f32.mrb[0].mxu0
    %v2490 = vadd.f32 %v2256, %v2489
    %2491 = vmatprep.mubr.bf16.mxu0 %v2128
    %2492 = vmatmul.mubr.bf16.gmra.mrb[0].mxu0 %v2127
    %v2493 = vpop.f32.mrb[0].mxu0
    %v2494 = vadd.f32 %v2252, %v2493
    %v2495 = vpop.f32.mrb[0].mxu0
    %v2496 = vadd.f32 %v2256, %v2495
    %v2497 = vpop.f32.mrb[0].mxu0
    %v2498 = vadd.f32 %v2252, %v2497
    %v2499 = vpop.f32.mrb[0].mxu0
    %v2500 = vadd.f32 %v2256, %v2499
    %2501 = vmatprep.mubr.bf16.mxu0 %v2130
    %2502 = vmatmul.mubr.bf16.gmra.mrb[0].mxu0 %v2129
    %v2503 = vpop.f32.mrb[0].mxu0
    %v2504 = vadd.f32 %v2252, %v2503
    %v2505 = vpop.f32.mrb[0].mxu0
    %v2506 = vadd.f32 %v2256, %v2505
    %v2507 = vpop.f32.mrb[0].mxu0
    %v2508 = vadd.f32 %v2252, %v2507
    %v2509 = vpop.f32.mrb[0].mxu0
    %v2510 = vadd.f32 %v2256, %v2509
    %2511 = vmatprep.mubr.bf16.mxu0 %v2132
    %2512 = vmatmul.mubr.bf16.gmra.mrb[0].mxu0 %v2131
    %v2513 = vpop.f32.mrb[0].mxu0
    %v2514 = vadd.f32 %v2252, %v2513
    %v2515 = vpop.f32.mrb[0].mxu0
    %v2516 = vadd.f32 %v2256, %v2515
    %v2517 = vpop.f32.mrb[0].mxu0
    %v2518 = vadd.f32 %v2252, %v2517
    %v2519 = vpop.f32.mrb[0].mxu0
    %v2520 = vadd.f32 %v2256, %v2519
    %2521 = vmatprep.mubr.bf16.mxu0 %v2134
    %2522 = vmatmul.mubr.bf16.gmra.mrb[0].mxu0 %v2133
    %v2523 = vpop.f32.mrb[0].mxu0
    %v2524 = vadd.f32 %v2252, %v2523
    %v2525 = vpop.f32.mrb[0].mxu0
    %v2526 = vadd.f32 %v2256, %v2525
    %v2527 = vpop.f32.mrb[0].mxu0
    %v2528 = vadd.f32 %v2252, %v2527
    %v2529 = vpop.f32.mrb[0].mxu0
    %v2530 = vadd.f32 %v2256, %v2529
    %2531 = vmatprep.mubr.bf16.mxu0 %v2136
    %2532 = vmatmul.mubr.bf16.gmra.mrb[0].mxu0 %v2135
    %v2533 = vpop.f32.mrb[0].mxu0
    %v2534 = vadd.f32 %v2252, %v2533
    %v2535 = vpop.f32.mrb[0].mxu0
    %v2536 = vadd.f32 %v2256, %v2535
    %v2537 = vpop.f32.mrb[0].mxu0
    %v2538 = vadd.f32 %v2252, %v2537
    %v2539 = vpop.f32.mrb[0].mxu0
    %v2540 = vadd.f32 %v2256, %v2539
    %2541 = vmatprep.mubr.bf16.mxu0 %v2138
    %2542 = vmatmul.mubr.bf16.gmra.mrb[0].mxu0 %v2137
    %v2543 = vpop.f32.mrb[0].mxu0
    %v2544 = vadd.f32 %v2252, %v2543
    %v2545 = vpop.f32.mrb[0].mxu0
    %v2546 = vadd.f32 %v2256, %v2545
    %v2547 = vpop.f32.mrb[0].mxu0
    %v2548 = vadd.f32 %v2252, %v2547
    %v2549 = vpop.f32.mrb[0].mxu0
    %v2550 = vadd.f32 %v2256, %v2549
    %2551 = vmatprep.mubr.bf16.mxu0 %v2140
    %2552 = vmatmul.mubr.bf16.gmra.mrb[0].mxu0 %v2139
    %v2553 = vpop.f32.mrb[0].mxu0
    %v2554 = vadd.f32 %v2252, %v2553
    %v2555 = vpop.f32.mrb[0].mxu0
    %v2556 = vadd.f32 %v2256, %v2555
    %v2557 = vpop.f32.mrb[0].mxu0
    %v2558 = vadd.f32 %v2252, %v2557
    %v2559 = vpop.f32.mrb[0].mxu0
    %v2560 = vadd.f32 %v2256, %v2559
    %2561 = vmatprep.mubr.bf16.mxu0 %v2142
    %2562 = vmatmul.mubr.bf16.gmra.mrb[0].mxu0 %v2141
    %v2563 = vpop.f32.mrb[0].mxu0
    %v2564 = vadd.f32 %v2252, %v2563
    %v2565 = vpop.f32.mrb[0].mxu0
    %v2566 = vadd.f32 %v2256, %v2565
    %v2567 = vpop.f32.mrb[0].mxu0
    %v2568 = vadd.f32 %v2252, %v2567
    %v2569 = vpop.f32.mrb[0].mxu0
    %v2570 = vadd.f32 %v2256, %v2569
    %2571 = vmatprep.mubr.bf16.mxu0 %v2144
    %2572 = vmatmul.mubr.bf16.gmra.mrb[0].mxu0 %v2143
    %v2573 = vpop.f32.mrb[0].mxu0
    %v2574 = vadd.f32 %v2252, %v2573
    %v2575 = vpop.f32.mrb[0].mxu0
    %v2576 = vadd.f32 %v2256, %v2575
    %v2577 = vpop.f32.mrb[0].mxu0
    %v2578 = vadd.f32 %v2252, %v2577
    %v2579 = vpop.f32.mrb[0].mxu0
    %v2580 = vadd.f32 %v2256, %v2579
    %2581 = vmatprep.mubr.bf16.mxu0 %v2146
    %2582 = vmatmul.mubr.bf16.gmra.mrb[0].mxu0 %v2145
    %v2583 = vpop.f32.mrb[0].mxu0
    %v2584 = vadd.f32 %v2252, %v2583
    %v2585 = vpop.f32.mrb[0].mxu0
    %v2586 = vadd.f32 %v2256, %v2585
    %v2587 = vpop.f32.mrb[0].mxu0
    %v2588 = vadd.f32 %v2252, %v2587
    %v2589 = vpop.f32.mrb[0].mxu0
    %v2590 = vadd.f32 %v2256, %v2589
    %2591 = vmatprep.mubr.bf16.mxu0 %v2148
    %2592 = vmatmul.mubr.bf16.gmra.mrb[0].mxu0 %v2147
    %v2593 = vpop.f32.mrb[0].mxu0
    %v2594 = vadd.f32 %v2252, %v2593
    %v2595 = vpop.f32.mrb[0].mxu0
    %v2596 = vadd.f32 %v2256, %v2595
    %v2597 = vpop.f32.mrb[0].mxu0
    %v2598 = vadd.f32 %v2252, %v2597
    %v2599 = vpop.f32.mrb[0].mxu0
    %v2600 = vadd.f32 %v2256, %v2599
    %2601 = vmatprep.mubr.bf16.mxu0 %v2150
    %2602 = vmatmul.mubr.bf16.gmra.mrb[0].mxu0 %v2149
    %v2603 = vpop.f32.mrb[0].mxu0
    %v2604 = vadd.f32 %v2252, %v2603
    %v2605 = vpop.f32.mrb[0].mxu0
    %v2606 = vadd.f32 %v2256, %v2605
    %v2607 = vpop.f32.mrb[0].mxu0
    %v2608 = vadd.f32 %v2252, %v2607
    %v2609 = vpop.f32.mrb[0].mxu0
    %v2610 = vadd.f32 %v2256, %v2609
    %2611 = vmatprep.mubr.bf16.mxu0 %v2152
    %2612 = vmatmul.mubr.bf16.gmra.mrb[0].mxu0 %v2151
    %v2613 = vpop.f32.mrb[0].mxu0
    %v2614 = vadd.f32 %v2252, %v2613
    %v2615 = vpop.f32.mrb[0].mxu0
    %v2616 = vadd.f32 %v2256, %v2615
    %v2617 = vpop.f32.mrb[0].mxu0
    %v2618 = vadd.f32 %v2252, %v2617
    %v2619 = vpop.f32.mrb[0].mxu0
    %v2620 = vadd.f32 %v2256, %v2619
    %2621 = vmatprep.mubr.bf16.mxu0 %v2154
    %2622 = vmatmul.mubr.bf16.gmra.mrb[0].mxu0 %v2153
    %v2623 = vpop.f32.mrb[0].mxu0
    %v2624 = vadd.f32 %v2252, %v2623
    %v2625 = vpop.f32.mrb[0].mxu0
    %v2626 = vadd.f32 %v2256, %v2625
    %v2627 = vpop.f32.mrb[0].mxu0
    %v2628 = vadd.f32 %v2252, %v2627
    %v2629 = vpop.f32.mrb[0].mxu0
    %v2630 = vadd.f32 %v2256, %v2629
    %2631 = vmatprep.mubr.bf16.mxu0 %v2156
    %2632 = vmatmul.mubr.bf16.gmra.mrb[0].mxu0 %v2155
    %v2633 = vpop.f32.mrb[0].mxu0
    %v2634 = vadd.f32 %v2252, %v2633
    %v2635 = vpop.f32.mrb[0].mxu0
    %v2636 = vadd.f32 %v2256, %v2635
    %v2637 = vpop.f32.mrb[0].mxu0
    %v2638 = vadd.f32 %v2252, %v2637
    %v2639 = vpop.f32.mrb[0].mxu0
    %v2640 = vadd.f32 %v2256, %v2639
    %2641 = vmatprep.mubr.bf16.mxu0 %v2158
    %2642 = vmatmul.mubr.bf16.gmra.mrb[0].mxu0 %v2157
    %v2643 = vpop.f32.mrb[0].mxu0
    %v2644 = vadd.f32 %v2252, %v2643
    %v2645 = vpop.f32.mrb[0].mxu0
    %v2646 = vadd.f32 %v2256, %v2645
    %v2647 = vpop.f32.mrb[0].mxu0
    %v2648 = vadd.f32 %v2252, %v2647
    %v2649 = vpop.f32.mrb[0].mxu0
    %v2650 = vadd.f32 %v2256, %v2649
    %2651 = vmatprep.mubr.bf16.mxu0 %v2160
    %2652 = vmatmul.mubr.bf16.gmra.mrb[0].mxu0 %v2159
    %v2653 = vpop.f32.mrb[0].mxu0
    %v2654 = vadd.f32 %v2252, %v2653
    %v2655 = vpop.f32.mrb[0].mxu0
    %v2656 = vadd.f32 %v2256, %v2655
    %v2657 = vpop.f32.mrb[0].mxu0
    %v2658 = vadd.f32 %v2252, %v2657
    %v2659 = vpop.f32.mrb[0].mxu0
    %v2660 = vadd.f32 %v2256, %v2659
    %2661 = vmatprep.mubr.bf16.mxu0 %v2162
    %2662 = vmatmul.mubr.bf16.gmra.mrb[0].mxu0 %v2161
    %v2663 = vpop.f32.mrb[0].mxu0
    %v2664 = vadd.f32 %v2252, %v2663
    %v2665 = vpop.f32.mrb[0].mxu0
    %v2666 = vadd.f32 %v2256, %v2665
    %v2667 = vpop.f32.mrb[0].mxu0
    %v2668 = vadd.f32 %v2252, %v2667
    %v2669 = vpop.f32.mrb[0].mxu0
    %v2670 = vadd.f32 %v2256, %v2669
    %2671 = vmatprep.mubr.bf16.mxu0 %v2164
    %2672 = vmatmul.mubr.bf16.gmra.mrb[0].mxu0 %v2163
    %v2673 = vpop.f32.mrb[0].mxu0
    %v2674 = vadd.f32 %v2252, %v2673
    %v2675 = vpop.f32.mrb[0].mxu0
    %v2676 = vadd.f32 %v2256, %v2675
    %v2677 = vpop.f32.mrb[0].mxu0
    %v2678 = vadd.f32 %v2252, %v2677
    %v2679 = vpop.f32.mrb[0].mxu0
    %v2680 = vadd.f32 %v2256, %v2679
    %2681 = vmatprep.mubr.bf16.mxu0 %v2166
    %2682 = vmatmul.mubr.bf16.gmra.mrb[0].mxu0 %v2165
    %v2683 = vpop.f32.mrb[0].mxu0
    %v2684 = vadd.f32 %v2252, %v2683
    %v2685 = vpop.f32.mrb[0].mxu0
    %v2686 = vadd.f32 %v2256, %v2685
    %v2687 = vpop.f32.mrb[0].mxu0
    %v2688 = vadd.f32 %v2252, %v2687
    %v2689 = vpop.f32.mrb[0].mxu0
    %v2690 = vadd.f32 %v2256, %v2689
    %2691 = vdwg.mxu0
    %v2692 = vmax.f32 %v2454, 0.0
    %v2693 = vmax.f32 %v2456, 0.0
    %v2694 = vmax.f32 %v2458, 0.0
    %v2695 = vmax.f32 %v2460, 0.0
    %v2696 = vmax.f32 %v2464, 0.0
    %v2697 = vmax.f32 %v2466, 0.0
    %v2698 = vmax.f32 %v2468, 0.0
    %v2699 = vmax.f32 %v2470, 0.0
    %v2700 = vmax.f32 %v2474, 0.0
    %v2701 = vmax.f32 %v2476, 0.0
    %v2702 = vmax.f32 %v2478, 0.0
    %v2703 = vmax.f32 %v2480, 0.0
    %v2704 = vmax.f32 %v2484, 0.0
    %v2705 = vmax.f32 %v2486, 0.0
    %v2706 = vmax.f32 %v2488, 0.0
    %v2707 = vmax.f32 %v2490, 0.0
    %v2708 = vmax.f32 %v2494, 0.0
    %v2709 = vmax.f32 %v2496, 0.0
    %v2710 = vmax.f32 %v2498, 0.0
    %v2711 = vmax.f32 %v2500, 0.0
    %v2712 = vmax.f32 %v2504, 0.0
    %v2713 = vmax.f32 %v2506, 0.0
    %v2714 = vmax.f32 %v2508, 0.0
    %v2715 = vmax.f32 %v2510, 0.0
    %v2716 = vmax.f32 %v2514, 0.0
    %v2717 = vmax.f32 %v2516, 0.0
    %v2718 = vmax.f32 %v2518, 0.0
    %v2719 = vmax.f32 %v2520, 0.0
    %v2720 = vmax.f32 %v2524, 0.0
    %v2721 = vmax.f32 %v2526, 0.0
    %v2722 = vmax.f32 %v2528, 0.0
    %v2723 = vmax.f32 %v2530, 0.0
    %v2724 = vmax.f32 %v2534, 0.0
    %v2725 = vmax.f32 %v2536, 0.0
    %v2726 = vmax.f32 %v2538, 0.0
    %v2727 = vmax.f32 %v2540, 0.0
    %v2728 = vmax.f32 %v2544, 0.0
    %v2729 = vmax.f32 %v2546, 0.0
    %v2730 = vmax.f32 %v2548, 0.0
    %v2731 = vmax.f32 %v2550, 0.0
    %v2732 = vmax.f32 %v2554, 0.0
    %v2733 = vmax.f32 %v2556, 0.0
    %v2734 = vmax.f32 %v2558, 0.0
    %v2735 = vmax.f32 %v2560, 0.0
    %v2736 = vmax.f32 %v2564, 0.0
    %v2737 = vmax.f32 %v2566, 0.0
    %v2738 = vmax.f32 %v2568, 0.0
    %v2739 = vmax.f32 %v2570, 0.0
    %v2740 = vmax.f32 %v2574, 0.0
    %v2741 = vmax.f32 %v2576, 0.0
    %v2742 = vmax.f32 %v2578, 0.0
    %v2743 = vmax.f32 %v2580, 0.0
    %v2744 = vmax.f32 %v2584, 0.0
    %v2745 = vmax.f32 %v2586, 0.0
    %v2746 = vmax.f32 %v2588, 0.0
    %v2747 = vmax.f32 %v2590, 0.0
    %v2748 = vmax.f32 %v2594, 0.0
    %v2749 = vmax.f32 %v2596, 0.0
    %v2750 = vmax.f32 %v2598, 0.0
    %v2751 = vmax.f32 %v2600, 0.0
    %v2752 = vmax.f32 %v2604, 0.0
    %v2753 = vmax.f32 %v2606, 0.0
    %v2754 = vmax.f32 %v2608, 0.0
    %v2755 = vmax.f32 %v2610, 0.0
    %v2756 = vmax.f32 %v2614, 0.0
    %v2757 = vmax.f32 %v2616, 0.0
    %v2758 = vmax.f32 %v2618, 0.0
    %v2759 = vmax.f32 %v2620, 0.0
    %v2760 = vmax.f32 %v2624, 0.0
    %v2761 = vmax.f32 %v2626, 0.0
    %v2762 = vmax.f32 %v2628, 0.0
    %v2763 = vmax.f32 %v2630, 0.0
    %v2764 = vmax.f32 %v2634, 0.0
    %v2765 = vmax.f32 %v2636, 0.0
    %v2766 = vmax.f32 %v2638, 0.0
    %v2767 = vmax.f32 %v2640, 0.0
    %v2768 = vmax.f32 %v2644, 0.0
    %v2769 = vmax.f32 %v2646, 0.0
    %v2770 = vmax.f32 %v2648, 0.0
    %v2771 = vmax.f32 %v2650, 0.0
    %v2772 = vmax.f32 %v2654, 0.0
    %v2773 = vmax.f32 %v2656, 0.0
    %v2774 = vmax.f32 %v2658, 0.0
    %v2775 = vmax.f32 %v2660, 0.0
    %v2776 = vmax.f32 %v2664, 0.0
    %v2777 = vmax.f32 %v2666, 0.0
    %v2778 = vmax.f32 %v2668, 0.0
    %v2779 = vmax.f32 %v2670, 0.0
    %v2780 = vmax.f32 %v2674, 0.0
    %v2781 = vmax.f32 %v2676, 0.0
    %v2782 = vmax.f32 %v2678, 0.0
    %v2783 = vmax.f32 %v2680, 0.0
    %v2784 = vmax.f32 %v2684, 0.0
    %v2785 = vmax.f32 %v2686, 0.0
    %v2786 = vmax.f32 %v2688, 0.0
    %v2787 = vmax.f32 %v2690, 0.0
    %v2788 = vld [vmem:[#allocation4] sm:$0xff]
    %v2789 = vld [vmem:[#allocation4 + $0x8] sm:$0xff]
    %v2790 = vld [vmem:[#allocation4 + $0x10] sm:$0xff]
    %v2791 = vld [vmem:[#allocation4 + $0x18] sm:$0xff]
    %v2792 = vld [vmem:[#allocation4 + $0x20] sm:$0xff]
    %v2793 = vld [vmem:[#allocation4 + $0x28] sm:$0xff]
    %v2794 = vld [vmem:[#allocation4 + $0x30] sm:$0xff]
    %v2795 = vld [vmem:[#allocation4 + $0x38] sm:$0xff]
    %v2796 = vld [vmem:[#allocation4 + $0x40] sm:$0xff]
    %v2797 = vld [vmem:[#allocation4 + $0x48] sm:$0xff]
    %v2798 = vld [vmem:[#allocation4 + $0x50] sm:$0xff]
    %v2799 = vld [vmem:[#allocation4 + $0x58] sm:$0xff]
    %v2800 = vld [vmem:[#allocation4 + $0x60] sm:$0xff]
    %v2801 = vld [vmem:[#allocation4 + $0x68] sm:$0xff]
    %v2802 = vld [vmem:[#allocation4 + $0x70] sm:$0xff]
    %v2803 = vld [vmem:[#allocation4 + $0x78] sm:$0xff]
    %v2804 = vld [vmem:[#allocation4 + $0x80] sm:$0xff]
    %v2805 = vld [vmem:[#allocation4 + $0x88] sm:$0xff]
    %v2806 = vld [vmem:[#allocation4 + $0x90] sm:$0xff]
    %v2807 = vld [vmem:[#allocation4 + $0x98] sm:$0xff]
    %v2808 = vld [vmem:[#allocation4 + $0xa0] sm:$0xff]
    %v2809 = vld [vmem:[#allocation4 + $0xa8] sm:$0xff]
    %v2810 = vld [vmem:[#allocation4 + $0xb0] sm:$0xff]
    %v2811 = vld [vmem:[#allocation4 + $0xb8] sm:$0xff]
    %v2812 = vld [vmem:[#allocation4 + $0xc0] sm:$0xff]
    %v2813 = vld [vmem:[#allocation4 + $0xc8] sm:$0xff]
    %v2814 = vld [vmem:[#allocation4 + $0xd0] sm:$0xff]
    %v2815 = vld [vmem:[#allocation4 + $0xd8] sm:$0xff]
    %v2816 = vld [vmem:[#allocation4 + $0xe0] sm:$0xff]
    %v2817 = vld [vmem:[#allocation4 + $0xe8] sm:$0xff]
    %v2818 = vld [vmem:[#allocation4 + $0xf0] sm:$0xff]
    %v2819 = vld [vmem:[#allocation4 + $0xf8] sm:$0xff]
    %v2820 = vld [vmem:[%s8] sm:$0x3]
    %v2822 = vlaneseq
    %v2823 = vshrl.u32 %v2822, 7
    %v2824 = vsub.s32 0, %v2823
    %v2825 = vrot.slane %v2820, %v2824
    %v2826 = vlaneseq
    %v2827 = vshrl.u32 %v2826, 7
    %v2828 = vsub.s32 1, %v2827
    %v2829 = vrot.slane %v2820, %v2828
    %v2864 = vunpack.c.l.b16 %v2788
    %v2865 = vunpack.c.h.b16 %v2788
    %v2866 = vunpack.c.l.b16 %v2789
    %v2867 = vunpack.c.h.b16 %v2789
    %v2868 = vunpack.c.l.b16 %v2790
    %v2869 = vunpack.c.h.b16 %v2790
    %v2870 = vunpack.c.l.b16 %v2791
    %v2871 = vunpack.c.h.b16 %v2791
    %v2872 = vunpack.c.l.b16 %v2792
    %v2873 = vunpack.c.h.b16 %v2792
    %v2874 = vunpack.c.l.b16 %v2793
    %v2875 = vunpack.c.h.b16 %v2793
    %v2876 = vunpack.c.l.b16 %v2794
    %v2877 = vunpack.c.h.b16 %v2794
    %v2878 = vunpack.c.l.b16 %v2795
    %v2879 = vunpack.c.h.b16 %v2795
    %v2880 = vunpack.c.l.b16 %v2796
    %v2881 = vunpack.c.h.b16 %v2796
    %v2882 = vunpack.c.l.b16 %v2797
    %v2883 = vunpack.c.h.b16 %v2797
    %v2884 = vunpack.c.l.b16 %v2798
    %v2885 = vunpack.c.h.b16 %v2798
    %v2886 = vunpack.c.l.b16 %v2799
    %v2887 = vunpack.c.h.b16 %v2799
    %v2888 = vunpack.c.l.b16 %v2800
    %v2889 = vunpack.c.h.b16 %v2800
    %v2890 = vunpack.c.l.b16 %v2801
    %v2891 = vunpack.c.h.b16 %v2801
    %v2892 = vunpack.c.l.b16 %v2802
    %v2893 = vunpack.c.h.b16 %v2802
    %v2894 = vunpack.c.l.b16 %v2803
    %v2895 = vunpack.c.h.b16 %v2803
    %v2896 = vunpack.c.l.b16 %v2804
    %v2897 = vunpack.c.h.b16 %v2804
    %v2898 = vunpack.c.l.b16 %v2805
    %v2899 = vunpack.c.h.b16 %v2805
    %v2900 = vunpack.c.l.b16 %v2806
    %v2901 = vunpack.c.h.b16 %v2806
    %v2902 = vunpack.c.l.b16 %v2807
    %v2903 = vunpack.c.h.b16 %v2807
    %v2904 = vunpack.c.l.b16 %v2808
    %v2905 = vunpack.c.h.b16 %v2808
    %v2906 = vunpack.c.l.b16 %v2809
    %v2907 = vunpack.c.h.b16 %v2809
    %v2908 = vunpack.c.l.b16 %v2810
    %v2909 = vunpack.c.h.b16 %v2810
    %v2910 = vunpack.c.l.b16 %v2811
    %v2911 = vunpack.c.h.b16 %v2811
    %v2912 = vunpack.c.l.b16 %v2812
    %v2913 = vunpack.c.h.b16 %v2812
    %v2914 = vunpack.c.l.b16 %v2813
    %v2915 = vunpack.c.h.b16 %v2813
    %v2916 = vunpack.c.l.b16 %v2814
    %v2917 = vunpack.c.h.b16 %v2814
    %v2918 = vunpack.c.l.b16 %v2815
    %v2919 = vunpack.c.h.b16 %v2815
    %v2920 = vunpack.c.l.b16 %v2816
    %v2921 = vunpack.c.h.b16 %v2816
    %v2922 = vunpack.c.l.b16 %v2817
    %v2923 = vunpack.c.h.b16 %v2817
    %v2924 = vunpack.c.l.b16 %v2818
    %v2925 = vunpack.c.h.b16 %v2818
    %v2926 = vunpack.c.l.b16 %v2819
    %v2927 = vunpack.c.h.b16 %v2819
    %v2928 = vpack.c.b16 %v2866, %v2864
    %v2929 = vpack.c.b16 %v2867, %v2865
    %v2930 = vpack.c.b16 %v2870, %v2868
    %v2931 = vpack.c.b16 %v2871, %v2869
    %v2932 = vpack.c.b16 %v2874, %v2872
    %v2933 = vpack.c.b16 %v2875, %v2873
    %v2934 = vpack.c.b16 %v2878, %v2876
    %v2935 = vpack.c.b16 %v2879, %v2877
    %v2936 = vpack.c.b16 %v2882, %v2880
    %v2937 = vpack.c.b16 %v2883, %v2881
    %v2938 = vpack.c.b16 %v2886, %v2884
    %v2939 = vpack.c.b16 %v2887, %v2885
    %v2940 = vpack.c.b16 %v2890, %v2888
    %v2941 = vpack.c.b16 %v2891, %v2889
    %v2942 = vpack.c.b16 %v2894, %v2892
    %v2943 = vpack.c.b16 %v2895, %v2893
    %v2944 = vpack.c.b16 %v2898, %v2896
    %v2945 = vpack.c.b16 %v2899, %v2897
    %v2946 = vpack.c.b16 %v2902, %v2900
    %v2947 = vpack.c.b16 %v2903, %v2901
    %v2948 = vpack.c.b16 %v2906, %v2904
    %v2949 = vpack.c.b16 %v2907, %v2905
    %v2950 = vpack.c.b16 %v2910, %v2908
    %v2951 = vpack.c.b16 %v2911, %v2909
    %v2952 = vpack.c.b16 %v2914, %v2912
    %v2953 = vpack.c.b16 %v2915, %v2913
    %v2954 = vpack.c.b16 %v2918, %v2916
    %v2955 = vpack.c.b16 %v2919, %v2917
    %v2956 = vpack.c.b16 %v2922, %v2920
    %v2957 = vpack.c.b16 %v2923, %v2921
    %v2958 = vpack.c.b16 %v2926, %v2924
    %v2959 = vpack.c.b16 %v2927, %v2925
    %2992 = vmatprep.subr.bf16.mxu0 %v2929
    %2993 = vmatpush1.bf16.msra.mxu0 %v2928
    %2994 = vmatprep.subr.bf16.mxu0 %v2931
    %2995 = vmatpush1.bf16.msra.mxu0 %v2930
    %2996 = vmatprep.subr.bf16.mxu0 %v2933
    %2997 = vmatpush1.bf16.msra.mxu0 %v2932
    %2998 = vmatprep.subr.bf16.mxu0 %v2935
    %2999 = vmatpush1.bf16.msra.mxu0 %v2934
    %3000 = vmatprep.subr.bf16.mxu0 %v2937
    %3001 = vmatpush1.bf16.msra.mxu0 %v2936
    %3002 = vmatprep.subr.bf16.mxu0 %v2939
    %3003 = vmatpush1.bf16.msra.mxu0 %v2938
    %3004 = vmatprep.subr.bf16.mxu0 %v2941
    %3005 = vmatpush1.bf16.msra.mxu0 %v2940
    %3006 = vmatprep.subr.bf16.mxu0 %v2943
    %3007 = vmatpush1.bf16.msra.mxu0 %v2942
    %3008 = vmatprep.subr.bf16.mxu0 %v2945
    %3009 = vmatpush1.bf16.msra.mxu0 %v2944
    %3010 = vmatprep.subr.bf16.mxu0 %v2947
    %3011 = vmatpush1.bf16.msra.mxu0 %v2946
    %3012 = vmatprep.subr.bf16.mxu0 %v2949
    %3013 = vmatpush1.bf16.msra.mxu0 %v2948
    %3014 = vmatprep.subr.bf16.mxu0 %v2951
    %3015 = vmatpush1.bf16.msra.mxu0 %v2950
    %3016 = vmatprep.subr.bf16.mxu0 %v2953
    %3017 = vmatpush1.bf16.msra.mxu0 %v2952
    %3018 = vmatprep.subr.bf16.mxu0 %v2955
    %3019 = vmatpush1.bf16.msra.mxu0 %v2954
    %3020 = vmatprep.subr.bf16.mxu0 %v2957
    %3021 = vmatpush1.bf16.msra.mxu0 %v2956
    %3022 = vmatprep.subr.bf16.mxu0 %v2959
    %3023 = vmatpush1.bf16.msra.mxu0 %v2958
    %3024 = vmatprep.mubr.bf16.mxu0 %v2168
    %3025 = vmatmul.mubr.bf16.gmra.mrb[0].mxu0 %v2167
    %v3026 = vpop.f32.mrb[0].mxu0
    %v3027 = vadd.f32 %v2825, %v3026
    %v3028 = vpop.f32.mrb[0].mxu0
    %v3029 = vadd.f32 %v2829, %v3028
    %v3030 = vpop.f32.mrb[0].mxu0
    %v3031 = vadd.f32 %v2825, %v3030
    %v3032 = vpop.f32.mrb[0].mxu0
    %v3033 = vadd.f32 %v2829, %v3032
    %3034 = vmatprep.mubr.bf16.mxu0 %v2170
    %3035 = vmatmul.mubr.bf16.gmra.mrb[0].mxu0 %v2169
    %v3036 = vpop.f32.mrb[0].mxu0
    %v3037 = vadd.f32 %v2825, %v3036
    %v3038 = vpop.f32.mrb[0].mxu0
    %v3039 = vadd.f32 %v2829, %v3038
    %v3040 = vpop.f32.mrb[0].mxu0
    %v3041 = vadd.f32 %v2825, %v3040
    %v3042 = vpop.f32.mrb[0].mxu0
    %v3043 = vadd.f32 %v2829, %v3042
    %3044 = vmatprep.mubr.bf16.mxu0 %v2172
    %3045 = vmatmul.mubr.bf16.gmra.mrb[0].mxu0 %v2171
    %v3046 = vpop.f32.mrb[0].mxu0
    %v3047 = vadd.f32 %v2825, %v3046
    %v3048 = vpop.f32.mrb[0].mxu0
    %v3049 = vadd.f32 %v2829, %v3048
    %v3050 = vpop.f32.mrb[0].mxu0
    %v3051 = vadd.f32 %v2825, %v3050
    %v3052 = vpop.f32.mrb[0].mxu0
    %v3053 = vadd.f32 %v2829, %v3052
    %3054 = vmatprep.mubr.bf16.mxu0 %v2174
    %3055 = vmatmul.mubr.bf16.gmra.mrb[0].mxu0 %v2173
    %v3056 = vpop.f32.mrb[0].mxu0
    %v3057 = vadd.f32 %v2825, %v3056
    %v3058 = vpop.f32.mrb[0].mxu0
    %v3059 = vadd.f32 %v2829, %v3058
    %v3060 = vpop.f32.mrb[0].mxu0
    %v3061 = vadd.f32 %v2825, %v3060
    %v3062 = vpop.f32.mrb[0].mxu0
    %v3063 = vadd.f32 %v2829, %v3062
    %3064 = vmatprep.mubr.bf16.mxu0 %v2176
    %3065 = vmatmul.mubr.bf16.gmra.mrb[0].mxu0 %v2175
    %v3066 = vpop.f32.mrb[0].mxu0
    %v3067 = vadd.f32 %v2825, %v3066
    %v3068 = vpop.f32.mrb[0].mxu0
    %v3069 = vadd.f32 %v2829, %v3068
    %v3070 = vpop.f32.mrb[0].mxu0
    %v3071 = vadd.f32 %v2825, %v3070
    %v3072 = vpop.f32.mrb[0].mxu0
    %v3073 = vadd.f32 %v2829, %v3072
    %3074 = vmatprep.mubr.bf16.mxu0 %v2178
    %3075 = vmatmul.mubr.bf16.gmra.mrb[0].mxu0 %v2177
    %v3076 = vpop.f32.mrb[0].mxu0
    %v3077 = vadd.f32 %v2825, %v3076
    %v3078 = vpop.f32.mrb[0].mxu0
    %v3079 = vadd.f32 %v2829, %v3078
    %v3080 = vpop.f32.mrb[0].mxu0
    %v3081 = vadd.f32 %v2825, %v3080
    %v3082 = vpop.f32.mrb[0].mxu0
    %v3083 = vadd.f32 %v2829, %v3082
    %3084 = vmatprep.mubr.bf16.mxu0 %v2180
    %3085 = vmatmul.mubr.bf16.gmra.mrb[0].mxu0 %v2179
    %v3086 = vpop.f32.mrb[0].mxu0
    %v3087 = vadd.f32 %v2825, %v3086
    %v3088 = vpop.f32.mrb[0].mxu0
    %v3089 = vadd.f32 %v2829, %v3088
    %v3090 = vpop.f32.mrb[0].mxu0
    %v3091 = vadd.f32 %v2825, %v3090
    %v3092 = vpop.f32.mrb[0].mxu0
    %v3093 = vadd.f32 %v2829, %v3092
    %3094 = vmatprep.mubr.bf16.mxu0 %v2182
    %3095 = vmatmul.mubr.bf16.gmra.mrb[0].mxu0 %v2181
    %v3096 = vpop.f32.mrb[0].mxu0
    %v3097 = vadd.f32 %v2825, %v3096
    %v3098 = vpop.f32.mrb[0].mxu0
    %v3099 = vadd.f32 %v2829, %v3098
    %v3100 = vpop.f32.mrb[0].mxu0
    %v3101 = vadd.f32 %v2825, %v3100
    %v3102 = vpop.f32.mrb[0].mxu0
    %v3103 = vadd.f32 %v2829, %v3102
    %3104 = vmatprep.mubr.bf16.mxu0 %v2184
    %3105 = vmatmul.mubr.bf16.gmra.mrb[0].mxu0 %v2183
    %v3106 = vpop.f32.mrb[0].mxu0
    %v3107 = vadd.f32 %v2825, %v3106
    %v3108 = vpop.f32.mrb[0].mxu0
    %v3109 = vadd.f32 %v2829, %v3108
    %v3110 = vpop.f32.mrb[0].mxu0
    %v3111 = vadd.f32 %v2825, %v3110
    %v3112 = vpop.f32.mrb[0].mxu0
    %v3113 = vadd.f32 %v2829, %v3112
    %3114 = vmatprep.mubr.bf16.mxu0 %v2186
    %3115 = vmatmul.mubr.bf16.gmra.mrb[0].mxu0 %v2185
    %v3116 = vpop.f32.mrb[0].mxu0
    %v3117 = vadd.f32 %v2825, %v3116
    %v3118 = vpop.f32.mrb[0].mxu0
    %v3119 = vadd.f32 %v2829, %v3118
    %v3120 = vpop.f32.mrb[0].mxu0
    %v3121 = vadd.f32 %v2825, %v3120
    %v3122 = vpop.f32.mrb[0].mxu0
    %v3123 = vadd.f32 %v2829, %v3122
    %3124 = vmatprep.mubr.bf16.mxu0 %v2188
    %3125 = vmatmul.mubr.bf16.gmra.mrb[0].mxu0 %v2187
    %v3126 = vpop.f32.mrb[0].mxu0
    %v3127 = vadd.f32 %v2825, %v3126
    %v3128 = vpop.f32.mrb[0].mxu0
    %v3129 = vadd.f32 %v2829, %v3128
    %v3130 = vpop.f32.mrb[0].mxu0
    %v3131 = vadd.f32 %v2825, %v3130
    %v3132 = vpop.f32.mrb[0].mxu0
    %v3133 = vadd.f32 %v2829, %v3132
    %3134 = vmatprep.mubr.bf16.mxu0 %v2190
    %3135 = vmatmul.mubr.bf16.gmra.mrb[0].mxu0 %v2189
    %v3136 = vpop.f32.mrb[0].mxu0
    %v3137 = vadd.f32 %v2825, %v3136
    %v3138 = vpop.f32.mrb[0].mxu0
    %v3139 = vadd.f32 %v2829, %v3138
    %v3140 = vpop.f32.mrb[0].mxu0
    %v3141 = vadd.f32 %v2825, %v3140
    %v3142 = vpop.f32.mrb[0].mxu0
    %v3143 = vadd.f32 %v2829, %v3142
    %3144 = vmatprep.mubr.bf16.mxu0 %v2192
    %3145 = vmatmul.mubr.bf16.gmra.mrb[0].mxu0 %v2191
    %v3146 = vpop.f32.mrb[0].mxu0
    %v3147 = vadd.f32 %v2825, %v3146
    %v3148 = vpop.f32.mrb[0].mxu0
    %v3149 = vadd.f32 %v2829, %v3148
    %v3150 = vpop.f32.mrb[0].mxu0
    %v3151 = vadd.f32 %v2825, %v3150
    %v3152 = vpop.f32.mrb[0].mxu0
    %v3153 = vadd.f32 %v2829, %v3152
    %3154 = vmatprep.mubr.bf16.mxu0 %v2194
    %3155 = vmatmul.mubr.bf16.gmra.mrb[0].mxu0 %v2193
    %v3156 = vpop.f32.mrb[0].mxu0
    %v3157 = vadd.f32 %v2825, %v3156
    %v3158 = vpop.f32.mrb[0].mxu0
    %v3159 = vadd.f32 %v2829, %v3158
    %v3160 = vpop.f32.mrb[0].mxu0
    %v3161 = vadd.f32 %v2825, %v3160
    %v3162 = vpop.f32.mrb[0].mxu0
    %v3163 = vadd.f32 %v2829, %v3162
    %3164 = vmatprep.mubr.bf16.mxu0 %v2196
    %3165 = vmatmul.mubr.bf16.gmra.mrb[0].mxu0 %v2195
    %v3166 = vpop.f32.mrb[0].mxu0
    %v3167 = vadd.f32 %v2825, %v3166
    %v3168 = vpop.f32.mrb[0].mxu0
    %v3169 = vadd.f32 %v2829, %v3168
    %v3170 = vpop.f32.mrb[0].mxu0
    %v3171 = vadd.f32 %v2825, %v3170
    %v3172 = vpop.f32.mrb[0].mxu0
    %v3173 = vadd.f32 %v2829, %v3172
    %3174 = vmatprep.mubr.bf16.mxu0 %v2198
    %3175 = vmatmul.mubr.bf16.gmra.mrb[0].mxu0 %v2197
    %v3176 = vpop.f32.mrb[0].mxu0
    %v3177 = vadd.f32 %v2825, %v3176
    %v3178 = vpop.f32.mrb[0].mxu0
    %v3179 = vadd.f32 %v2829, %v3178
    %v3180 = vpop.f32.mrb[0].mxu0
    %v3181 = vadd.f32 %v2825, %v3180
    %v3182 = vpop.f32.mrb[0].mxu0
    %v3183 = vadd.f32 %v2829, %v3182
    %3184 = vmatprep.mubr.bf16.mxu0 %v2200
    %3185 = vmatmul.mubr.bf16.gmra.mrb[0].mxu0 %v2199
    %v3186 = vpop.f32.mrb[0].mxu0
    %v3187 = vadd.f32 %v2825, %v3186
    %v3188 = vpop.f32.mrb[0].mxu0
    %v3189 = vadd.f32 %v2829, %v3188
    %v3190 = vpop.f32.mrb[0].mxu0
    %v3191 = vadd.f32 %v2825, %v3190
    %v3192 = vpop.f32.mrb[0].mxu0
    %v3193 = vadd.f32 %v2829, %v3192
    %3194 = vmatprep.mubr.bf16.mxu0 %v2202
    %3195 = vmatmul.mubr.bf16.gmra.mrb[0].mxu0 %v2201
    %v3196 = vpop.f32.mrb[0].mxu0
    %v3197 = vadd.f32 %v2825, %v3196
    %v3198 = vpop.f32.mrb[0].mxu0
    %v3199 = vadd.f32 %v2829, %v3198
    %v3200 = vpop.f32.mrb[0].mxu0
    %v3201 = vadd.f32 %v2825, %v3200
    %v3202 = vpop.f32.mrb[0].mxu0
    %v3203 = vadd.f32 %v2829, %v3202
    %3204 = vmatprep.mubr.bf16.mxu0 %v2204
    %3205 = vmatmul.mubr.bf16.gmra.mrb[0].mxu0 %v2203
    %v3206 = vpop.f32.mrb[0].mxu0
    %v3207 = vadd.f32 %v2825, %v3206
    %v3208 = vpop.f32.mrb[0].mxu0
    %v3209 = vadd.f32 %v2829, %v3208
    %v3210 = vpop.f32.mrb[0].mxu0
    %v3211 = vadd.f32 %v2825, %v3210
    %v3212 = vpop.f32.mrb[0].mxu0
    %v3213 = vadd.f32 %v2829, %v3212
    %3214 = vmatprep.mubr.bf16.mxu0 %v2206
    %3215 = vmatmul.mubr.bf16.gmra.mrb[0].mxu0 %v2205
    %v3216 = vpop.f32.mrb[0].mxu0
    %v3217 = vadd.f32 %v2825, %v3216
    %v3218 = vpop.f32.mrb[0].mxu0
    %v3219 = vadd.f32 %v2829, %v3218
    %v3220 = vpop.f32.mrb[0].mxu0
    %v3221 = vadd.f32 %v2825, %v3220
    %v3222 = vpop.f32.mrb[0].mxu0
    %v3223 = vadd.f32 %v2829, %v3222
    %3224 = vmatprep.mubr.bf16.mxu0 %v2208
    %3225 = vmatmul.mubr.bf16.gmra.mrb[0].mxu0 %v2207
    %v3226 = vpop.f32.mrb[0].mxu0
    %v3227 = vadd.f32 %v2825, %v3226
    %v3228 = vpop.f32.mrb[0].mxu0
    %v3229 = vadd.f32 %v2829, %v3228
    %v3230 = vpop.f32.mrb[0].mxu0
    %v3231 = vadd.f32 %v2825, %v3230
    %v3232 = vpop.f32.mrb[0].mxu0
    %v3233 = vadd.f32 %v2829, %v3232
    %3234 = vmatprep.mubr.bf16.mxu0 %v2210
    %3235 = vmatmul.mubr.bf16.gmra.mrb[0].mxu0 %v2209
    %v3236 = vpop.f32.mrb[0].mxu0
    %v3237 = vadd.f32 %v2825, %v3236
    %v3238 = vpop.f32.mrb[0].mxu0
    %v3239 = vadd.f32 %v2829, %v3238
    %v3240 = vpop.f32.mrb[0].mxu0
    %v3241 = vadd.f32 %v2825, %v3240
    %v3242 = vpop.f32.mrb[0].mxu0
    %v3243 = vadd.f32 %v2829, %v3242
    %3244 = vmatprep.mubr.bf16.mxu0 %v2212
    %3245 = vmatmul.mubr.bf16.gmra.mrb[0].mxu0 %v2211
    %v3246 = vpop.f32.mrb[0].mxu0
    %v3247 = vadd.f32 %v2825, %v3246
    %v3248 = vpop.f32.mrb[0].mxu0
    %v3249 = vadd.f32 %v2829, %v3248
    %v3250 = vpop.f32.mrb[0].mxu0
    %v3251 = vadd.f32 %v2825, %v3250
    %v3252 = vpop.f32.mrb[0].mxu0
    %v3253 = vadd.f32 %v2829, %v3252
    %3254 = vmatprep.mubr.bf16.mxu0 %v2214
    %3255 = vmatmul.mubr.bf16.gmra.mrb[0].mxu0 %v2213
    %v3256 = vpop.f32.mrb[0].mxu0
    %v3257 = vadd.f32 %v2825, %v3256
    %v3258 = vpop.f32.mrb[0].mxu0
    %v3259 = vadd.f32 %v2829, %v3258
    %v3260 = vpop.f32.mrb[0].mxu0
    %v3261 = vadd.f32 %v2825, %v3260
    %v3262 = vpop.f32.mrb[0].mxu0
    %v3263 = vadd.f32 %v2829, %v3262
    %3264 = vdwg.mxu0
    %v3265 = vmax.f32 %v3027, 0.0
    %v3266 = vmax.f32 %v3029, 0.0
    %v3267 = vmax.f32 %v3031, 0.0
    %v3268 = vmax.f32 %v3033, 0.0
    %v3269 = vmax.f32 %v3037, 0.0
    %v3270 = vmax.f32 %v3039, 0.0
    %v3271 = vmax.f32 %v3041, 0.0
    %v3272 = vmax.f32 %v3043, 0.0
    %v3273 = vmax.f32 %v3047, 0.0
    %v3274 = vmax.f32 %v3049, 0.0
    %v3275 = vmax.f32 %v3051, 0.0
    %v3276 = vmax.f32 %v3053, 0.0
    %v3277 = vmax.f32 %v3057, 0.0
    %v3278 = vmax.f32 %v3059, 0.0
    %v3279 = vmax.f32 %v3061, 0.0
    %v3280 = vmax.f32 %v3063, 0.0
    %v3281 = vmax.f32 %v3067, 0.0
    %v3282 = vmax.f32 %v3069, 0.0
    %v3283 = vmax.f32 %v3071, 0.0
    %v3284 = vmax.f32 %v3073, 0.0
    %v3285 = vmax.f32 %v3077, 0.0
    %v3286 = vmax.f32 %v3079, 0.0
    %v3287 = vmax.f32 %v3081, 0.0
    %v3288 = vmax.f32 %v3083, 0.0
    %v3289 = vmax.f32 %v3087, 0.0
    %v3290 = vmax.f32 %v3089, 0.0
    %v3291 = vmax.f32 %v3091, 0.0
    %v3292 = vmax.f32 %v3093, 0.0
    %v3293 = vmax.f32 %v3097, 0.0
    %v3294 = vmax.f32 %v3099, 0.0
    %v3295 = vmax.f32 %v3101, 0.0
    %v3296 = vmax.f32 %v3103, 0.0
    %v3297 = vmax.f32 %v3107, 0.0
    %v3298 = vmax.f32 %v3109, 0.0
    %v3299 = vmax.f32 %v3111, 0.0
    %v3300 = vmax.f32 %v3113, 0.0
    %v3301 = vmax.f32 %v3117, 0.0
    %v3302 = vmax.f32 %v3119, 0.0
    %v3303 = vmax.f32 %v3121, 0.0
    %v3304 = vmax.f32 %v3123, 0.0
    %v3305 = vmax.f32 %v3127, 0.0
    %v3306 = vmax.f32 %v3129, 0.0
    %v3307 = vmax.f32 %v3131, 0.0
    %v3308 = vmax.f32 %v3133, 0.0
    %v3309 = vmax.f32 %v3137, 0.0
    %v3310 = vmax.f32 %v3139, 0.0
    %v3311 = vmax.f32 %v3141, 0.0
    %v3312 = vmax.f32 %v3143, 0.0
    %v3313 = vmax.f32 %v3147, 0.0
    %v3314 = vmax.f32 %v3149, 0.0
    %v3315 = vmax.f32 %v3151, 0.0
    %v3316 = vmax.f32 %v3153, 0.0
    %v3317 = vmax.f32 %v3157, 0.0
    %v3318 = vmax.f32 %v3159, 0.0
    %v3319 = vmax.f32 %v3161, 0.0
    %v3320 = vmax.f32 %v3163, 0.0
    %v3321 = vmax.f32 %v3167, 0.0
    %v3322 = vmax.f32 %v3169, 0.0
    %v3323 = vmax.f32 %v3171, 0.0
    %v3324 = vmax.f32 %v3173, 0.0
    %v3325 = vmax.f32 %v3177, 0.0
    %v3326 = vmax.f32 %v3179, 0.0
    %v3327 = vmax.f32 %v3181, 0.0
    %v3328 = vmax.f32 %v3183, 0.0
    %v3329 = vmax.f32 %v3187, 0.0
    %v3330 = vmax.f32 %v3189, 0.0
    %v3331 = vmax.f32 %v3191, 0.0
    %v3332 = vmax.f32 %v3193, 0.0
    %v3333 = vmax.f32 %v3197, 0.0
    %v3334 = vmax.f32 %v3199, 0.0
    %v3335 = vmax.f32 %v3201, 0.0
    %v3336 = vmax.f32 %v3203, 0.0
    %v3337 = vmax.f32 %v3207, 0.0
    %v3338 = vmax.f32 %v3209, 0.0
    %v3339 = vmax.f32 %v3211, 0.0
    %v3340 = vmax.f32 %v3213, 0.0
    %v3341 = vmax.f32 %v3217, 0.0
    %v3342 = vmax.f32 %v3219, 0.0
    %v3343 = vmax.f32 %v3221, 0.0
    %v3344 = vmax.f32 %v3223, 0.0
    %v3345 = vmax.f32 %v3227, 0.0
    %v3346 = vmax.f32 %v3229, 0.0
    %v3347 = vmax.f32 %v3231, 0.0
    %v3348 = vmax.f32 %v3233, 0.0
    %v3349 = vmax.f32 %v3237, 0.0
    %v3350 = vmax.f32 %v3239, 0.0
    %v3351 = vmax.f32 %v3241, 0.0
    %v3352 = vmax.f32 %v3243, 0.0
    %v3353 = vmax.f32 %v3247, 0.0
    %v3354 = vmax.f32 %v3249, 0.0
    %v3355 = vmax.f32 %v3251, 0.0
    %v3356 = vmax.f32 %v3253, 0.0
    %v3357 = vmax.f32 %v3257, 0.0
    %v3358 = vmax.f32 %v3259, 0.0
    %v3359 = vmax.f32 %v3261, 0.0
    %v3360 = vmax.f32 %v3263, 0.0
    %v3361 = vld [vmem:[%s9] sm:$0x3]
    %v3363 = vlaneseq
    %v3364 = vshrl.u32 %v3363, 7
    %v3365 = vsub.s32 0, %v3364
    %v3366 = vrot.slane %v3361, %v3365
    %v3367 = vlaneseq
    %v3368 = vshrl.u32 %v3367, 7
    %v3369 = vsub.s32 1, %v3368
    %v3370 = vrot.slane %v3361, %v3369
    %v3373 = vmul.f32 %v2692, %v3366
    %v3374 = vmul.f32 %v2693, %v3370
    %v3375 = vmul.f32 %v2694, %v3366
    %v3376 = vmul.f32 %v2695, %v3370
    %v3377 = vmul.f32 %v2696, %v3366
    %v3378 = vmul.f32 %v2697, %v3370
    %v3379 = vmul.f32 %v2698, %v3366
    %v3380 = vmul.f32 %v2699, %v3370
    %v3381 = vmul.f32 %v2700, %v3366
    %v3382 = vmul.f32 %v2701, %v3370
    %v3383 = vmul.f32 %v2702, %v3366
    %v3384 = vmul.f32 %v2703, %v3370
    %v3385 = vmul.f32 %v2704, %v3366
    %v3386 = vmul.f32 %v2705, %v3370
    %v3387 = vmul.f32 %v2706, %v3366
    %v3388 = vmul.f32 %v2707, %v3370
    %v3389 = vmul.f32 %v2708, %v3366
    %v3390 = vmul.f32 %v2709, %v3370
    %v3391 = vmul.f32 %v2710, %v3366
    %v3392 = vmul.f32 %v2711, %v3370
    %v3393 = vmul.f32 %v2712, %v3366
    %v3394 = vmul.f32 %v2713, %v3370
    %v3395 = vmul.f32 %v2714, %v3366
    %v3396 = vmul.f32 %v2715, %v3370
    %v3397 = vmul.f32 %v2716, %v3366
    %v3398 = vmul.f32 %v2717, %v3370
    %v3399 = vmul.f32 %v2718, %v3366
    %v3400 = vmul.f32 %v2719, %v3370
    %v3401 = vmul.f32 %v2720, %v3366
    %v3402 = vmul.f32 %v2721, %v3370
    %v3403 = vmul.f32 %v2722, %v3366
    %v3404 = vmul.f32 %v2723, %v3370
    %v3405 = vmul.f32 %v2724, %v3366
    %v3406 = vmul.f32 %v2725, %v3370
    %v3407 = vmul.f32 %v2726, %v3366
    %v3408 = vmul.f32 %v2727, %v3370
    %v3409 = vmul.f32 %v2728, %v3366
    %v3410 = vmul.f32 %v2729, %v3370
    %v3411 = vmul.f32 %v2730, %v3366
    %v3412 = vmul.f32 %v2731, %v3370
    %v3413 = vmul.f32 %v2732, %v3366
    %v3414 = vmul.f32 %v2733, %v3370
    %v3415 = vmul.f32 %v2734, %v3366
    %v3416 = vmul.f32 %v2735, %v3370
    %v3417 = vmul.f32 %v2736, %v3366
    %v3418 = vmul.f32 %v2737, %v3370
    %v3419 = vmul.f32 %v2738, %v3366
    %v3420 = vmul.f32 %v2739, %v3370
    %v3421 = vmul.f32 %v2740, %v3366
    %v3422 = vmul.f32 %v2741, %v3370
    %v3423 = vmul.f32 %v2742, %v3366
    %v3424 = vmul.f32 %v2743, %v3370
    %v3425 = vmul.f32 %v2744, %v3366
    %v3426 = vmul.f32 %v2745, %v3370
    %v3427 = vmul.f32 %v2746, %v3366
    %v3428 = vmul.f32 %v2747, %v3370
    %v3429 = vmul.f32 %v2748, %v3366
    %v3430 = vmul.f32 %v2749, %v3370
    %v3431 = vmul.f32 %v2750, %v3366
    %v3432 = vmul.f32 %v2751, %v3370
    %v3433 = vmul.f32 %v2752, %v3366
    %v3434 = vmul.f32 %v2753, %v3370
    %v3435 = vmul.f32 %v2754, %v3366
    %v3436 = vmul.f32 %v2755, %v3370
    %v3437 = vmul.f32 %v2756, %v3366
    %v3438 = vmul.f32 %v2757, %v3370
    %v3439 = vmul.f32 %v2758, %v3366
    %v3440 = vmul.f32 %v2759, %v3370
    %v3441 = vmul.f32 %v2760, %v3366
    %v3442 = vmul.f32 %v2761, %v3370
    %v3443 = vmul.f32 %v2762, %v3366
    %v3444 = vmul.f32 %v2763, %v3370
    %v3445 = vmul.f32 %v2764, %v3366
    %v3446 = vmul.f32 %v2765, %v3370
    %v3447 = vmul.f32 %v2766, %v3366
    %v3448 = vmul.f32 %v2767, %v3370
    %v3449 = vmul.f32 %v2768, %v3366
    %v3450 = vmul.f32 %v2769, %v3370
    %v3451 = vmul.f32 %v2770, %v3366
    %v3452 = vmul.f32 %v2771, %v3370
    %v3453 = vmul.f32 %v2772, %v3366
    %v3454 = vmul.f32 %v2773, %v3370
    %v3455 = vmul.f32 %v2774, %v3366
    %v3456 = vmul.f32 %v2775, %v3370
    %v3457 = vmul.f32 %v2776, %v3366
    %v3458 = vmul.f32 %v2777, %v3370
    %v3459 = vmul.f32 %v2778, %v3366
    %v3460 = vmul.f32 %v2779, %v3370
    %v3461 = vmul.f32 %v2780, %v3366
    %v3462 = vmul.f32 %v2781, %v3370
    %v3463 = vmul.f32 %v2782, %v3366
    %v3464 = vmul.f32 %v2783, %v3370
    %v3465 = vmul.f32 %v2784, %v3366
    %v3466 = vmul.f32 %v2785, %v3370
    %v3467 = vmul.f32 %v2786, %v3366
    %v3468 = vmul.f32 %v2787, %v3370
    %v3469 = vadd.f32 %v3373, %v3374
    %3470 = vadd.xlane.f32.xlu0 %v3469
    %v3471 = vpop.xlane.xlu0 %3470
    %v3472 = vadd.f32 %v3375, %v3376
    %3473 = vadd.xlane.f32.xlu0 %v3472
    %v3474 = vpop.xlane.xlu0 %3473
    %v3475 = vadd.f32 %v3377, %v3378
    %3476 = vadd.xlane.f32.xlu0 %v3475
    %v3477 = vpop.xlane.xlu0 %3476
    %v3478 = vadd.f32 %v3379, %v3380
    %3479 = vadd.xlane.f32.xlu0 %v3478
    %v3480 = vpop.xlane.xlu0 %3479
    %v3481 = vadd.f32 %v3381, %v3382
    %3482 = vadd.xlane.f32.xlu0 %v3481
    %v3483 = vpop.xlane.xlu0 %3482
    %v3484 = vadd.f32 %v3383, %v3384
    %3485 = vadd.xlane.f32.xlu0 %v3484
    %v3486 = vpop.xlane.xlu0 %3485
    %v3487 = vadd.f32 %v3385, %v3386
    %3488 = vadd.xlane.f32.xlu0 %v3487
    %v3489 = vpop.xlane.xlu0 %3488
    %v3490 = vadd.f32 %v3387, %v3388
    %3491 = vadd.xlane.f32.xlu0 %v3490
    %v3492 = vpop.xlane.xlu0 %3491
    %v3493 = vadd.f32 %v3389, %v3390
    %3494 = vadd.xlane.f32.xlu0 %v3493
    %v3495 = vpop.xlane.xlu0 %3494
    %v3496 = vadd.f32 %v3391, %v3392
    %3497 = vadd.xlane.f32.xlu0 %v3496
    %v3498 = vpop.xlane.xlu0 %3497
    %v3499 = vadd.f32 %v3393, %v3394
    %3500 = vadd.xlane.f32.xlu0 %v3499
    %v3501 = vpop.xlane.xlu0 %3500
    %v3502 = vadd.f32 %v3395, %v3396
    %3503 = vadd.xlane.f32.xlu0 %v3502
    %v3504 = vpop.xlane.xlu0 %3503
    %v3505 = vadd.f32 %v3397, %v3398
    %3506 = vadd.xlane.f32.xlu0 %v3505
    %v3507 = vpop.xlane.xlu0 %3506
    %v3508 = vadd.f32 %v3399, %v3400
    %3509 = vadd.xlane.f32.xlu0 %v3508
    %v3510 = vpop.xlane.xlu0 %3509
    %v3511 = vadd.f32 %v3401, %v3402
    %3512 = vadd.xlane.f32.xlu0 %v3511
    %v3513 = vpop.xlane.xlu0 %3512
    %v3514 = vadd.f32 %v3403, %v3404
    %3515 = vadd.xlane.f32.xlu0 %v3514
    %v3516 = vpop.xlane.xlu0 %3515
    %v3517 = vadd.f32 %v3405, %v3406
    %3518 = vadd.xlane.f32.xlu0 %v3517
    %v3519 = vpop.xlane.xlu0 %3518
    %v3520 = vadd.f32 %v3407, %v3408
    %3521 = vadd.xlane.f32.xlu0 %v3520
    %v3522 = vpop.xlane.xlu0 %3521
    %v3523 = vadd.f32 %v3409, %v3410
    %3524 = vadd.xlane.f32.xlu0 %v3523
    %v3525 = vpop.xlane.xlu0 %3524
    %v3526 = vadd.f32 %v3411, %v3412
    %3527 = vadd.xlane.f32.xlu0 %v3526
    %v3528 = vpop.xlane.xlu0 %3527
    %v3529 = vadd.f32 %v3413, %v3414
    %3530 = vadd.xlane.f32.xlu0 %v3529
    %v3531 = vpop.xlane.xlu0 %3530
    %v3532 = vadd.f32 %v3415, %v3416
    %3533 = vadd.xlane.f32.xlu0 %v3532
    %v3534 = vpop.xlane.xlu0 %3533
    %v3535 = vadd.f32 %v3417, %v3418
    %3536 = vadd.xlane.f32.xlu0 %v3535
    %v3537 = vpop.xlane.xlu0 %3536
    %v3538 = vadd.f32 %v3419, %v3420
    %3539 = vadd.xlane.f32.xlu0 %v3538
    %v3540 = vpop.xlane.xlu0 %3539
    %v3541 = vadd.f32 %v3421, %v3422
    %3542 = vadd.xlane.f32.xlu0 %v3541
    %v3543 = vpop.xlane.xlu0 %3542
    %v3544 = vadd.f32 %v3423, %v3424
    %3545 = vadd.xlane.f32.xlu0 %v3544
    %v3546 = vpop.xlane.xlu0 %3545
    %v3547 = vadd.f32 %v3425, %v3426
    %3548 = vadd.xlane.f32.xlu0 %v3547
    %v3549 = vpop.xlane.xlu0 %3548
    %v3550 = vadd.f32 %v3427, %v3428
    %3551 = vadd.xlane.f32.xlu0 %v3550
    %v3552 = vpop.xlane.xlu0 %3551
    %v3553 = vadd.f32 %v3429, %v3430
    %3554 = vadd.xlane.f32.xlu0 %v3553
    %v3555 = vpop.xlane.xlu0 %3554
    %v3556 = vadd.f32 %v3431, %v3432
    %3557 = vadd.xlane.f32.xlu0 %v3556
    %v3558 = vpop.xlane.xlu0 %3557
    %v3559 = vadd.f32 %v3433, %v3434
    %3560 = vadd.xlane.f32.xlu0 %v3559
    %v3561 = vpop.xlane.xlu0 %3560
    %v3562 = vadd.f32 %v3435, %v3436
    %3563 = vadd.xlane.f32.xlu0 %v3562
    %v3564 = vpop.xlane.xlu0 %3563
    %v3565 = vadd.f32 %v3437, %v3438
    %3566 = vadd.xlane.f32.xlu0 %v3565
    %v3567 = vpop.xlane.xlu0 %3566
    %v3568 = vadd.f32 %v3439, %v3440
    %3569 = vadd.xlane.f32.xlu0 %v3568
    %v3570 = vpop.xlane.xlu0 %3569
    %v3571 = vadd.f32 %v3441, %v3442
    %3572 = vadd.xlane.f32.xlu0 %v3571
    %v3573 = vpop.xlane.xlu0 %3572
    %v3574 = vadd.f32 %v3443, %v3444
    %3575 = vadd.xlane.f32.xlu0 %v3574
    %v3576 = vpop.xlane.xlu0 %3575
    %v3577 = vadd.f32 %v3445, %v3446
    %3578 = vadd.xlane.f32.xlu0 %v3577
    %v3579 = vpop.xlane.xlu0 %3578
    %v3580 = vadd.f32 %v3447, %v3448
    %3581 = vadd.xlane.f32.xlu0 %v3580
    %v3582 = vpop.xlane.xlu0 %3581
    %v3583 = vadd.f32 %v3449, %v3450
    %3584 = vadd.xlane.f32.xlu0 %v3583
    %v3585 = vpop.xlane.xlu0 %3584
    %v3586 = vadd.f32 %v3451, %v3452
    %3587 = vadd.xlane.f32.xlu0 %v3586
    %v3588 = vpop.xlane.xlu0 %3587
    %v3589 = vadd.f32 %v3453, %v3454
    %3590 = vadd.xlane.f32.xlu0 %v3589
    %v3591 = vpop.xlane.xlu0 %3590
    %v3592 = vadd.f32 %v3455, %v3456
    %3593 = vadd.xlane.f32.xlu0 %v3592
    %v3594 = vpop.xlane.xlu0 %3593
    %v3595 = vadd.f32 %v3457, %v3458
    %3596 = vadd.xlane.f32.xlu0 %v3595
    %v3597 = vpop.xlane.xlu0 %3596
    %v3598 = vadd.f32 %v3459, %v3460
    %3599 = vadd.xlane.f32.xlu0 %v3598
    %v3600 = vpop.xlane.xlu0 %3599
    %v3601 = vadd.f32 %v3461, %v3462
    %3602 = vadd.xlane.f32.xlu0 %v3601
    %v3603 = vpop.xlane.xlu0 %3602
    %v3604 = vadd.f32 %v3463, %v3464
    %3605 = vadd.xlane.f32.xlu0 %v3604
    %v3606 = vpop.xlane.xlu0 %3605
    %v3607 = vadd.f32 %v3465, %v3466
    %3608 = vadd.xlane.f32.xlu0 %v3607
    %v3609 = vpop.xlane.xlu0 %3608
    %v3610 = vadd.f32 %v3467, %v3468
    %3611 = vadd.xlane.f32.xlu0 %v3610
    %v3612 = vpop.xlane.xlu0 %3611
    %v3613 = vld [vmem:[#allocation2] sm:$0x1]
    %v3615 = vlaneseq
    %v3616 = vshrl.u32 %v3615, 7
    %v3617 = vsub.s32 0, %v3616
    %v3618 = vrot.slane %v3613, %v3617
    %v3620 = vadd.f32 %v3471, %v3618
    %v3621 = vadd.f32 %v3474, %v3618
    %v3622 = vadd.f32 %v3477, %v3618
    %v3623 = vadd.f32 %v3480, %v3618
    %v3624 = vadd.f32 %v3483, %v3618
    %v3625 = vadd.f32 %v3486, %v3618
    %v3626 = vadd.f32 %v3489, %v3618
    %v3627 = vadd.f32 %v3492, %v3618
    %v3628 = vadd.f32 %v3495, %v3618
    %v3629 = vadd.f32 %v3498, %v3618
    %v3630 = vadd.f32 %v3501, %v3618
    %v3631 = vadd.f32 %v3504, %v3618
    %v3632 = vadd.f32 %v3507, %v3618
    %v3633 = vadd.f32 %v3510, %v3618
    %v3634 = vadd.f32 %v3513, %v3618
    %v3635 = vadd.f32 %v3516, %v3618
    %v3636 = vadd.f32 %v3519, %v3618
    %v3637 = vadd.f32 %v3522, %v3618
    %v3638 = vadd.f32 %v3525, %v3618
    %v3639 = vadd.f32 %v3528, %v3618
    %v3640 = vadd.f32 %v3531, %v3618
    %v3641 = vadd.f32 %v3534, %v3618
    %v3642 = vadd.f32 %v3537, %v3618
    %v3643 = vadd.f32 %v3540, %v3618
    %v3644 = vadd.f32 %v3543, %v3618
    %v3645 = vadd.f32 %v3546, %v3618
    %v3646 = vadd.f32 %v3549, %v3618
    %v3647 = vadd.f32 %v3552, %v3618
    %v3648 = vadd.f32 %v3555, %v3618
    %v3649 = vadd.f32 %v3558, %v3618
    %v3650 = vadd.f32 %v3561, %v3618
    %v3651 = vadd.f32 %v3564, %v3618
    %v3652 = vadd.f32 %v3567, %v3618
    %v3653 = vadd.f32 %v3570, %v3618
    %v3654 = vadd.f32 %v3573, %v3618
    %v3655 = vadd.f32 %v3576, %v3618
    %v3656 = vadd.f32 %v3579, %v3618
    %v3657 = vadd.f32 %v3582, %v3618
    %v3658 = vadd.f32 %v3585, %v3618
    %v3659 = vadd.f32 %v3588, %v3618
    %v3660 = vadd.f32 %v3591, %v3618
    %v3661 = vadd.f32 %v3594, %v3618
    %v3662 = vadd.f32 %v3597, %v3618
    %v3663 = vadd.f32 %v3600, %v3618
    %v3664 = vadd.f32 %v3603, %v3618
    %v3665 = vadd.f32 %v3606, %v3618
    %v3666 = vadd.f32 %v3609, %v3618
    %v3667 = vadd.f32 %v3612, %v3618
    %v3668 = vld [vmem:[%s11] sm:$0x3]
    %v3670 = vlaneseq
    %v3671 = vshrl.u32 %v3670, 7
    %v3672 = vsub.s32 0, %v3671
    %v3673 = vrot.slane %v3668, %v3672
    %v3674 = vlaneseq
    %v3675 = vshrl.u32 %v3674, 7
    %v3676 = vsub.s32 1, %v3675
    %v3677 = vrot.slane %v3668, %v3676
    %v3680 = vmul.f32 %v3265, %v3673
    %v3681 = vmul.f32 %v3266, %v3677
    %v3682 = vmul.f32 %v3267, %v3673
    %v3683 = vmul.f32 %v3268, %v3677
    %v3684 = vmul.f32 %v3269, %v3673
    %v3685 = vmul.f32 %v3270, %v3677
    %v3686 = vmul.f32 %v3271, %v3673
    %v3687 = vmul.f32 %v3272, %v3677
    %v3688 = vmul.f32 %v3273, %v3673
    %v3689 = vmul.f32 %v3274, %v3677
    %v3690 = vmul.f32 %v3275, %v3673
    %v3691 = vmul.f32 %v3276, %v3677
    %v3692 = vmul.f32 %v3277, %v3673
    %v3693 = vmul.f32 %v3278, %v3677
    %v3694 = vmul.f32 %v3279, %v3673
    %v3695 = vmul.f32 %v3280, %v3677
    %v3696 = vmul.f32 %v3281, %v3673
    %v3697 = vmul.f32 %v3282, %v3677
    %v3698 = vmul.f32 %v3283, %v3673
    %v3699 = vmul.f32 %v3284, %v3677
    %v3700 = vmul.f32 %v3285, %v3673
    %v3701 = vmul.f32 %v3286, %v3677
    %v3702 = vmul.f32 %v3287, %v3673
    %v3703 = vmul.f32 %v3288, %v3677
    %v3704 = vmul.f32 %v3289, %v3673
    %v3705 = vmul.f32 %v3290, %v3677
    %v3706 = vmul.f32 %v3291, %v3673
    %v3707 = vmul.f32 %v3292, %v3677
    %v3708 = vmul.f32 %v3293, %v3673
    %v3709 = vmul.f32 %v3294, %v3677
    %v3710 = vmul.f32 %v3295, %v3673
    %v3711 = vmul.f32 %v3296, %v3677
    %v3712 = vmul.f32 %v3297, %v3673
    %v3713 = vmul.f32 %v3298, %v3677
    %v3714 = vmul.f32 %v3299, %v3673
    %v3715 = vmul.f32 %v3300, %v3677
    %v3716 = vmul.f32 %v3301, %v3673
    %v3717 = vmul.f32 %v3302, %v3677
    %v3718 = vmul.f32 %v3303, %v3673
    %v3719 = vmul.f32 %v3304, %v3677
    %v3720 = vmul.f32 %v3305, %v3673
    %v3721 = vmul.f32 %v3306, %v3677
    %v3722 = vmul.f32 %v3307, %v3673
    %v3723 = vmul.f32 %v3308, %v3677
    %v3724 = vmul.f32 %v3309, %v3673
    %v3725 = vmul.f32 %v3310, %v3677
    %v3726 = vmul.f32 %v3311, %v3673
    %v3727 = vmul.f32 %v3312, %v3677
    %v3728 = vmul.f32 %v3313, %v3673
    %v3729 = vmul.f32 %v3314, %v3677
    %v3730 = vmul.f32 %v3315, %v3673
    %v3731 = vmul.f32 %v3316, %v3677
    %v3732 = vmul.f32 %v3317, %v3673
    %v3733 = vmul.f32 %v3318, %v3677
    %v3734 = vmul.f32 %v3319, %v3673
    %v3735 = vmul.f32 %v3320, %v3677
    %v3736 = vmul.f32 %v3321, %v3673
    %v3737 = vmul.f32 %v3322, %v3677
    %v3738 = vmul.f32 %v3323, %v3673
    %v3739 = vmul.f32 %v3324, %v3677
    %v3740 = vmul.f32 %v3325, %v3673
    %v3741 = vmul.f32 %v3326, %v3677
    %v3742 = vmul.f32 %v3327, %v3673
    %v3743 = vmul.f32 %v3328, %v3677
    %v3744 = vmul.f32 %v3329, %v3673
    %v3745 = vmul.f32 %v3330, %v3677
    %v3746 = vmul.f32 %v3331, %v3673
    %v3747 = vmul.f32 %v3332, %v3677
    %v3748 = vmul.f32 %v3333, %v3673
    %v3749 = vmul.f32 %v3334, %v3677
    %v3750 = vmul.f32 %v3335, %v3673
    %v3751 = vmul.f32 %v3336, %v3677
    %v3752 = vmul.f32 %v3337, %v3673
    %v3753 = vmul.f32 %v3338, %v3677
    %v3754 = vmul.f32 %v3339, %v3673
    %v3755 = vmul.f32 %v3340, %v3677
    %v3756 = vmul.f32 %v3341, %v3673
    %v3757 = vmul.f32 %v3342, %v3677
    %v3758 = vmul.f32 %v3343, %v3673
    %v3759 = vmul.f32 %v3344, %v3677
    %v3760 = vmul.f32 %v3345, %v3673
    %v3761 = vmul.f32 %v3346, %v3677
    %v3762 = vmul.f32 %v3347, %v3673
    %v3763 = vmul.f32 %v3348, %v3677
    %v3764 = vmul.f32 %v3349, %v3673
    %v3765 = vmul.f32 %v3350, %v3677
    %v3766 = vmul.f32 %v3351, %v3673
    %v3767 = vmul.f32 %v3352, %v3677
    %v3768 = vmul.f32 %v3353, %v3673
    %v3769 = vmul.f32 %v3354, %v3677
    %v3770 = vmul.f32 %v3355, %v3673
    %v3771 = vmul.f32 %v3356, %v3677
    %v3772 = vmul.f32 %v3357, %v3673
    %v3773 = vmul.f32 %v3358, %v3677
    %v3774 = vmul.f32 %v3359, %v3673
    %v3775 = vmul.f32 %v3360, %v3677
    %v3776 = vadd.f32 %v3680, %v3681
    %3777 = vadd.xlane.f32.xlu0 %v3776
    %v3778 = vpop.xlane.xlu0 %3777
    %v3779 = vadd.f32 %v3682, %v3683
    %3780 = vadd.xlane.f32.xlu0 %v3779
    %v3781 = vpop.xlane.xlu0 %3780
    %v3782 = vadd.f32 %v3684, %v3685
    %3783 = vadd.xlane.f32.xlu0 %v3782
    %v3784 = vpop.xlane.xlu0 %3783
    %v3785 = vadd.f32 %v3686, %v3687
    %3786 = vadd.xlane.f32.xlu0 %v3785
    %v3787 = vpop.xlane.xlu0 %3786
    %v3788 = vadd.f32 %v3688, %v3689
    %3789 = vadd.xlane.f32.xlu0 %v3788
    %v3790 = vpop.xlane.xlu0 %3789
    %v3791 = vadd.f32 %v3690, %v3691
    %3792 = vadd.xlane.f32.xlu0 %v3791
    %v3793 = vpop.xlane.xlu0 %3792
    %v3794 = vadd.f32 %v3692, %v3693
    %3795 = vadd.xlane.f32.xlu0 %v3794
    %v3796 = vpop.xlane.xlu0 %3795
    %v3797 = vadd.f32 %v3694, %v3695
    %3798 = vadd.xlane.f32.xlu0 %v3797
    %v3799 = vpop.xlane.xlu0 %3798
    %v3800 = vadd.f32 %v3696, %v3697
    %3801 = vadd.xlane.f32.xlu0 %v3800
    %v3802 = vpop.xlane.xlu0 %3801
    %v3803 = vadd.f32 %v3698, %v3699
    %3804 = vadd.xlane.f32.xlu0 %v3803
    %v3805 = vpop.xlane.xlu0 %3804
    %v3806 = vadd.f32 %v3700, %v3701
    %3807 = vadd.xlane.f32.xlu0 %v3806
    %v3808 = vpop.xlane.xlu0 %3807
    %v3809 = vadd.f32 %v3702, %v3703
    %3810 = vadd.xlane.f32.xlu0 %v3809
    %v3811 = vpop.xlane.xlu0 %3810
    %v3812 = vadd.f32 %v3704, %v3705
    %3813 = vadd.xlane.f32.xlu0 %v3812
    %v3814 = vpop.xlane.xlu0 %3813
    %v3815 = vadd.f32 %v3706, %v3707
    %3816 = vadd.xlane.f32.xlu0 %v3815
    %v3817 = vpop.xlane.xlu0 %3816
    %v3818 = vadd.f32 %v3708, %v3709
    %3819 = vadd.xlane.f32.xlu0 %v3818
    %v3820 = vpop.xlane.xlu0 %3819
    %v3821 = vadd.f32 %v3710, %v3711
    %3822 = vadd.xlane.f32.xlu0 %v3821
    %v3823 = vpop.xlane.xlu0 %3822
    %v3824 = vadd.f32 %v3712, %v3713
    %3825 = vadd.xlane.f32.xlu0 %v3824
    %v3826 = vpop.xlane.xlu0 %3825
    %v3827 = vadd.f32 %v3714, %v3715
    %3828 = vadd.xlane.f32.xlu0 %v3827
    %v3829 = vpop.xlane.xlu0 %3828
    %v3830 = vadd.f32 %v3716, %v3717
    %3831 = vadd.xlane.f32.xlu0 %v3830
    %v3832 = vpop.xlane.xlu0 %3831
    %v3833 = vadd.f32 %v3718, %v3719
    %3834 = vadd.xlane.f32.xlu0 %v3833
    %v3835 = vpop.xlane.xlu0 %3834
    %v3836 = vadd.f32 %v3720, %v3721
    %3837 = vadd.xlane.f32.xlu0 %v3836
    %v3838 = vpop.xlane.xlu0 %3837
    %v3839 = vadd.f32 %v3722, %v3723
    %3840 = vadd.xlane.f32.xlu0 %v3839
    %v3841 = vpop.xlane.xlu0 %3840
    %v3842 = vadd.f32 %v3724, %v3725
    %3843 = vadd.xlane.f32.xlu0 %v3842
    %v3844 = vpop.xlane.xlu0 %3843
    %v3845 = vadd.f32 %v3726, %v3727
    %3846 = vadd.xlane.f32.xlu0 %v3845
    %v3847 = vpop.xlane.xlu0 %3846
    %v3848 = vadd.f32 %v3728, %v3729
    %3849 = vadd.xlane.f32.xlu0 %v3848
    %v3850 = vpop.xlane.xlu0 %3849
    %v3851 = vadd.f32 %v3730, %v3731
    %3852 = vadd.xlane.f32.xlu0 %v3851
    %v3853 = vpop.xlane.xlu0 %3852
    %v3854 = vadd.f32 %v3732, %v3733
    %3855 = vadd.xlane.f32.xlu0 %v3854
    %v3856 = vpop.xlane.xlu0 %3855
    %v3857 = vadd.f32 %v3734, %v3735
    %3858 = vadd.xlane.f32.xlu0 %v3857
    %v3859 = vpop.xlane.xlu0 %3858
    %v3860 = vadd.f32 %v3736, %v3737
    %3861 = vadd.xlane.f32.xlu0 %v3860
    %v3862 = vpop.xlane.xlu0 %3861
    %v3863 = vadd.f32 %v3738, %v3739
    %3864 = vadd.xlane.f32.xlu0 %v3863
    %v3865 = vpop.xlane.xlu0 %3864
    %v3866 = vadd.f32 %v3740, %v3741
    %3867 = vadd.xlane.f32.xlu0 %v3866
    %v3868 = vpop.xlane.xlu0 %3867
    %v3869 = vadd.f32 %v3742, %v3743
    %3870 = vadd.xlane.f32.xlu0 %v3869
    %v3871 = vpop.xlane.xlu0 %3870
    %v3872 = vadd.f32 %v3744, %v3745
    %3873 = vadd.xlane.f32.xlu0 %v3872
    %v3874 = vpop.xlane.xlu0 %3873
    %v3875 = vadd.f32 %v3746, %v3747
    %3876 = vadd.xlane.f32.xlu0 %v3875
    %v3877 = vpop.xlane.xlu0 %3876
    %v3878 = vadd.f32 %v3748, %v3749
    %3879 = vadd.xlane.f32.xlu0 %v3878
    %v3880 = vpop.xlane.xlu0 %3879
    %v3881 = vadd.f32 %v3750, %v3751
    %3882 = vadd.xlane.f32.xlu0 %v3881
    %v3883 = vpop.xlane.xlu0 %3882
    %v3884 = vadd.f32 %v3752, %v3753
    %3885 = vadd.xlane.f32.xlu0 %v3884
    %v3886 = vpop.xlane.xlu0 %3885
    %v3887 = vadd.f32 %v3754, %v3755
    %3888 = vadd.xlane.f32.xlu0 %v3887
    %v3889 = vpop.xlane.xlu0 %3888
    %v3890 = vadd.f32 %v3756, %v3757
    %3891 = vadd.xlane.f32.xlu0 %v3890
    %v3892 = vpop.xlane.xlu0 %3891
    %v3893 = vadd.f32 %v3758, %v3759
    %3894 = vadd.xlane.f32.xlu0 %v3893
    %v3895 = vpop.xlane.xlu0 %3894
    %v3896 = vadd.f32 %v3760, %v3761
    %3897 = vadd.xlane.f32.xlu0 %v3896
    %v3898 = vpop.xlane.xlu0 %3897
    %v3899 = vadd.f32 %v3762, %v3763
    %3900 = vadd.xlane.f32.xlu0 %v3899
    %v3901 = vpop.xlane.xlu0 %3900
    %v3902 = vadd.f32 %v3764, %v3765
    %3903 = vadd.xlane.f32.xlu0 %v3902
    %v3904 = vpop.xlane.xlu0 %3903
    %v3905 = vadd.f32 %v3766, %v3767
    %3906 = vadd.xlane.f32.xlu0 %v3905
    %v3907 = vpop.xlane.xlu0 %3906
    %v3908 = vadd.f32 %v3768, %v3769
    %3909 = vadd.xlane.f32.xlu0 %v3908
    %v3910 = vpop.xlane.xlu0 %3909
    %v3911 = vadd.f32 %v3770, %v3771
    %3912 = vadd.xlane.f32.xlu0 %v3911
    %v3913 = vpop.xlane.xlu0 %3912
    %v3914 = vadd.f32 %v3772, %v3773
    %3915 = vadd.xlane.f32.xlu0 %v3914
    %v3916 = vpop.xlane.xlu0 %3915
    %v3917 = vadd.f32 %v3774, %v3775
    %3918 = vadd.xlane.f32.xlu0 %v3917
    %v3919 = vpop.xlane.xlu0 %3918
    %v3920 = vld [vmem:[#allocation3] sm:$0x1]
    %v3922 = vlaneseq
    %v3923 = vshrl.u32 %v3922, 7
    %v3924 = vsub.s32 0, %v3923
    %v3925 = vrot.slane %v3920, %v3924
    %v3927 = vadd.f32 %v3778, %v3925
    %v3928 = vadd.f32 %v3781, %v3925
    %v3929 = vadd.f32 %v3784, %v3925
    %v3930 = vadd.f32 %v3787, %v3925
    %v3931 = vadd.f32 %v3790, %v3925
    %v3932 = vadd.f32 %v3793, %v3925
    %v3933 = vadd.f32 %v3796, %v3925
    %v3934 = vadd.f32 %v3799, %v3925
    %v3935 = vadd.f32 %v3802, %v3925
    %v3936 = vadd.f32 %v3805, %v3925
    %v3937 = vadd.f32 %v3808, %v3925
    %v3938 = vadd.f32 %v3811, %v3925
    %v3939 = vadd.f32 %v3814, %v3925
    %v3940 = vadd.f32 %v3817, %v3925
    %v3941 = vadd.f32 %v3820, %v3925
    %v3942 = vadd.f32 %v3823, %v3925
    %v3943 = vadd.f32 %v3826, %v3925
    %v3944 = vadd.f32 %v3829, %v3925
    %v3945 = vadd.f32 %v3832, %v3925
    %v3946 = vadd.f32 %v3835, %v3925
    %v3947 = vadd.f32 %v3838, %v3925
    %v3948 = vadd.f32 %v3841, %v3925
    %v3949 = vadd.f32 %v3844, %v3925
    %v3950 = vadd.f32 %v3847, %v3925
    %v3951 = vadd.f32 %v3850, %v3925
    %v3952 = vadd.f32 %v3853, %v3925
    %v3953 = vadd.f32 %v3856, %v3925
    %v3954 = vadd.f32 %v3859, %v3925
    %v3955 = vadd.f32 %v3862, %v3925
    %v3956 = vadd.f32 %v3865, %v3925
    %v3957 = vadd.f32 %v3868, %v3925
    %v3958 = vadd.f32 %v3871, %v3925
    %v3959 = vadd.f32 %v3874, %v3925
    %v3960 = vadd.f32 %v3877, %v3925
    %v3961 = vadd.f32 %v3880, %v3925
    %v3962 = vadd.f32 %v3883, %v3925
    %v3963 = vadd.f32 %v3886, %v3925
    %v3964 = vadd.f32 %v3889, %v3925
    %v3965 = vadd.f32 %v3892, %v3925
    %v3966 = vadd.f32 %v3895, %v3925
    %v3967 = vadd.f32 %v3898, %v3925
    %v3968 = vadd.f32 %v3901, %v3925
    %v3969 = vadd.f32 %v3904, %v3925
    %v3970 = vadd.f32 %v3907, %v3925
    %v3971 = vadd.f32 %v3910, %v3925
    %v3972 = vadd.f32 %v3913, %v3925
    %v3973 = vadd.f32 %v3916, %v3925
    %v3974 = vadd.f32 %v3919, %v3925
    %v3975 = vmin.f32 %v3620, %v3927
    %v3976 = vmin.f32 %v3621, %v3928
    %v3977 = vmin.f32 %v3622, %v3929
    %v3978 = vmin.f32 %v3623, %v3930
    %v3979 = vmin.f32 %v3624, %v3931
    %v3980 = vmin.f32 %v3625, %v3932
    %v3981 = vmin.f32 %v3626, %v3933
    %v3982 = vmin.f32 %v3627, %v3934
    %v3983 = vmin.f32 %v3628, %v3935
    %v3984 = vmin.f32 %v3629, %v3936
    %v3985 = vmin.f32 %v3630, %v3937
    %v3986 = vmin.f32 %v3631, %v3938
    %v3987 = vmin.f32 %v3632, %v3939
    %v3988 = vmin.f32 %v3633, %v3940
    %v3989 = vmin.f32 %v3634, %v3941
    %v3990 = vmin.f32 %v3635, %v3942
    %v3991 = vmin.f32 %v3636, %v3943
    %v3992 = vmin.f32 %v3637, %v3944
    %v3993 = vmin.f32 %v3638, %v3945
    %v3994 = vmin.f32 %v3639, %v3946
    %v3995 = vmin.f32 %v3640, %v3947
    %v3996 = vmin.f32 %v3641, %v3948
    %v3997 = vmin.f32 %v3642, %v3949
    %v3998 = vmin.f32 %v3643, %v3950
    %v3999 = vmin.f32 %v3644, %v3951
    %v4000 = vmin.f32 %v3645, %v3952
    %v4001 = vmin.f32 %v3646, %v3953
    %v4002 = vmin.f32 %v3647, %v3954
    %v4003 = vmin.f32 %v3648, %v3955
    %v4004 = vmin.f32 %v3649, %v3956
    %v4005 = vmin.f32 %v3650, %v3957
    %v4006 = vmin.f32 %v3651, %v3958
    %v4007 = vmin.f32 %v3652, %v3959
    %v4008 = vmin.f32 %v3653, %v3960
    %v4009 = vmin.f32 %v3654, %v3961
    %v4010 = vmin.f32 %v3655, %v3962
    %v4011 = vmin.f32 %v3656, %v3963
    %v4012 = vmin.f32 %v3657, %v3964
    %v4013 = vmin.f32 %v3658, %v3965
    %v4014 = vmin.f32 %v3659, %v3966
    %v4015 = vmin.f32 %v3660, %v3967
    %v4016 = vmin.f32 %v3661, %v3968
    %v4017 = vmin.f32 %v3662, %v3969
    %v4018 = vmin.f32 %v3663, %v3970
    %v4019 = vmin.f32 %v3664, %v3971
    %v4020 = vmin.f32 %v3665, %v3972
    %v4021 = vmin.f32 %v3666, %v3973
    %v4022 = vmin.f32 %v3667, %v3974
    %vm4023 = vcmask 7168
    %4024 = vst.msk [vmem:[%s13] sm:$0xff] %vm4023, %v3975
    %4025 = vst.msk [vmem:[%s13 + $0x8] sm:$0xff] %vm4023, %v3976
    %4026 = vst.msk [vmem:[%s13 + $0x10] sm:$0xff] %vm4023, %v3977
    %4027 = vst.msk [vmem:[%s13 + $0x18] sm:$0xff] %vm4023, %v3978
    %4028 = vst.msk [vmem:[%s13 + $0x20] sm:$0xff] %vm4023, %v3979
    %4029 = vst.msk [vmem:[%s13 + $0x28] sm:$0xff] %vm4023, %v3980
    %4030 = vst.msk [vmem:[%s13 + $0x30] sm:$0xff] %vm4023, %v3981
    %4031 = vst.msk [vmem:[%s13 + $0x38] sm:$0xff] %vm4023, %v3982
    %4032 = vst.msk [vmem:[%s13 + $0x40] sm:$0xff] %vm4023, %v3983
    %4033 = vst.msk [vmem:[%s13 + $0x48] sm:$0xff] %vm4023, %v3984
    %4034 = vst.msk [vmem:[%s13 + $0x50] sm:$0xff] %vm4023, %v3985
    %4035 = vst.msk [vmem:[%s13 + $0x58] sm:$0xff] %vm4023, %v3986
    %4036 = vst.msk [vmem:[%s13 + $0x60] sm:$0xff] %vm4023, %v3987
    %4037 = vst.msk [vmem:[%s13 + $0x68] sm:$0xff] %vm4023, %v3988
    %4038 = vst.msk [vmem:[%s13 + $0x70] sm:$0xff] %vm4023, %v3989
    %4039 = vst.msk [vmem:[%s13 + $0x78] sm:$0xff] %vm4023, %v3990
    %4040 = vst.msk [vmem:[%s13 + $0x80] sm:$0xff] %vm4023, %v3991
    %4041 = vst.msk [vmem:[%s13 + $0x88] sm:$0xff] %vm4023, %v3992
    %4042 = vst.msk [vmem:[%s13 + $0x90] sm:$0xff] %vm4023, %v3993
    %4043 = vst.msk [vmem:[%s13 + $0x98] sm:$0xff] %vm4023, %v3994
    %4044 = vst.msk [vmem:[%s13 + $0xa0] sm:$0xff] %vm4023, %v3995
    %4045 = vst.msk [vmem:[%s13 + $0xa8] sm:$0xff] %vm4023, %v3996
    %4046 = vst.msk [vmem:[%s13 + $0xb0] sm:$0xff] %vm4023, %v3997
    %4047 = vst.msk [vmem:[%s13 + $0xb8] sm:$0xff] %vm4023, %v3998
    %4048 = vst.msk [vmem:[%s13 + $0xc0] sm:$0xff] %vm4023, %v3999
    %4049 = vst.msk [vmem:[%s13 + $0xc8] sm:$0xff] %vm4023, %v4000
    %4050 = vst.msk [vmem:[%s13 + $0xd0] sm:$0xff] %vm4023, %v4001
    %4051 = vst.msk [vmem:[%s13 + $0xd8] sm:$0xff] %vm4023, %v4002
    %4052 = vst.msk [vmem:[%s13 + $0xe0] sm:$0xff] %vm4023, %v4003
    %4053 = vst.msk [vmem:[%s13 + $0xe8] sm:$0xff] %vm4023, %v4004
    %4054 = vst.msk [vmem:[%s13 + $0xf0] sm:$0xff] %vm4023, %v4005
    %4055 = vst.msk [vmem:[%s13 + $0xf8] sm:$0xff] %vm4023, %v4006
    %4056 = vst.msk [vmem:[%s13 + $0x100] sm:$0xff] %vm4023, %v4007
    %4057 = vst.msk [vmem:[%s13 + $0x108] sm:$0xff] %vm4023, %v4008
    %4058 = vst.msk [vmem:[%s13 + $0x110] sm:$0xff] %vm4023, %v4009
    %4059 = vst.msk [vmem:[%s13 + $0x118] sm:$0xff] %vm4023, %v4010
    %4060 = vst.msk [vmem:[%s13 + $0x120] sm:$0xff] %vm4023, %v4011
    %4061 = vst.msk [vmem:[%s13 + $0x128] sm:$0xff] %vm4023, %v4012
    %4062 = vst.msk [vmem:[%s13 + $0x130] sm:$0xff] %vm4023, %v4013
    %4063 = vst.msk [vmem:[%s13 + $0x138] sm:$0xff] %vm4023, %v4014
    %4064 = vst.msk [vmem:[%s13 + $0x140] sm:$0xff] %vm4023, %v4015
    %4065 = vst.msk [vmem:[%s13 + $0x148] sm:$0xff] %vm4023, %v4016
    %4066 = vst.msk [vmem:[%s13 + $0x150] sm:$0xff] %vm4023, %v4017
    %4067 = vst.msk [vmem:[%s13 + $0x158] sm:$0xff] %vm4023, %v4018
    %4068 = vst.msk [vmem:[%s13 + $0x160] sm:$0xff] %vm4023, %v4019
    %4069 = vst.msk [vmem:[%s13 + $0x168] sm:$0xff] %vm4023, %v4020
    %4070 = vst.msk [vmem:[%s13 + $0x170] sm:$0xff] %vm4023, %v4021
    %4071 = vst.msk [vmem:[%s13 + $0x178] sm:$0xff] %vm4023, %v4022
    // Predicated region
    $region58: #{tpu_custom_call.1} parent=1 // pred_check
      _
    $region59: #{tpu_custom_call.1} parent=1 // pred_check_branch
      %4073 = sbr.rel (0) target = $region61
    $region60: #{tpu_custom_call.1} parent=1 // pred_region
      _
    $region61: #{tpu_custom_call.1} parent=1 // pred_fallthru
      _
    // Predicated region
    $region62: #{tpu_custom_call.1} parent=1 // pred_check
      _
    $region63: #{tpu_custom_call.1} parent=1 // pred_check_branch
      %4075 = sbr.rel (0) target = $region65
    $region64: #{tpu_custom_call.1} parent=1 // pred_region
      _
    $region65: #{tpu_custom_call.1} parent=1 // pred_fallthru
      _
    %4076 = vsyncpa [#allocation5], 1

</llo_original>
